<compile_context>
chip_gen: v6e
topology: v6e:2x2x1
jax: 0.10.0
libtpu: 0.0.40
codegen_flags: <defaults>
</compile_context>

<pallas_src>
import math
import functools

import jax
import jax.numpy as jnp
from jax import lax
from jax.experimental import pallas as pl
from jax.experimental.pallas import tpu as pltpu


# -----------------------------------------------------------------------------
# Fused per-(batch-block, layer) kernel.  The output block (index depends only
# on the batch-block index) stays resident in VMEM across the layer axis and
# acts as the activation carry.
# -----------------------------------------------------------------------------
def fused_encoder_kernel(
    x_ref, bias_ref,
    wqkv_ref, wo_ref, w1_ref, w2_ref,
    bqkv_ref, b1_ref, vec_ref,
    o_ref,
    *, n_heads, head_dim, matmul_dtype,
):
    layer = pl.program_id(1)

    # Layer 0: initialize the VMEM-resident carry with the embedded input.
    @pl.when(layer == 0)
    def _():
        o_ref[...] = x_ref[...]

    x = o_ref[...]                             # [Bb, S, H] f32 carried activation
    Bb, S, H = x.shape
    nh, hd = n_heads, head_dim
    mm = matmul_dtype
    f32 = jnp.float32

    x2 = x.reshape(Bb * S, H)                  # fold batch into M for the MXU

    # ---- full-width fused QKV projection: one [Bb*S,H] x [H,3H] matmul ----
    qkv = (jnp.dot(x2.astype(mm), wqkv_ref[...].astype(mm),
                   preferred_element_type=f32)
           + bqkv_ref[...])                    # [Bb*S, 3H]
    qkv = qkv.reshape(Bb, S, 3 * H)

    bias = bias_ref[...]                       # [Bb, S] additive key-mask bias
    inv_scale = jnp.float32(1.0 / math.sqrt(hd))

    def to_heads(m):                           # [S, H] -> [nh, S, hd]
        return jnp.transpose(m.reshape(S, nh, hd), (1, 0, 2))

    # ---- attention, head-batched, looped over the (small, static) batch block
    ctx_rows = []
    for b in range(Bb):
        qkv_b = qkv[b]                         # [S, 3H]; slices at 0 / H / 2H lanes
        qh = to_heads(qkv_b[:, :H])
        kh = to_heads(qkv_b[:, H:2 * H])
        vh = to_heads(qkv_b[:, 2 * H:])

        s = jnp.einsum("nqd,nkd->nqk", qh.astype(mm), kh.astype(mm),
                       preferred_element_type=f32) * inv_scale      # [nh, S, S]
        s = s + bias[b:b + 1][None]            # [1, 1, S] -> mask keys
        s = s - jnp.max(s, axis=-1, keepdims=True)
        e = jnp.exp(s)
        alpha = e / jnp.sum(e, axis=-1, keepdims=True)              # exact softmax
        ctx = jnp.einsum("nqk,nkd->nqd", alpha.astype(mm), vh.astype(mm),
                         preferred_element_type=f32)                # [nh, S, hd]
        ctx_rows.append(jnp.transpose(ctx, (1, 0, 2)).reshape(S, H))

    ctx2 = ctx_rows[0] if Bb == 1 else jnp.concatenate(ctx_rows, axis=0)  # [Bb*S, H]

    vec = vec_ref[...]                         # [6, H]: bo, ln1_g, ln1_b, b2, ln2_g, ln2_b

    # ---- output projection (head reduction folded into a K=H contraction) ----
    attn = (jnp.dot(ctx2.astype(mm), wo_ref[...].astype(mm),
                    preferred_element_type=f32) + vec[0:1])         # [Bb*S, H]

    # ---- residual + one-pass LayerNorm 1 ----
    y = x2 + attn
    mu = jnp.mean(y, axis=-1, keepdims=True)
    var = jnp.mean(y * y, axis=-1, keepdims=True) - mu * mu
    y = (y - mu) * lax.rsqrt(var + 1e-5) * vec[1:2] + vec[2:3]

    # ---- feed-forward ----
    h1 = jnp.maximum(
        jnp.dot(y.astype(mm), w1_ref[...].astype(mm),
                preferred_element_type=f32) + b1_ref[...], 0.0)     # [Bb*S, PF]
    f = (jnp.dot(h1.astype(mm), w2_ref[...].astype(mm),
                 preferred_element_type=f32) + vec[3:4])            # [Bb*S, H]

    # ---- residual + one-pass LayerNorm 2 ----
    z = y + f
    mu2 = jnp.mean(z, axis=-1, keepdims=True)
    var2 = jnp.mean(z * z, axis=-1, keepdims=True) - mu2 * mu2
    z = (z - mu2) * lax.rsqrt(var2 + 1e-5) * vec[4:5] + vec[5:6]

    o_ref[...] = z.reshape(Bb, S, H)


# -----------------------------------------------------------------------------
# Host-side packing: stack per-layer weights along L, fuse QKV into [L, H, 3H],
# and pack all H-sized vectors into a single [L, 6, H] slab.
# -----------------------------------------------------------------------------
def pack_params(layers):
    def stack(key):
        return jnp.stack([p[key] for p in layers], axis=0)

    wqkv = jnp.concatenate([stack("wq"), stack("wk"), stack("wv")], axis=-1)  # [L,H,3H]
    bqkv = jnp.concatenate([stack("bq"), stack("bk"), stack("bv")], axis=-1)  # [L,1,3H]
    vec = jnp.concatenate([stack("bo"), stack("ln1_g"), stack("ln1_b"),
                           stack("b2"), stack("ln2_g"), stack("ln2_b")],
                          axis=1)                                             # [L,6,H]
    return {"wqkv": wqkv, "bqkv": bqkv, "wo": stack("wo"),
            "w1": stack("w1"), "b1": stack("b1"), "w2": stack("w2"),
            "vec": vec}


# -----------------------------------------------------------------------------
# Forward wrapper: one pallas_call for the whole encoder stack.
# -----------------------------------------------------------------------------
def encoder_forward(src, src_mask, params, pos_enc, hid_dim, n_heads, head_dim,
                    batch_block=None, matmul_dtype=jnp.float32):
    B, S = src.shape
    H = hid_dim
    Bb = B if batch_block is None else batch_block
    assert B % Bb == 0, "batch_block must divide batch size"

    # Embedding gather + scale + positional add in plain JAX (fused by XLA).
    x0 = (params["emb"][src] * jnp.float32(math.sqrt(hid_dim))
          + pos_enc[:, :S]).astype(jnp.float32)                       # [B, S, H]
    # Additive key-mask bias, computed once (0 where kept, -1e10 where masked).
    bias = (src_mask.astype(jnp.float32) - 1.0) * jnp.float32(1e10)   # [B, S]

    packed = pack_params(params["layers"])
    L = packed["wqkv"].shape[0]
    PF = packed["w1"].shape[-1]

    def wspec(shape):
        n = len(shape)
        return pl.BlockSpec((None,) + shape,
                            lambda bb, l, _n=n: (l,) + (0,) * _n)

    in_specs = [
        pl.BlockSpec((Bb, S, H), lambda bb, l: (bb, 0, 0)),   # x0 (embedded input)
        pl.BlockSpec((Bb, S), lambda bb, l: (bb, 0)),         # additive mask bias
        wspec((H, 3 * H)),                                    # wqkv
        wspec((H, H)),                                        # wo
        wspec((H, PF)),                                       # w1
        wspec((PF, H)),                                       # w2
        wspec((1, 3 * H)),                                    # bqkv
        wspec((1, PF)),                                       # b1
        wspec((6, H)),                                        # packed H-sized vectors
    ]

    kernel = functools.partial(fused_encoder_kernel, n_heads=n_heads,
                               head_dim=head_dim, matmul_dtype=matmul_dtype)

    # Grid: (batch blocks, layers).  Layer axis MUST stay innermost+"arbitrary"
    # (activation carry lives in the revisited output block across it).
    return pl.pallas_call(
        kernel,
        out_shape=jax.ShapeDtypeStruct((B, S, H), jnp.float32),
        grid=(B // Bb, L),
        in_specs=in_specs,
        out_specs=pl.BlockSpec((Bb, S, H), lambda bb, l: (bb, 0, 0)),
        compiler_params=pltpu.CompilerParams(
            dimension_semantics=("parallel", "arbitrary"),
            vmem_limit_bytes=32 * 1024 * 1024),
    )(
        x0, bias,
        packed["wqkv"], packed["wo"], packed["w1"], packed["w2"],
        packed["bqkv"], packed["b1"], packed["vec"],
    )


# -----------------------------------------------------------------------------
# Parameter / positional-encoding construction (deterministic)
# -----------------------------------------------------------------------------
def make_pos_encoding(max_len, hid_dim):
    pos = jnp.arange(max_len, dtype=jnp.float32)[:, None]
    div = jnp.exp(-jnp.arange(0, hid_dim, 2, dtype=jnp.float32)
                  * math.log(10000.0) / hid_dim)
    pe = jnp.zeros((max_len, hid_dim), jnp.float32)
    pe = pe.at[:, 0::2].set(jnp.sin(pos * div))
    pe = pe.at[:, 1::2].set(jnp.cos(pos * div))
    return pe[None]                                                   # [1, max_len, H]


def init_params(key, vocab, hid_dim, pf_dim, n_layers):
    keys = jax.random.split(key, 1 + n_layers)
    params = {"emb": jax.random.normal(keys[0], (vocab, hid_dim), jnp.float32) * 0.02,
              "layers": []}

    def lin_w(k, fan_in, fan_out):
        bound = 1.0 / math.sqrt(fan_in)
        return jax.random.uniform(k, (fan_in, fan_out), jnp.float32, -bound, bound)

    def lin_b(k, fan_in, fan_out):
        bound = 1.0 / math.sqrt(fan_in)
        return jax.random.uniform(k, (1, fan_out), jnp.float32, -bound, bound)

    for l in range(n_layers):
        ks = jax.random.split(keys[1 + l], 12)
        p = {
            "wq": lin_w(ks[0], hid_dim, hid_dim), "bq": lin_b(ks[1], hid_dim, hid_dim),
            "wk": lin_w(ks[2], hid_dim, hid_dim), "bk": lin_b(ks[3], hid_dim, hid_dim),
            "wv": lin_w(ks[4], hid_dim, hid_dim), "bv": lin_b(ks[5], hid_dim, hid_dim),
            "wo": lin_w(ks[6], hid_dim, hid_dim), "bo": lin_b(ks[7], hid_dim, hid_dim),
            "ln1_g": jnp.ones((1, hid_dim), jnp.float32),
            "ln1_b": jnp.zeros((1, hid_dim), jnp.float32),
            "w1": lin_w(ks[8], hid_dim, pf_dim), "b1": lin_b(ks[9], hid_dim, pf_dim),
            "w2": lin_w(ks[10], pf_dim, hid_dim), "b2": lin_b(ks[11], pf_dim, hid_dim),
            "ln2_g": jnp.ones((1, hid_dim), jnp.float32),
            "ln2_b": jnp.zeros((1, hid_dim), jnp.float32),
        }
        params["layers"].append(p)
    return params


# -----------------------------------------------------------------------------
# Pure-JAX reference (mirrors the PyTorch forward, eval mode)
# -----------------------------------------------------------------------------
def ref_forward(src, src_mask, params, pos_enc, hid_dim, n_heads, head_dim):
    def layernorm(x, g, b):
        mu = jnp.mean(x, -1, keepdims=True)
        var = jnp.mean((x - mu) ** 2, -1, keepdims=True)
        return (x - mu) * jax.lax.rsqrt(var + 1e-5) * g + b

    B, S = src.shape
    x = params["emb"][src] * math.sqrt(hid_dim) + pos_enc[:, :S]
    for p in params["layers"]:
        q = x @ p["wq"] + p["bq"][0]
        k = x @ p["wk"] + p["bk"][0]
        v = x @ p["wv"] + p["bv"][0]
        qh = q.reshape(B, S, n_heads, head_dim).transpose(0, 2, 1, 3)
        kh = k.reshape(B, S, n_heads, head_dim).transpose(0, 2, 1, 3)
        vh = v.reshape(B, S, n_heads, head_dim).transpose(0, 2, 1, 3)
        s = jnp.einsum("bhqd,bhkd->bhqk", qh, kh) / math.sqrt(head_dim)
        s = jnp.where(src_mask[:, None, None, :] == 0.0, -1e10, s)
        a = jax.nn.softmax(s, axis=-1)
        ctx = jnp.einsum("bhqk,bhkd->bhqd", a, vh).transpose(0, 2, 1, 3).reshape(B, S, -1)
        attn = ctx @ p["wo"] + p["bo"][0]
        y = layernorm(x + attn, p["ln1_g"][0], p["ln1_b"][0])
        f = jnp.maximum(y @ p["w1"] + p["b1"][0], 0.0) @ p["w2"] + p["b2"][0]
        x = layernorm(y + f, p["ln2_g"][0], p["ln2_b"][0])
    return x


# -----------------------------------------------------------------------------
if __name__ == "__main__":
    # small config consistent with the module
    B, S = 2, 8
    VOCAB, HID, N_LAYERS, N_HEADS, PF = 100, 32, 2, 4, 64
    HEAD_DIM = HID // N_HEADS
    MAX_LEN = 64

    key = jax.random.PRNGKey(0)
    k_tok, k_param = jax.random.split(key)

    src = jax.random.randint(k_tok, (B, S), 0, VOCAB, dtype=jnp.int32)
    src_mask = jnp.ones((B, S), jnp.float32).at[1, 6:].set(0.0)  # pad last 2 of batch 1

    params = init_params(k_param, VOCAB, HID, PF, N_LAYERS)
    pos_enc = make_pos_encoding(MAX_LEN, HID)

    ref = ref_forward(src, src_mask, params, pos_enc, HID, N_HEADS, HEAD_DIM)

    # Exercise both the batch-blocked path (Bb=2, grid (1,L)) and the
    # multi-block path (Bb=1, grid (2,L)).
    for bb in (2, 1):
        out = encoder_forward(src, src_mask, params, pos_enc, HID, N_HEADS,
                              HEAD_DIM, batch_block=bb)
        out = jax.block_until_ready(out)
        assert out.shape == (B, S, HID)
        max_err = float(jnp.max(jnp.abs(out - ref)))
        assert jnp.allclose(out, ref, atol=2e-3, rtol=2e-3), (bb, max_err)

    print("KERNEL_OK")
</pallas_src>

<mosaic_0001>
module attributes {stable_mosaic.version = 11 : i64} {
  func.func @fused_encoder_kernel(%arg0: i32, %arg1: i32, %arg2: memref<2x8x32xf32, #tpu.memory_space<vmem>>, %arg3: memref<2x8xf32, #tpu.memory_space<vmem>>, %arg4: memref<1x32x96xf32, #tpu.memory_space<vmem>>, %arg5: memref<1x32x32xf32, #tpu.memory_space<vmem>>, %arg6: memref<1x32x64xf32, #tpu.memory_space<vmem>>, %arg7: memref<1x64x32xf32, #tpu.memory_space<vmem>>, %arg8: memref<1x1x96xf32, #tpu.memory_space<vmem>>, %arg9: memref<1x1x64xf32, #tpu.memory_space<vmem>>, %arg10: memref<1x6x32xf32, #tpu.memory_space<vmem>>, %arg11: memref<2x8x32xf32, #tpu.memory_space<vmem>>) attributes {dimension_semantics = [#tpu.dimension_semantics<parallel>, #tpu.dimension_semantics<arbitrary>], iteration_bounds = array<i64: 1, 2>, scalar_prefetch = 0 : i64, scratch_operands = 0 : i64, tpu.core_type = #tpu.core_type<tc>, window_params = [{transform_indices = @transform_0, window_bounds = array<i64: 2, 8, 32>}, {transform_indices = @transform_1, window_bounds = array<i64: 2, 8>}, {transform_indices = @transform_2, window_bounds = array<i64: 1, 32, 96>}, {transform_indices = @transform_3, window_bounds = array<i64: 1, 32, 32>}, {transform_indices = @transform_4, window_bounds = array<i64: 1, 32, 64>}, {transform_indices = @transform_5, window_bounds = array<i64: 1, 64, 32>}, {transform_indices = @transform_6, window_bounds = array<i64: 1, 1, 96>}, {transform_indices = @transform_7, window_bounds = array<i64: 1, 1, 64>}, {transform_indices = @transform_8, window_bounds = array<i64: 1, 6, 32>}, {transform_indices = @transform_9, window_bounds = array<i64: 2, 8, 32>}]} {
    %c0_i32 = arith.constant 0 : i32
    %0 = arith.cmpi eq, %arg1, %c0_i32 : i32
    %1 = arith.extui %0 : i1 to i32
    %c0_i32_0 = arith.constant 0 : i32
    %2 = arith.cmpi ne, %1, %c0_i32_0 : i32
    scf.if %2 {
      %c0_53 = arith.constant 0 : index
      %c0_54 = arith.constant 0 : index
      %c0_55 = arith.constant 0 : index
      %150 = vector.load %arg2[%c0_53, %c0_54, %c0_55] : memref<2x8x32xf32, #tpu.memory_space<vmem>>, vector<2x8x32xf32>
      %c0_56 = arith.constant 0 : index
      %c0_57 = arith.constant 0 : index
      %c0_58 = arith.constant 0 : index
      %151 = vector.load %arg11[%c0_56, %c0_57, %c0_58] : memref<2x8x32xf32, #tpu.memory_space<vmem>>, vector<2x8x32xf32>
      tpu.vector_store %arg11[%c0_56, %c0_57, %c0_58], %150 {strides = array<i32>} : memref<2x8x32xf32, #tpu.memory_space<vmem>>, vector<2x8x32xf32>,
    } else {
    }
    %c0 = arith.constant 0 : index
    %c0_1 = arith.constant 0 : index
    %c0_2 = arith.constant 0 : index
    %3 = vector.load %arg11[%c0, %c0_1, %c0_2] : memref<2x8x32xf32, #tpu.memory_space<vmem>>, vector<2x8x32xf32>
    %4 = vector.shape_cast %3 : vector<2x8x32xf32> to vector<16x32xf32>
    %c0_3 = arith.constant 0 : index
    %c0_4 = arith.constant 0 : index
    %c0_5 = arith.constant 0 : index
    %5 = vector.load %arg4[%c0_3, %c0_4, %c0_5] : memref<1x32x96xf32, #tpu.memory_space<vmem>>, vector<1x32x96xf32>
    %6 = vector.shape_cast %5 : vector<1x32x96xf32> to vector<32x96xf32>
    %cst = arith.constant dense<0.000000e+00> : vector<16x96xf32>
    %7 = tpu.matmul %4, %6, %cst {dimension_numbers = #tpu.dot_dimension_numbers<[1], [0], [0], [1], [0, 0, 1, 1], [], []>} : vector<16x32xf32>, vector<32x96xf32>, vector<16x96xf32> -> vector<16x96xf32>
    %c0_6 = arith.constant 0 : index
    %c0_7 = arith.constant 0 : index
    %c0_8 = arith.constant 0 : index
    %8 = vector.load %arg8[%c0_6, %c0_7, %c0_8] : memref<1x1x96xf32, #tpu.memory_space<vmem>>, vector<1x1x96xf32>
    %9 = vector.shape_cast %8 : vector<1x1x96xf32> to vector<1x96xf32>
    %10 = vector.broadcast %9 : vector<1x96xf32> to vector<16x96xf32>
    %11 = arith.addf %7, %10 : vector<16x96xf32>
    %12 = vector.shape_cast %11 : vector<16x96xf32> to vector<2x8x96xf32>
    %c0_9 = arith.constant 0 : index
    %c0_10 = arith.constant 0 : index
    %13 = vector.load %arg3[%c0_9, %c0_10] : memref<2x8xf32, #tpu.memory_space<vmem>>, vector<2x8xf32>
    %14 = vector.extract_strided_slice %12 {offsets = [0, 0, 0], sizes = [1, 8, 96], strides = [1, 1, 1]} : vector<2x8x96xf32> to vector<1x8x96xf32>
    %15 = vector.shape_cast %14 : vector<1x8x96xf32> to vector<8x96xf32>
    %16 = vector.extract_strided_slice %15 {offsets = [0, 0], sizes = [8, 32], strides = [1, 1]} : vector<8x96xf32> to vector<8x32xf32>
    %17 = vector.shape_cast %16 : vector<8x32xf32> to vector<8x4x8xf32>
    %18 = tpu.transpose %17, [1, 0, 2] : vector<8x4x8xf32> -> vector<4x8x8xf32>
    %19 = vector.extract_strided_slice %15 {offsets = [0, 32], sizes = [8, 32], strides = [1, 1]} : vector<8x96xf32> to vector<8x32xf32>
    %20 = vector.shape_cast %19 : vector<8x32xf32> to vector<8x4x8xf32>
    %21 = tpu.transpose %20, [1, 0, 2] : vector<8x4x8xf32> -> vector<4x8x8xf32>
    %22 = vector.extract_strided_slice %15 {offsets = [0, 64], sizes = [8, 32], strides = [1, 1]} : vector<8x96xf32> to vector<8x32xf32>
    %23 = vector.shape_cast %22 : vector<8x32xf32> to vector<8x4x8xf32>
    %24 = tpu.transpose %23, [1, 0, 2] : vector<8x4x8xf32> -> vector<4x8x8xf32>
    "tpu.trace_start"() <{level = 10 : i32, message = "nqd,nkd->nqk"}> : () -> ()
    %cst_11 = arith.constant dense<0.000000e+00> : vector<4x8x8xf32>
    %25 = tpu.matmul %18, %21, %cst_11 {dimension_numbers = #tpu.dot_dimension_numbers<[2], [2], [1], [1], [0, 0, 0, 1, 1, 1], [0], [0]>} : vector<4x8x8xf32>, vector<4x8x8xf32>, vector<4x8x8xf32> -> vector<4x8x8xf32>
    "tpu.trace_stop"() : () -> ()
    %cst_12 = arith.constant 0.353553385 : f32
    %26 = vector.broadcast %cst_12 : f32 to vector<4x8x8xf32>
    %27 = arith.mulf %25, %26 : vector<4x8x8xf32>
    %28 = vector.extract_strided_slice %13 {offsets = [0, 0], sizes = [1, 8], strides = [1, 1]} : vector<2x8xf32> to vector<1x8xf32>
    %29 = vector.shape_cast %28 : vector<1x8xf32> to vector<1x1x8xf32>
    %30 = vector.broadcast %29 : vector<1x1x8xf32> to vector<4x8x8xf32>
    %31 = arith.addf %27, %30 : vector<4x8x8xf32>
    %cst_13 = arith.constant dense<0xFF800000> : vector<4x8xf32>
    %32 = vector.multi_reduction <maximumf>, %31, %cst_13 [2] : vector<4x8x8xf32> to vector<4x8xf32>
    %33 = vector.shape_cast %32 : vector<4x8xf32> to vector<4x8x1xf32>
    %34 = vector.broadcast %33 : vector<4x8x1xf32> to vector<4x8x8xf32>
    %35 = arith.subf %31, %34 : vector<4x8x8xf32>
    %36 = math.exp %35 : vector<4x8x8xf32>
    %cst_14 = arith.constant dense<0.000000e+00> : vector<4x8xf32>
    %37 = vector.multi_reduction <add>, %36, %cst_14 [2] : vector<4x8x8xf32> to vector<4x8xf32>
    %38 = vector.shape_cast %37 : vector<4x8xf32> to vector<4x8x1xf32>
    %39 = vector.broadcast %38 : vector<4x8x1xf32> to vector<4x8x8xf32>
    %40 = arith.divf %36, %39 : vector<4x8x8xf32>
    "tpu.trace_start"() <{level = 10 : i32, message = "nqk,nkd->nqd"}> : () -> ()
    %cst_15 = arith.constant dense<0.000000e+00> : vector<4x8x8xf32>
    %41 = tpu.matmul %40, %24, %cst_15 {dimension_numbers = #tpu.dot_dimension_numbers<[2], [1], [1], [2], [0, 0, 0, 1, 1, 2], [0], [0]>} : vector<4x8x8xf32>, vector<4x8x8xf32>, vector<4x8x8xf32> -> vector<4x8x8xf32>
    "tpu.trace_stop"() : () -> ()
    %42 = tpu.transpose %41, [1, 0, 2] : vector<4x8x8xf32> -> vector<8x4x8xf32>
    %43 = vector.shape_cast %42 : vector<8x4x8xf32> to vector<8x32xf32>
    %44 = vector.extract_strided_slice %12 {offsets = [1, 0, 0], sizes = [1, 8, 96], strides = [1, 1, 1]} : vector<2x8x96xf32> to vector<1x8x96xf32>
    %45 = vector.shape_cast %44 : vector<1x8x96xf32> to vector<8x96xf32>
    %46 = vector.extract_strided_slice %45 {offsets = [0, 0], sizes = [8, 32], strides = [1, 1]} : vector<8x96xf32> to vector<8x32xf32>
    %47 = vector.shape_cast %46 : vector<8x32xf32> to vector<8x4x8xf32>
    %48 = tpu.transpose %47, [1, 0, 2] : vector<8x4x8xf32> -> vector<4x8x8xf32>
    %49 = vector.extract_strided_slice %45 {offsets = [0, 32], sizes = [8, 32], strides = [1, 1]} : vector<8x96xf32> to vector<8x32xf32>
    %50 = vector.shape_cast %49 : vector<8x32xf32> to vector<8x4x8xf32>
    %51 = tpu.transpose %50, [1, 0, 2] : vector<8x4x8xf32> -> vector<4x8x8xf32>
    %52 = vector.extract_strided_slice %45 {offsets = [0, 64], sizes = [8, 32], strides = [1, 1]} : vector<8x96xf32> to vector<8x32xf32>
    %53 = vector.shape_cast %52 : vector<8x32xf32> to vector<8x4x8xf32>
    %54 = tpu.transpose %53, [1, 0, 2] : vector<8x4x8xf32> -> vector<4x8x8xf32>
    "tpu.trace_start"() <{level = 10 : i32, message = "nqd,nkd->nqk"}> : () -> ()
    %cst_16 = arith.constant dense<0.000000e+00> : vector<4x8x8xf32>
    %55 = tpu.matmul %48, %51, %cst_16 {dimension_numbers = #tpu.dot_dimension_numbers<[2], [2], [1], [1], [0, 0, 0, 1, 1, 1], [0], [0]>} : vector<4x8x8xf32>, vector<4x8x8xf32>, vector<4x8x8xf32> -> vector<4x8x8xf32>
    "tpu.trace_stop"() : () -> ()
    %cst_17 = arith.constant 0.353553385 : f32
    %56 = vector.broadcast %cst_17 : f32 to vector<4x8x8xf32>
    %57 = arith.mulf %55, %56 : vector<4x8x8xf32>
    %58 = vector.extract_strided_slice %13 {offsets = [1, 0], sizes = [1, 8], strides = [1, 1]} : vector<2x8xf32> to vector<1x8xf32>
    %59 = vector.shape_cast %58 : vector<1x8xf32> to vector<1x1x8xf32>
    %60 = vector.broadcast %59 : vector<1x1x8xf32> to vector<4x8x8xf32>
    %61 = arith.addf %57, %60 : vector<4x8x8xf32>
    %cst_18 = arith.constant dense<0xFF800000> : vector<4x8xf32>
    %62 = vector.multi_reduction <maximumf>, %61, %cst_18 [2] : vector<4x8x8xf32> to vector<4x8xf32>
    %63 = vector.shape_cast %62 : vector<4x8xf32> to vector<4x8x1xf32>
    %64 = vector.broadcast %63 : vector<4x8x1xf32> to vector<4x8x8xf32>
    %65 = arith.subf %61, %64 : vector<4x8x8xf32>
    %66 = math.exp %65 : vector<4x8x8xf32>
    %cst_19 = arith.constant dense<0.000000e+00> : vector<4x8xf32>
    %67 = vector.multi_reduction <add>, %66, %cst_19 [2] : vector<4x8x8xf32> to vector<4x8xf32>
    %68 = vector.shape_cast %67 : vector<4x8xf32> to vector<4x8x1xf32>
    %69 = vector.broadcast %68 : vector<4x8x1xf32> to vector<4x8x8xf32>
    %70 = arith.divf %66, %69 : vector<4x8x8xf32>
    "tpu.trace_start"() <{level = 10 : i32, message = "nqk,nkd->nqd"}> : () -> ()
    %cst_20 = arith.constant dense<0.000000e+00> : vector<4x8x8xf32>
    %71 = tpu.matmul %70, %54, %cst_20 {dimension_numbers = #tpu.dot_dimension_numbers<[2], [1], [1], [2], [0, 0, 0, 1, 1, 2], [0], [0]>} : vector<4x8x8xf32>, vector<4x8x8xf32>, vector<4x8x8xf32> -> vector<4x8x8xf32>
    "tpu.trace_stop"() : () -> ()
    %72 = tpu.transpose %71, [1, 0, 2] : vector<4x8x8xf32> -> vector<8x4x8xf32>
    %73 = vector.shape_cast %72 : vector<8x4x8xf32> to vector<8x32xf32>
    %74 = tpu.concatenate %43, %73 in 0 : vector<8x32xf32>, vector<8x32xf32> -> vector<16x32xf32>
    %c0_21 = arith.constant 0 : index
    %c0_22 = arith.constant 0 : index
    %c0_23 = arith.constant 0 : index
    %75 = vector.load %arg10[%c0_21, %c0_22, %c0_23] : memref<1x6x32xf32, #tpu.memory_space<vmem>>, vector<1x6x32xf32>
    %76 = vector.shape_cast %75 : vector<1x6x32xf32> to vector<6x32xf32>
    %c0_24 = arith.constant 0 : index
    %c0_25 = arith.constant 0 : index
    %c0_26 = arith.constant 0 : index
    %77 = vector.load %arg5[%c0_24, %c0_25, %c0_26] : memref<1x32x32xf32, #tpu.memory_space<vmem>>, vector<1x32x32xf32>
    %78 = vector.shape_cast %77 : vector<1x32x32xf32> to vector<32x32xf32>
    %cst_27 = arith.constant dense<0.000000e+00> : vector<16x32xf32>
    %79 = tpu.matmul %74, %78, %cst_27 {dimension_numbers = #tpu.dot_dimension_numbers<[1], [0], [0], [1], [0, 0, 1, 1], [], []>} : vector<16x32xf32>, vector<32x32xf32>, vector<16x32xf32> -> vector<16x32xf32>
    %80 = vector.extract_strided_slice %76 {offsets = [0, 0], sizes = [1, 32], strides = [1, 1]} : vector<6x32xf32> to vector<1x32xf32>
    %81 = vector.broadcast %80 : vector<1x32xf32> to vector<16x32xf32>
    %82 = arith.addf %79, %81 : vector<16x32xf32>
    %83 = arith.addf %4, %82 : vector<16x32xf32>
    %cst_28 = arith.constant dense<0.000000e+00> : vector<16xf32>
    %84 = vector.multi_reduction <add>, %83, %cst_28 [1] : vector<16x32xf32> to vector<16xf32>
    %85 = vector.shape_cast %84 : vector<16xf32> to vector<16x1xf32>
    %cst_29 = arith.constant 3.200000e+01 : f32
    %86 = vector.broadcast %cst_29 : f32 to vector<16x1xf32>
    %87 = arith.divf %85, %86 : vector<16x1xf32>
    %88 = arith.mulf %83, %83 : vector<16x32xf32>
    %cst_30 = arith.constant dense<0.000000e+00> : vector<16xf32>
    %89 = vector.multi_reduction <add>, %88, %cst_30 [1] : vector<16x32xf32> to vector<16xf32>
    %90 = vector.shape_cast %89 : vector<16xf32> to vector<16x1xf32>
    %cst_31 = arith.constant 3.200000e+01 : f32
    %91 = vector.broadcast %cst_31 : f32 to vector<16x1xf32>
    %92 = arith.divf %90, %91 : vector<16x1xf32>
    %93 = arith.mulf %87, %87 : vector<16x1xf32>
    %94 = arith.subf %92, %93 : vector<16x1xf32>
    %95 = vector.broadcast %87 : vector<16x1xf32> to vector<16x32xf32>
    %96 = arith.subf %83, %95 : vector<16x32xf32>
    %cst_32 = arith.constant 9.99999974E-6 : f32
    %97 = vector.broadcast %cst_32 : f32 to vector<16x1xf32>
    %98 = arith.addf %94, %97 : vector<16x1xf32>
    %99 = math.rsqrt %98 : vector<16x1xf32>
    %100 = vector.broadcast %99 : vector<16x1xf32> to vector<16x32xf32>
    %101 = arith.mulf %96, %100 : vector<16x32xf32>
    %102 = vector.extract_strided_slice %76 {offsets = [1, 0], sizes = [1, 32], strides = [1, 1]} : vector<6x32xf32> to vector<1x32xf32>
    %103 = vector.broadcast %102 : vector<1x32xf32> to vector<16x32xf32>
    %104 = arith.mulf %101, %103 : vector<16x32xf32>
    %105 = vector.extract_strided_slice %76 {offsets = [2, 0], sizes = [1, 32], strides = [1, 1]} : vector<6x32xf32> to vector<1x32xf32>
    %106 = vector.broadcast %105 : vector<1x32xf32> to vector<16x32xf32>
    %107 = arith.addf %104, %106 : vector<16x32xf32>
    %c0_33 = arith.constant 0 : index
    %c0_34 = arith.constant 0 : index
    %c0_35 = arith.constant 0 : index
    %108 = vector.load %arg6[%c0_33, %c0_34, %c0_35] : memref<1x32x64xf32, #tpu.memory_space<vmem>>, vector<1x32x64xf32>
    %109 = vector.shape_cast %108 : vector<1x32x64xf32> to vector<32x64xf32>
    %cst_36 = arith.constant dense<0.000000e+00> : vector<16x64xf32>
    %110 = tpu.matmul %107, %109, %cst_36 {dimension_numbers = #tpu.dot_dimension_numbers<[1], [0], [0], [1], [0, 0, 1, 1], [], []>} : vector<16x32xf32>, vector<32x64xf32>, vector<16x64xf32> -> vector<16x64xf32>
    %c0_37 = arith.constant 0 : index
    %c0_38 = arith.constant 0 : index
    %c0_39 = arith.constant 0 : index
    %111 = vector.load %arg9[%c0_37, %c0_38, %c0_39] : memref<1x1x64xf32, #tpu.memory_space<vmem>>, vector<1x1x64xf32>
    %112 = vector.shape_cast %111 : vector<1x1x64xf32> to vector<1x64xf32>
    %113 = vector.broadcast %112 : vector<1x64xf32> to vector<16x64xf32>
    %114 = arith.addf %110, %113 : vector<16x64xf32>
    %cst_40 = arith.constant 0.000000e+00 : f32
    %115 = vector.broadcast %cst_40 : f32 to vector<16x64xf32>
    %116 = arith.maximumf %114, %115 : vector<16x64xf32>
    %c0_41 = arith.constant 0 : index
    %c0_42 = arith.constant 0 : index
    %c0_43 = arith.constant 0 : index
    %117 = vector.load %arg7[%c0_41, %c0_42, %c0_43] : memref<1x64x32xf32, #tpu.memory_space<vmem>>, vector<1x64x32xf32>
    %118 = vector.shape_cast %117 : vector<1x64x32xf32> to vector<64x32xf32>
    %cst_44 = arith.constant dense<0.000000e+00> : vector<16x32xf32>
    %119 = tpu.matmul %116, %118, %cst_44 {dimension_numbers = #tpu.dot_dimension_numbers<[1], [0], [0], [1], [0, 0, 1, 1], [], []>} : vector<16x64xf32>, vector<64x32xf32>, vector<16x32xf32> -> vector<16x32xf32>
    %120 = vector.extract_strided_slice %76 {offsets = [3, 0], sizes = [1, 32], strides = [1, 1]} : vector<6x32xf32> to vector<1x32xf32>
    %121 = vector.broadcast %120 : vector<1x32xf32> to vector<16x32xf32>
    %122 = arith.addf %119, %121 : vector<16x32xf32>
    %123 = arith.addf %107, %122 : vector<16x32xf32>
    %cst_45 = arith.constant dense<0.000000e+00> : vector<16xf32>
    %124 = vector.multi_reduction <add>, %123, %cst_45 [1] : vector<16x32xf32> to vector<16xf32>
    %125 = vector.shape_cast %124 : vector<16xf32> to vector<16x1xf32>
    %cst_46 = arith.constant 3.200000e+01 : f32
    %126 = vector.broadcast %cst_46 : f32 to vector<16x1xf32>
    %127 = arith.divf %125, %126 : vector<16x1xf32>
    %128 = arith.mulf %123, %123 : vector<16x32xf32>
    %cst_47 = arith.constant dense<0.000000e+00> : vector<16xf32>
    %129 = vector.multi_reduction <add>, %128, %cst_47 [1] : vector<16x32xf32> to vector<16xf32>
    %130 = vector.shape_cast %129 : vector<16xf32> to vector<16x1xf32>
    %cst_48 = arith.constant 3.200000e+01 : f32
    %131 = vector.broadcast %cst_48 : f32 to vector<16x1xf32>
    %132 = arith.divf %130, %131 : vector<16x1xf32>
    %133 = arith.mulf %127, %127 : vector<16x1xf32>
    %134 = arith.subf %132, %133 : vector<16x1xf32>
    %135 = vector.broadcast %127 : vector<16x1xf32> to vector<16x32xf32>
    %136 = arith.subf %123, %135 : vector<16x32xf32>
    %cst_49 = arith.constant 9.99999974E-6 : f32
    %137 = vector.broadcast %cst_49 : f32 to vector<16x1xf32>
    %138 = arith.addf %134, %137 : vector<16x1xf32>
    %139 = math.rsqrt %138 : vector<16x1xf32>
    %140 = vector.broadcast %139 : vector<16x1xf32> to vector<16x32xf32>
    %141 = arith.mulf %136, %140 : vector<16x32xf32>
    %142 = vector.extract_strided_slice %76 {offsets = [4, 0], sizes = [1, 32], strides = [1, 1]} : vector<6x32xf32> to vector<1x32xf32>
    %143 = vector.broadcast %142 : vector<1x32xf32> to vector<16x32xf32>
    %144 = arith.mulf %141, %143 : vector<16x32xf32>
    %145 = vector.extract_strided_slice %76 {offsets = [5, 0], sizes = [1, 32], strides = [1, 1]} : vector<6x32xf32> to vector<1x32xf32>
    %146 = vector.broadcast %145 : vector<1x32xf32> to vector<16x32xf32>
    %147 = arith.addf %144, %146 : vector<16x32xf32>
    %148 = vector.shape_cast %147 : vector<16x32xf32> to vector<2x8x32xf32>
    %c0_50 = arith.constant 0 : index
    %c0_51 = arith.constant 0 : index
    %c0_52 = arith.constant 0 : index
    %149 = vector.load %arg11[%c0_50, %c0_51, %c0_52] : memref<2x8x32xf32, #tpu.memory_space<vmem>>, vector<2x8x32xf32>
    tpu.vector_store %arg11[%c0_50, %c0_51, %c0_52], %148 {strides = array<i32>} : memref<2x8x32xf32, #tpu.memory_space<vmem>>, vector<2x8x32xf32>,
    return
  }
  func.func @transform_0(%arg0: i32, %arg1: i32) -> (i32, i32, i32) {
    %c0_i32 = arith.constant 0 : i32
    %c0_i32_0 = arith.constant 0 : i32
    %c0_i32_1 = arith.constant 0 : i32
    return %arg0, %c0_i32, %c0_i32_0 : i32, i32, i32
  }
  func.func @transform_1(%arg0: i32, %arg1: i32) -> (i32, i32) {
    %c0_i32 = arith.constant 0 : i32
    %c0_i32_0 = arith.constant 0 : i32
    return %arg0, %c0_i32 : i32, i32
  }
  func.func @transform_2(%arg0: i32, %arg1: i32) -> (i32, i32, i32) {
    %c0_i32 = arith.constant 0 : i32
    %c0_i32_0 = arith.constant 0 : i32
    %c0_i32_1 = arith.constant 0 : i32
    return %arg1, %c0_i32, %c0_i32_0 : i32, i32, i32
  }
  func.func @transform_3(%arg0: i32, %arg1: i32) -> (i32, i32, i32) {
    %c0_i32 = arith.constant 0 : i32
    %c0_i32_0 = arith.constant 0 : i32
    %c0_i32_1 = arith.constant 0 : i32
    return %arg1, %c0_i32, %c0_i32_0 : i32, i32, i32
  }
  func.func @transform_4(%arg0: i32, %arg1: i32) -> (i32, i32, i32) {
    %c0_i32 = arith.constant 0 : i32
    %c0_i32_0 = arith.constant 0 : i32
    %c0_i32_1 = arith.constant 0 : i32
    return %arg1, %c0_i32, %c0_i32_0 : i32, i32, i32
  }
  func.func @transform_5(%arg0: i32, %arg1: i32) -> (i32, i32, i32) {
    %c0_i32 = arith.constant 0 : i32
    %c0_i32_0 = arith.constant 0 : i32
    %c0_i32_1 = arith.constant 0 : i32
    return %arg1, %c0_i32, %c0_i32_0 : i32, i32, i32
  }
  func.func @transform_6(%arg0: i32, %arg1: i32) -> (i32, i32, i32) {
    %c0_i32 = arith.constant 0 : i32
    %c0_i32_0 = arith.constant 0 : i32
    %c0_i32_1 = arith.constant 0 : i32
    return %arg1, %c0_i32, %c0_i32_0 : i32, i32, i32
  }
  func.func @transform_7(%arg0: i32, %arg1: i32) -> (i32, i32, i32) {
    %c0_i32 = arith.constant 0 : i32
    %c0_i32_0 = arith.constant 0 : i32
    %c0_i32_1 = arith.constant 0 : i32
    return %arg1, %c0_i32, %c0_i32_0 : i32, i32, i32
  }
  func.func @transform_8(%arg0: i32, %arg1: i32) -> (i32, i32, i32) {
    %c0_i32 = arith.constant 0 : i32
    %c0_i32_0 = arith.constant 0 : i32
    %c0_i32_1 = arith.constant 0 : i32
    return %arg1, %c0_i32, %c0_i32_0 : i32, i32, i32
  }
  func.func @transform_9(%arg0: i32, %arg1: i32) -> (i32, i32, i32) {
    %c0_i32 = arith.constant 0 : i32
    %c0_i32_0 = arith.constant 0 : i32
    %c0_i32_1 = arith.constant 0 : i32
    return %arg0, %c0_i32, %c0_i32_0 : i32, i32, i32
  }
}

</mosaic_0001>

<llo_original>
// kernel: tpu_custom_call.1
$region0: #{tpu_custom_call.1}
  #allocation0 [shape = 'u32[]', space=smem, size = 0x4, offset = 0x4, fixed_abs, tag = 'smem constant byte address 0x4 - core index']
  #allocation1 [shape = 'u32[144,128]{1,0:T(1,128)}', space=vmem, size = 0x12000, scoped, tag = 'internal scratch']
  %s0 = inlined_call_operand.vmem [shape: f32[2,8,32], index: 0, kind: input, shape index: {}]
  %s1 = inlined_call_operand.vmem [shape: f32[2,8], index: 1, kind: input, shape index: {}]
  %s2 = inlined_call_operand.vmem [shape: f32[2,32,96], index: 2, kind: input, shape index: {}]
  %s3 = inlined_call_operand.vmem [shape: f32[2,32,32], index: 3, kind: input, shape index: {}]
  %s4 = inlined_call_operand.vmem [shape: f32[2,32,64], index: 4, kind: input, shape index: {}]
  %s5 = inlined_call_operand.vmem [shape: f32[2,64,32], index: 5, kind: input, shape index: {}]
  %s6 = inlined_call_operand.vmem [shape: f32[2,1,96], index: 6, kind: input, shape index: {}]
  %s7 = inlined_call_operand.vmem [shape: f32[2,1,64], index: 7, kind: input, shape index: {}]
  %s8 = inlined_call_operand.vmem [shape: f32[2,6,32], index: 8, kind: input, shape index: {}]
  %s9 = inlined_call_operand.hbm [shape: f32[2,8,32], index: 9, kind: output, shape index: {}]
  %s10 = sld [smem:[#allocation0]]
  $region73: #{tpu_custom_call.1} parent=0
    _
  %s12 = ssub.s32 1, %s10
  %s13 = scalar_select 0, %s12, %s10
  $region1: #{tpu_custom_call.1} parent=0
    #allocation2 [shape = 'u8[8192]{0}', space=vmem, size = 0x2000, scoped, tag = 'output window, operand 0, single buffered']
    #allocation3 [shape = 's32[2]{0}', space=sflag, size = 0x8, scoped, tag = 'scoped memory for tpu_custom_call.1']
    %14 = vsyncpa [#allocation3], 0
    loop: start=0, step=1, limit=4
    $region2: #{tpu_custom_call.1} parent=1 // loop_pre_header
      _
    $region3: #{tpu_custom_call.1} parent=1 // loop_header
      %s16 = sphi 0, %s20
      %p17 = scmp.ge.s32.totalorder %s16, 4
      %s23 = sphi 0, %s35
      %s24 = sphi 0, %s31
      %s25 = sphi 0, %s23
      %s26 = sphi 0, %s24
      %s27 = sphi 0, %s25
      %s28 = sphi 0, %s26
      %s38 = sphi 0, %s40
      %s41 = sphi 0, %s38
      %s42 = sphi 0, %s41
      %s58 = sphi 0, %s42
      %s64 = sphi 0, %s66
      %s67 = sphi 0, %s64
      %s68 = sphi 0, %s67
      %s84 = sphi 0, %s68
      %s90 = sphi 0, %s92
      %s93 = sphi 0, %s90
      %s94 = sphi 0, %s93
      %s110 = sphi 0, %s94
      %s116 = sphi 0, %s118
      %s119 = sphi 0, %s116
      %s120 = sphi 0, %s119
      %s136 = sphi 0, %s120
      %s142 = sphi 0, %s144
      %s145 = sphi 0, %s142
      %s146 = sphi 0, %s145
      %s162 = sphi 0, %s146
      %s168 = sphi 0, %s170
      %s171 = sphi 0, %s168
      %s172 = sphi 0, %s171
      %s188 = sphi 0, %s172
      %s194 = sphi 0, %s196
      %s197 = sphi 0, %s194
      %s198 = sphi 0, %s197
      %s214 = sphi 0, %s198
      %s220 = sphi 0, %s222
      %s223 = sphi 0, %s220
      %s224 = sphi 0, %s223
      %s240 = sphi 0, %s224
      %s246 = sphi 0, %s248
      %s249 = sphi 0, %s246
      %s250 = sphi 0, %s249
      %s266 = sphi 0, %s250
      %s272 = sphi 0, %s274
      %s275 = sphi 0, %s272
      %s276 = sphi 0, %s275
      %s292 = sphi 0, %s276
    $region4: #{tpu_custom_call.1} parent=1 // loop_header_branch
      %19 = sbr.rel (%p17) target = $region8
    $region5: #{tpu_custom_call.1} parent=1 // loop_body
      %s21 = ssub.s32 %s16, 1
      %s22 = ssub.s32 %s16, 2
      %s29 = sadd.s32 1, %s24
      %p30 = scmp.ge.s32.totalorder %s29, 2
      %s31 = scalar_select %p30, 0, %s29
      %s32 = sadd.s32 1, %s23
      %s33 = scalar_select %p30, %s32, %s23
      %p34 = scmp.ge.s32.totalorder %s33, 1
      %s35 = scalar_select %p34, 0, %s33
      %s36 = ssub.s32 %s23, %s35
      %p37 = scmp.eq.s32.totalorder %s36, 0
      %s39 = sadd.s32 %s38, 1
      %s40 = scalar_select %p37, %s38, %s39
      %p43 = pneg %p37
      %p44 = scmp.eq.s32.totalorder %s16, 1
      %p45 = por %p43, %p44
      %p46 = scmp.ne.s32.totalorder %s38, %s41
      %p47 = scmp.eq.s32.totalorder %s16, 0
      %p48 = por %p46, %p47
      %p49 = scmp.ne.s32.totalorder %s38, %s41
      %p50 = scmp.eq.s32.totalorder %s21, 1
      %p51 = por %p49, %p50
      %p52 = scmp.ne.s32.totalorder %s41, %s42
      %p53 = scmp.eq.s32.totalorder %s21, 0
      %p54 = por %p52, %p53
      %p55 = scmp.ne.s32.totalorder %s41, %s42
      %p56 = scmp.eq.s32.totalorder %s22, 1
      %p57 = por %p55, %p56
      %p59 = scmp.ne.s32.totalorder %s42, %s58
      %p60 = scmp.eq.s32.totalorder %s22, 0
      %p61 = por %p59, %p60
      %s62 = ssub.s32 %s23, %s35
      %p63 = scmp.eq.s32.totalorder %s62, 0
      %s65 = sadd.s32 %s64, 1
      %s66 = scalar_select %p63, %s64, %s65
      %p69 = pneg %p63
      %p70 = scmp.eq.s32.totalorder %s16, 1
      %p71 = por %p69, %p70
      %p72 = scmp.ne.s32.totalorder %s64, %s67
      %p73 = scmp.eq.s32.totalorder %s16, 0
      %p74 = por %p72, %p73
      %p75 = scmp.ne.s32.totalorder %s64, %s67
      %p76 = scmp.eq.s32.totalorder %s21, 1
      %p77 = por %p75, %p76
      %p78 = scmp.ne.s32.totalorder %s67, %s68
      %p79 = scmp.eq.s32.totalorder %s21, 0
      %p80 = por %p78, %p79
      %p81 = scmp.ne.s32.totalorder %s67, %s68
      %p82 = scmp.eq.s32.totalorder %s22, 1
      %p83 = por %p81, %p82
      %p85 = scmp.ne.s32.totalorder %s68, %s84
      %p86 = scmp.eq.s32.totalorder %s22, 0
      %p87 = por %p85, %p86
      %s88 = ssub.s32 %s24, %s31
      %p89 = scmp.eq.s32.totalorder %s88, 0
      %s91 = sadd.s32 %s90, 1
      %s92 = scalar_select %p89, %s90, %s91
      %p95 = pneg %p89
      %p96 = scmp.eq.s32.totalorder %s16, 1
      %p97 = por %p95, %p96
      %p98 = scmp.ne.s32.totalorder %s90, %s93
      %p99 = scmp.eq.s32.totalorder %s16, 0
      %p100 = por %p98, %p99
      %p101 = scmp.ne.s32.totalorder %s90, %s93
      %p102 = scmp.eq.s32.totalorder %s21, 1
      %p103 = por %p101, %p102
      %p104 = scmp.ne.s32.totalorder %s93, %s94
      %p105 = scmp.eq.s32.totalorder %s21, 0
      %p106 = por %p104, %p105
      %p107 = scmp.ne.s32.totalorder %s93, %s94
      %p108 = scmp.eq.s32.totalorder %s22, 1
      %p109 = por %p107, %p108
      %p111 = scmp.ne.s32.totalorder %s94, %s110
      %p112 = scmp.eq.s32.totalorder %s22, 0
      %p113 = por %p111, %p112
      %s114 = ssub.s32 %s24, %s31
      %p115 = scmp.eq.s32.totalorder %s114, 0
      %s117 = sadd.s32 %s116, 1
      %s118 = scalar_select %p115, %s116, %s117
      %p121 = pneg %p115
      %p122 = scmp.eq.s32.totalorder %s16, 1
      %p123 = por %p121, %p122
      %p124 = scmp.ne.s32.totalorder %s116, %s119
      %p125 = scmp.eq.s32.totalorder %s16, 0
      %p126 = por %p124, %p125
      %p127 = scmp.ne.s32.totalorder %s116, %s119
      %p128 = scmp.eq.s32.totalorder %s21, 1
      %p129 = por %p127, %p128
      %p130 = scmp.ne.s32.totalorder %s119, %s120
      %p131 = scmp.eq.s32.totalorder %s21, 0
      %p132 = por %p130, %p131
      %p133 = scmp.ne.s32.totalorder %s119, %s120
      %p134 = scmp.eq.s32.totalorder %s22, 1
      %p135 = por %p133, %p134
      %p137 = scmp.ne.s32.totalorder %s120, %s136
      %p138 = scmp.eq.s32.totalorder %s22, 0
      %p139 = por %p137, %p138
      %s140 = ssub.s32 %s24, %s31
      %p141 = scmp.eq.s32.totalorder %s140, 0
      %s143 = sadd.s32 %s142, 1
      %s144 = scalar_select %p141, %s142, %s143
      %p147 = pneg %p141
      %p148 = scmp.eq.s32.totalorder %s16, 1
      %p149 = por %p147, %p148
      %p150 = scmp.ne.s32.totalorder %s142, %s145
      %p151 = scmp.eq.s32.totalorder %s16, 0
      %p152 = por %p150, %p151
      %p153 = scmp.ne.s32.totalorder %s142, %s145
      %p154 = scmp.eq.s32.totalorder %s21, 1
      %p155 = por %p153, %p154
      %p156 = scmp.ne.s32.totalorder %s145, %s146
      %p157 = scmp.eq.s32.totalorder %s21, 0
      %p158 = por %p156, %p157
      %p159 = scmp.ne.s32.totalorder %s145, %s146
      %p160 = scmp.eq.s32.totalorder %s22, 1
      %p161 = por %p159, %p160
      %p163 = scmp.ne.s32.totalorder %s146, %s162
      %p164 = scmp.eq.s32.totalorder %s22, 0
      %p165 = por %p163, %p164
      %s166 = ssub.s32 %s24, %s31
      %p167 = scmp.eq.s32.totalorder %s166, 0
      %s169 = sadd.s32 %s168, 1
      %s170 = scalar_select %p167, %s168, %s169
      %p173 = pneg %p167
      %p174 = scmp.eq.s32.totalorder %s16, 1
      %p175 = por %p173, %p174
      %p176 = scmp.ne.s32.totalorder %s168, %s171
      %p177 = scmp.eq.s32.totalorder %s16, 0
      %p178 = por %p176, %p177
      %p179 = scmp.ne.s32.totalorder %s168, %s171
      %p180 = scmp.eq.s32.totalorder %s21, 1
      %p181 = por %p179, %p180
      %p182 = scmp.ne.s32.totalorder %s171, %s172
      %p183 = scmp.eq.s32.totalorder %s21, 0
      %p184 = por %p182, %p183
      %p185 = scmp.ne.s32.totalorder %s171, %s172
      %p186 = scmp.eq.s32.totalorder %s22, 1
      %p187 = por %p185, %p186
      %p189 = scmp.ne.s32.totalorder %s172, %s188
      %p190 = scmp.eq.s32.totalorder %s22, 0
      %p191 = por %p189, %p190
      %s192 = ssub.s32 %s24, %s31
      %p193 = scmp.eq.s32.totalorder %s192, 0
      %s195 = sadd.s32 %s194, 1
      %s196 = scalar_select %p193, %s194, %s195
      %p199 = pneg %p193
      %p200 = scmp.eq.s32.totalorder %s16, 1
      %p201 = por %p199, %p200
      %p202 = scmp.ne.s32.totalorder %s194, %s197
      %p203 = scmp.eq.s32.totalorder %s16, 0
      %p204 = por %p202, %p203
      %p205 = scmp.ne.s32.totalorder %s194, %s197
      %p206 = scmp.eq.s32.totalorder %s21, 1
      %p207 = por %p205, %p206
      %p208 = scmp.ne.s32.totalorder %s197, %s198
      %p209 = scmp.eq.s32.totalorder %s21, 0
      %p210 = por %p208, %p209
      %p211 = scmp.ne.s32.totalorder %s197, %s198
      %p212 = scmp.eq.s32.totalorder %s22, 1
      %p213 = por %p211, %p212
      %p215 = scmp.ne.s32.totalorder %s198, %s214
      %p216 = scmp.eq.s32.totalorder %s22, 0
      %p217 = por %p215, %p216
      %s218 = ssub.s32 %s24, %s31
      %p219 = scmp.eq.s32.totalorder %s218, 0
      %s221 = sadd.s32 %s220, 1
      %s222 = scalar_select %p219, %s220, %s221
      %p225 = pneg %p219
      %p226 = scmp.eq.s32.totalorder %s16, 1
      %p227 = por %p225, %p226
      %p228 = scmp.ne.s32.totalorder %s220, %s223
      %p229 = scmp.eq.s32.totalorder %s16, 0
      %p230 = por %p228, %p229
      %p231 = scmp.ne.s32.totalorder %s220, %s223
      %p232 = scmp.eq.s32.totalorder %s21, 1
      %p233 = por %p231, %p232
      %p234 = scmp.ne.s32.totalorder %s223, %s224
      %p235 = scmp.eq.s32.totalorder %s21, 0
      %p236 = por %p234, %p235
      %p237 = scmp.ne.s32.totalorder %s223, %s224
      %p238 = scmp.eq.s32.totalorder %s22, 1
      %p239 = por %p237, %p238
      %p241 = scmp.ne.s32.totalorder %s224, %s240
      %p242 = scmp.eq.s32.totalorder %s22, 0
      %p243 = por %p241, %p242
      %s244 = ssub.s32 %s24, %s31
      %p245 = scmp.eq.s32.totalorder %s244, 0
      %s247 = sadd.s32 %s246, 1
      %s248 = scalar_select %p245, %s246, %s247
      %p251 = pneg %p245
      %p252 = scmp.eq.s32.totalorder %s16, 1
      %p253 = por %p251, %p252
      %p254 = scmp.ne.s32.totalorder %s246, %s249
      %p255 = scmp.eq.s32.totalorder %s16, 0
      %p256 = por %p254, %p255
      %p257 = scmp.ne.s32.totalorder %s246, %s249
      %p258 = scmp.eq.s32.totalorder %s21, 1
      %p259 = por %p257, %p258
      %p260 = scmp.ne.s32.totalorder %s249, %s250
      %p261 = scmp.eq.s32.totalorder %s21, 0
      %p262 = por %p260, %p261
      %p263 = scmp.ne.s32.totalorder %s249, %s250
      %p264 = scmp.eq.s32.totalorder %s22, 1
      %p265 = por %p263, %p264
      %p267 = scmp.ne.s32.totalorder %s250, %s266
      %p268 = scmp.eq.s32.totalorder %s22, 0
      %p269 = por %p267, %p268
      %s270 = ssub.s32 %s23, %s35
      %p271 = scmp.eq.s32.totalorder %s270, 0
      %s273 = sadd.s32 %s272, 1
      %s274 = scalar_select %p271, %s272, %s273
      %p277 = pneg %p271
      %p278 = scmp.eq.s32.totalorder %s16, 1
      %p279 = por %p277, %p278
      %p280 = scmp.ne.s32.totalorder %s272, %s275
      %p281 = scmp.eq.s32.totalorder %s16, 0
      %p282 = por %p280, %p281
      %p283 = scmp.ne.s32.totalorder %s272, %s275
      %p284 = scmp.eq.s32.totalorder %s21, 1
      %p285 = por %p283, %p284
      %p286 = scmp.ne.s32.totalorder %s275, %s276
      %p287 = scmp.eq.s32.totalorder %s21, 0
      %p288 = por %p286, %p287
      %p289 = scmp.ne.s32.totalorder %s275, %s276
      %p290 = scmp.eq.s32.totalorder %s22, 1
      %p291 = por %p289, %p290
      %p293 = scmp.ne.s32.totalorder %s276, %s292
      %p294 = scmp.eq.s32.totalorder %s22, 0
      %p295 = por %p293, %p294
      %p296 = scmp.le.s32.totalorder 1, %s16
      %p297 = scmp.lt.s32.totalorder %s16, 3
      %p298 = pnand %p296, %p297
      %p299 = pneg %p298
      // Predicated region
      $region9: #{tpu_custom_call.1} parent=5 // pred_check
        _
      $region10: #{tpu_custom_call.1} parent=5 // pred_check_branch
        %301 = sbr.rel (%p298) target = $region12
      $region11: #{tpu_custom_call.1} parent=5 // pred_region
        %s302 = ssub.s32 %s16, 1
        // Predicated region
        $region13: #{tpu_custom_call.1} parent=11 // pred_check
          %p303 = pneg %p54
        $region14: #{tpu_custom_call.1} parent=11 // pred_check_branch
          %305 = sbr.rel (%p303) target = $region16
        $region15: #{tpu_custom_call.1} parent=11 // pred_region
          %s306 = smul.u32 2, %s25
          %p307 = scmp.lt.s32.totalorder %s306, 1
          %s308 = scalar_select %p307, %s306, 1
          %s309 = smul.addr %s308, 8
          %s310 = scalar_lea.vmem %s0, %s309
          %s311 = smul.u32 2, %s25
        $region16: #{tpu_custom_call.1} parent=11 // pred_fallthru
          _
        // Predicated region
        $region17: #{tpu_custom_call.1} parent=11 // pred_check
          %p312 = pneg %p80
        $region18: #{tpu_custom_call.1} parent=11 // pred_check_branch
          %314 = sbr.rel (%p312) target = $region20
        $region19: #{tpu_custom_call.1} parent=11 // pred_region
          %p315 = scmp.lt.s32.totalorder %s25, 0
          %s316 = scalar_select %p315, %s25, 0
          %s317 = smul.addr %s316, 2
          %s318 = scalar_lea.vmem %s1, %s317
        $region20: #{tpu_custom_call.1} parent=11 // pred_fallthru
          _
      $region12: #{tpu_custom_call.1} parent=5 // pred_fallthru
        _
      %p319 = scmp.lt.s32.totalorder %s16, 2
      // Predicated region
      $region21: #{tpu_custom_call.1} parent=5 // pred_check
        %p320 = pneg %p319
      $region22: #{tpu_custom_call.1} parent=5 // pred_check_branch
        %322 = sbr.rel (%p320) target = $region24
      $region23: #{tpu_custom_call.1} parent=5 // pred_region
        // Predicated region
        $region25: #{tpu_custom_call.1} parent=23 // pred_check
          %p323 = pneg %p100
        $region26: #{tpu_custom_call.1} parent=23 // pred_check_branch
          %325 = sbr.rel (%p323) target = $region28
        $region27: #{tpu_custom_call.1} parent=23 // pred_region
          %p326 = scmp.lt.s32.totalorder %s24, 1
          %s327 = scalar_select %p326, %s24, 1
          %s328 = smul.addr %s327, 4
          %s329 = smul.addr %s328, 8
          %s330 = scalar_lea.vmem %s2, %s329
        $region28: #{tpu_custom_call.1} parent=23 // pred_fallthru
          _
        // Predicated region
        $region29: #{tpu_custom_call.1} parent=23 // pred_check
          %p331 = pneg %p126
        $region30: #{tpu_custom_call.1} parent=23 // pred_check_branch
          %333 = sbr.rel (%p331) target = $region32
        $region31: #{tpu_custom_call.1} parent=23 // pred_region
          %p334 = scmp.lt.s32.totalorder %s24, 1
          %s335 = scalar_select %p334, %s24, 1
          %s336 = smul.addr %s335, 4
          %s337 = smul.addr %s336, 8
          %s338 = scalar_lea.vmem %s3, %s337
        $region32: #{tpu_custom_call.1} parent=23 // pred_fallthru
          _
        // Predicated region
        $region33: #{tpu_custom_call.1} parent=23 // pred_check
          %p339 = pneg %p152
        $region34: #{tpu_custom_call.1} parent=23 // pred_check_branch
          %341 = sbr.rel (%p339) target = $region36
        $region35: #{tpu_custom_call.1} parent=23 // pred_region
          %p342 = scmp.lt.s32.totalorder %s24, 1
          %s343 = scalar_select %p342, %s24, 1
          %s344 = smul.addr %s343, 4
          %s345 = smul.addr %s344, 8
          %s346 = scalar_lea.vmem %s4, %s345
        $region36: #{tpu_custom_call.1} parent=23 // pred_fallthru
          _
        // Predicated region
        $region37: #{tpu_custom_call.1} parent=23 // pred_check
          %p347 = pneg %p178
        $region38: #{tpu_custom_call.1} parent=23 // pred_check_branch
          %349 = sbr.rel (%p347) target = $region40
        $region39: #{tpu_custom_call.1} parent=23 // pred_region
          %p350 = scmp.lt.s32.totalorder %s24, 1
          %s351 = scalar_select %p350, %s24, 1
          %s352 = smul.addr %s351, 8
          %s353 = smul.addr %s352, 8
          %s354 = scalar_lea.vmem %s5, %s353
        $region40: #{tpu_custom_call.1} parent=23 // pred_fallthru
          _
        // Predicated region
        $region41: #{tpu_custom_call.1} parent=23 // pred_check
          %p355 = pneg %p204
        $region42: #{tpu_custom_call.1} parent=23 // pred_check_branch
          %357 = sbr.rel (%p355) target = $region44
        $region43: #{tpu_custom_call.1} parent=23 // pred_region
          %p358 = scmp.lt.s32.totalorder %s24, 1
          %s359 = scalar_select %p358, %s24, 1
          %s360 = scalar_lea.vmem %s6, %s359
        $region44: #{tpu_custom_call.1} parent=23 // pred_fallthru
          _
        // Predicated region
        $region45: #{tpu_custom_call.1} parent=23 // pred_check
          %p361 = pneg %p230
        $region46: #{tpu_custom_call.1} parent=23 // pred_check_branch
          %363 = sbr.rel (%p361) target = $region48
        $region47: #{tpu_custom_call.1} parent=23 // pred_region
          %p364 = scmp.lt.s32.totalorder %s24, 1
          %s365 = scalar_select %p364, %s24, 1
          %s366 = scalar_lea.vmem %s7, %s365
        $region48: #{tpu_custom_call.1} parent=23 // pred_fallthru
          _
        // Predicated region
        $region49: #{tpu_custom_call.1} parent=23 // pred_check
          %p367 = pneg %p256
        $region50: #{tpu_custom_call.1} parent=23 // pred_check_branch
          %369 = sbr.rel (%p367) target = $region52
        $region51: #{tpu_custom_call.1} parent=23 // pred_region
          %p370 = scmp.lt.s32.totalorder %s24, 1
          %s371 = scalar_select %p370, %s24, 1
          %s372 = smul.addr %s371, 8
          %s373 = scalar_lea.vmem %s8, %s372
        $region52: #{tpu_custom_call.1} parent=23 // pred_fallthru
          _
      $region24: #{tpu_custom_call.1} parent=5 // pred_fallthru
        _
      %p374 = scmp.le.s32.totalorder 1, %s16
      %p375 = scmp.lt.s32.totalorder %s16, 3
      %p376 = pnand %p374, %p375
      %p377 = pneg %p376
      // Predicated region
      $region53: #{tpu_custom_call.1} parent=5 // pred_check
        _
      $region54: #{tpu_custom_call.1} parent=5 // pred_check_branch
        %379 = sbr.rel (%p376) target = $region56
      $region55: #{tpu_custom_call.1} parent=5 // pred_region
        %s380 = ssub.s32 %s16, 1
        %s381 = smul.u32 2, %s25
        %p382 = scmp.lt.s32.totalorder %s381, 1
        %s383 = scalar_select %p382, %s381, 1
        %s384 = smul.addr %s383, 8
        %s385 = scalar_lea.vmem %s0, %s384
        %p386 = pneg %p54
        %p387 = pneg %p51
        %p388 = scmp.lt.s32.totalorder %s25, 0
        %s389 = scalar_select %p388, %s25, 0
        %s390 = smul.addr %s389, 2
        %s391 = scalar_lea.vmem %s1, %s390
        %p392 = pneg %p80
        %p393 = pneg %p77
        %p394 = scmp.lt.s32.totalorder %s26, 1
        %s395 = scalar_select %p394, %s26, 1
        %s396 = smul.addr %s395, 4
        %s397 = smul.addr %s396, 8
        %s398 = scalar_lea.vmem %s2, %s397
        %p399 = pneg %p106
        %p400 = pneg %p103
        %p401 = scmp.lt.s32.totalorder %s26, 1
        %s402 = scalar_select %p401, %s26, 1
        %s403 = smul.addr %s402, 4
        %s404 = smul.addr %s403, 8
        %s405 = scalar_lea.vmem %s3, %s404
        %p406 = pneg %p132
        %p407 = pneg %p129
        %p408 = scmp.lt.s32.totalorder %s26, 1
        %s409 = scalar_select %p408, %s26, 1
        %s410 = smul.addr %s409, 4
        %s411 = smul.addr %s410, 8
        %s412 = scalar_lea.vmem %s4, %s411
        %p413 = pneg %p158
        %p414 = pneg %p155
        %p415 = scmp.lt.s32.totalorder %s26, 1
        %s416 = scalar_select %p415, %s26, 1
        %s417 = smul.addr %s416, 8
        %s418 = smul.addr %s417, 8
        %s419 = scalar_lea.vmem %s5, %s418
        %p420 = pneg %p184
        %p421 = pneg %p181
        %p422 = scmp.lt.s32.totalorder %s26, 1
        %s423 = scalar_select %p422, %s26, 1
        %s424 = scalar_lea.vmem %s6, %s423
        %p425 = pneg %p210
        %p426 = pneg %p207
        %p427 = scmp.lt.s32.totalorder %s26, 1
        %s428 = scalar_select %p427, %s26, 1
        %s429 = scalar_lea.vmem %s7, %s428
        %p430 = pneg %p236
        %p431 = pneg %p233
        %p432 = scmp.lt.s32.totalorder %s26, 1
        %s433 = scalar_select %p432, %s26, 1
        %s434 = smul.addr %s433, 8
        %s435 = scalar_lea.vmem %s8, %s434
        %p436 = pneg %p262
        %p437 = pneg %p259
        %p438 = pneg %p288
        %p439 = pneg %p285
        %s440 = smul.u32 2, %s25
        %p441 = scmp.lt.s32.totalorder %s440, 1
        %s442 = scalar_select %p441, %s440, 1
        %s443 = smul.addr %s442, 8
        %s444 = scalar_lea.vmem %s0, %s443
        %s445 = smul.u32 2, %s25
        %p446 = scmp.lt.s32.totalorder %s25, 0
        %s447 = scalar_select %p446, %s25, 0
        %s448 = smul.addr %s447, 2
        %s449 = scalar_lea.vmem %s1, %s448
        %p450 = scmp.lt.s32.totalorder %s26, 1
        %s451 = scalar_select %p450, %s26, 1
        %s452 = smul.addr %s451, 4
        %s453 = smul.addr %s452, 8
        %s454 = scalar_lea.vmem %s2, %s453
        %p455 = scmp.lt.s32.totalorder %s26, 1
        %s456 = scalar_select %p455, %s26, 1
        %s457 = smul.addr %s456, 4
        %s458 = smul.addr %s457, 8
        %s459 = scalar_lea.vmem %s3, %s458
        %p460 = scmp.lt.s32.totalorder %s26, 1
        %s461 = scalar_select %p460, %s26, 1
        %s462 = smul.addr %s461, 4
        %s463 = smul.addr %s462, 8
        %s464 = scalar_lea.vmem %s4, %s463
        %p465 = scmp.lt.s32.totalorder %s26, 1
        %s466 = scalar_select %p465, %s26, 1
        %s467 = smul.addr %s466, 8
        %s468 = smul.addr %s467, 8
        %s469 = scalar_lea.vmem %s5, %s468
        %p470 = scmp.lt.s32.totalorder %s26, 1
        %s471 = scalar_select %p470, %s26, 1
        %s472 = scalar_lea.vmem %s6, %s471
        %p473 = scmp.lt.s32.totalorder %s26, 1
        %s474 = scalar_select %p473, %s26, 1
        %s475 = scalar_lea.vmem %s7, %s474
        %p476 = scmp.lt.s32.totalorder %s26, 1
        %s477 = scalar_select %p476, %s26, 1
        %s478 = smul.addr %s477, 8
        %s479 = scalar_lea.vmem %s8, %s478
        %s480 = smul.u32 2, %s25
        %p481 = scmp.eq.s32.totalorder %s26, 0
        // Predicated region
        $region57: #{tpu_custom_call.1} parent=55 // pred_check
          %p482 = pneg %p481
        $region58: #{tpu_custom_call.1} parent=55 // pred_check_branch
          %484 = sbr.rel (%p482) target = $region60
        $region59: #{tpu_custom_call.1} parent=55 // pred_region
          %v485 = vld [vmem:[%s444] sm:$0xff]
          %v486 = vld [vmem:[%s444 + $0x8] sm:$0xff]
          %vm487 = vcmask 261120
          %488 = vst.msk [vmem:[#allocation2] sm:$0xff] %vm487, %v485
          %489 = vst.msk [vmem:[#allocation2 + $0x8] sm:$0xff] %vm487, %v486
        $region60: #{tpu_custom_call.1} parent=55 // pred_fallthru
          _
        %v490 = vld [vmem:[#allocation2] sm:$0xff]
        %v491 = vld [vmem:[#allocation2 + $0x8] sm:$0xff]
        %v492 = vld [vmem:[%s454] sm:$0xff]
        %v493 = vld [vmem:[%s454 + $0x8] sm:$0xff]
        %v494 = vld [vmem:[%s454 + $0x10] sm:$0xff]
        %v495 = vld [vmem:[%s454 + $0x18] sm:$0xff]
        %v496 = vld [vmem:[%s472] sm:$0x1]
        %v498 = vlaneseq
        %v499 = vshrl.u32 %v498, 7
        %v500 = vsub.s32 0, %v499
        %v501 = vrot.slane %v496, %v500
        %vm503 = vcmask 261120
        %v505 = vsel %vm503, %v490, 0
        %v508 = vsel %vm503, %v491, 0
        %510 = vmatprep.subr.mxu0 0.0
        %511 = vmatpush1.msra.mxu0 0.0
        %512 = vmatprep.subr.mxu0 0.0
        %513 = vmatpush1.msra.mxu0 0.0
        %514 = vmatprep.subr.mxu0 0.0
        %515 = vmatpush1.msra.mxu0 0.0
        %516 = vmatprep.subr.mxu0 0.0
        %517 = vmatpush1.msra.mxu0 0.0
        %518 = vmatprep.subr.mxu0 0.0
        %519 = vmatpush1.msra.mxu0 0.0
        %520 = vmatprep.subr.mxu0 0.0
        %521 = vmatpush1.msra.mxu0 0.0
        %522 = vmatprep.subr.mxu0 0.0
        %523 = vmatpush1.msra.mxu0 0.0
        %524 = vmatprep.subr.mxu0 0.0
        %525 = vmatpush1.msra.mxu0 0.0
        %526 = vmatprep.subr.mxu0 0.0
        %527 = vmatpush1.msra.mxu0 0.0
        %528 = vmatprep.subr.mxu0 0.0
        %529 = vmatpush1.msra.mxu0 0.0
        %530 = vmatprep.subr.mxu0 0.0
        %531 = vmatpush1.msra.mxu0 0.0
        %532 = vmatprep.subr.mxu0 0.0
        %533 = vmatpush1.msra.mxu0 0.0
        %534 = vmatprep.subr.mxu0 0.0
        %535 = vmatpush1.msra.mxu0 %v495
        %536 = vmatprep.subr.mxu0 0.0
        %537 = vmatpush1.msra.mxu0 %v494
        %538 = vmatprep.subr.mxu0 0.0
        %539 = vmatpush1.msra.mxu0 %v493
        %540 = vmatprep.subr.mxu0 0.0
        %541 = vmatpush1.msra.mxu0 %v492
        %542 = vmatprep.subr.mxu0 0.0
        %543 = vmatpush2.msra.mxu0 0.0
        %544 = vmatprep.subr.mxu0 0.0
        %545 = vmatpush2.msra.mxu0 0.0
        %546 = vmatprep.subr.mxu0 0.0
        %547 = vmatpush2.msra.mxu0 0.0
        %548 = vmatprep.subr.mxu0 0.0
        %549 = vmatpush2.msra.mxu0 0.0
        %550 = vmatprep.subr.mxu0 0.0
        %551 = vmatpush2.msra.mxu0 0.0
        %552 = vmatprep.subr.mxu0 0.0
        %553 = vmatpush2.msra.mxu0 0.0
        %554 = vmatprep.subr.mxu0 0.0
        %555 = vmatpush2.msra.mxu0 0.0
        %556 = vmatprep.subr.mxu0 0.0
        %557 = vmatpush2.msra.mxu0 0.0
        %558 = vmatprep.subr.mxu0 0.0
        %559 = vmatpush2.msra.mxu0 0.0
        %560 = vmatprep.subr.mxu0 0.0
        %561 = vmatpush2.msra.mxu0 0.0
        %562 = vmatprep.subr.mxu0 0.0
        %563 = vmatpush2.msra.mxu0 0.0
        %564 = vmatprep.subr.mxu0 0.0
        %565 = vmatpush2.msra.mxu0 0.0
        %566 = vmatprep.subr.mxu0 0.0
        %567 = vmatpush2.msra.mxu0 0.0
        %568 = vmatprep.subr.mxu0 0.0
        %569 = vmatpush2.msra.mxu0 0.0
        %570 = vmatprep.subr.mxu0 0.0
        %571 = vmatpush2.msra.mxu0 0.0
        %572 = vmatprep.subr.mxu0 0.0
        %573 = vmatpush2.msra.mxu0 0.0
        %574 = vmatprep.mubr.f32.mxu0 0.0
        %575 = vmatmul.mubr.f32.gmra.mxu0 %v505
        %v576 = vpop.f32.mrf.mxu0
        %v577 = vadd.f32 %v501, %v576
        %v578 = vpop.f32.mrf.mxu0
        %579 = vmatprep.mubr.f32.mxu0 0.0
        %580 = vmatmul.mubr.f32.gmra.mxu0 %v508
        %v581 = vpop.f32.mrf.mxu0
        %v582 = vadd.f32 %v501, %v581
        %v583 = vpop.f32.mrf.mxu0
        %584 = vdwg.mxu0
        %v585 = vld [vmem:[%s449] sm:$0x3]
        %587 = vrot.lane.b32.xlu0 %v577, 120
        %v588 = vpop.permute.xlu0 %587
        %590 = vrot.lane.b32.xlu0 %v577, 112
        %v591 = vpop.permute.xlu0 %590
        %593 = vrot.lane.b32.xlu0 %v577, 104
        %v594 = vpop.permute.xlu0 %593
        %v596 = vcombine.low %v577, %v591
        %v597 = vcombine.high %v577, %v591
        %v599 = vunpack.c.l.s4 1983009808
        %v600 = vunpack.c.0.s8 %v599
        %v601 = vlaneseq
        %v602 = vshrl.u32 %v601, 7
        %v603 = vsub.s32 %v600, %v602
        %v604 = vrot.slane %v596, %v603
        %v606 = vunpack.c.l.s4 1983009808
        %v607 = vunpack.c.0.s8 %v606
        %v608 = vlaneseq
        %v609 = vshrl.u32 %v608, 7
        %v610 = vsub.s32 %v607, %v609
        %v611 = vrot.slane %v597, %v610
        %v612 = vcombine.low %v588, %v594
        %v613 = vcombine.high %v588, %v594
        %v615 = vunpack.c.l.s4 1983009808
        %v616 = vunpack.c.0.s8 %v615
        %v617 = vlaneseq
        %v618 = vshrl.u32 %v617, 7
        %v619 = vsub.s32 %v616, %v618
        %v620 = vrot.slane %v612, %v619
        %v622 = vunpack.c.l.s4 1983009808
        %v623 = vunpack.c.0.s8 %v622
        %v624 = vlaneseq
        %v625 = vshrl.u32 %v624, 7
        %v626 = vsub.s32 %v623, %v625
        %v627 = vrot.slane %v613, %v626
        %v628 = vcombine.low %v604, %v620
        %v629 = vcombine.high %v604, %v620
        %v631 = vunpack.c.l.s4 1934713408
        %v632 = vunpack.c.0.s8 %v631
        %v633 = vlaneseq
        %v634 = vshrl.u32 %v633, 7
        %v635 = vsub.s32 %v632, %v634
        %v636 = vrot.slane %v628, %v635
        %v638 = vunpack.c.l.s4 1934713408
        %v639 = vunpack.c.0.s8 %v638
        %v640 = vlaneseq
        %v641 = vshrl.u32 %v640, 7
        %v642 = vsub.s32 %v639, %v641
        %v643 = vrot.slane %v629, %v642
        %v644 = vcombine.low %v611, %v627
        %v645 = vcombine.high %v611, %v627
        %v647 = vunpack.c.l.s4 1934713408
        %v648 = vunpack.c.0.s8 %v647
        %v649 = vlaneseq
        %v650 = vshrl.u32 %v649, 7
        %v651 = vsub.s32 %v648, %v650
        %v652 = vrot.slane %v644, %v651
        %v654 = vunpack.c.l.s4 1934713408
        %v655 = vunpack.c.0.s8 %v654
        %v656 = vlaneseq
        %v657 = vshrl.u32 %v656, 7
        %v658 = vsub.s32 %v655, %v657
        %v659 = vrot.slane %v645, %v658
        %v660 = vcombine.high %v636, 0.0
        %v661 = vcombine.high %v643, 0.0
        %v662 = vcombine.high %v652, 0.0
        %v663 = vcombine.high %v659, 0.0
        %v664 = vcombine.low %v636, %v643
        %v666 = vunpack.c.l.s4 1983009808
        %v667 = vunpack.c.0.s8 %v666
        %v668 = vlaneseq
        %v669 = vshrl.u32 %v668, 7
        %v670 = vsub.s32 %v667, %v669
        %v671 = vrot.slane %v664, %v670
        %v672 = vcombine.low %v660, %v661
        %v674 = vunpack.c.l.s4 1983009808
        %v675 = vunpack.c.0.s8 %v674
        %v676 = vlaneseq
        %v677 = vshrl.u32 %v676, 7
        %v678 = vsub.s32 %v675, %v677
        %v679 = vrot.slane %v672, %v678
        %v680 = vcombine.low %v652, %v659
        %v682 = vunpack.c.l.s4 1983009808
        %v683 = vunpack.c.0.s8 %v682
        %v684 = vlaneseq
        %v685 = vshrl.u32 %v684, 7
        %v686 = vsub.s32 %v683, %v685
        %v687 = vrot.slane %v680, %v686
        %v688 = vcombine.low %v662, %v663
        %v690 = vunpack.c.l.s4 1983009808
        %v691 = vunpack.c.0.s8 %v690
        %v692 = vlaneseq
        %v693 = vshrl.u32 %v692, 7
        %v694 = vsub.s32 %v691, %v693
        %v695 = vrot.slane %v688, %v694
        %v696 = vcombine.low %v671, %v679
        %v697 = vcombine.high %v671, %v679
        %v699 = vunpack.c.l.s4 1934713408
        %v700 = vunpack.c.0.s8 %v699
        %v701 = vlaneseq
        %v702 = vshrl.u32 %v701, 7
        %v703 = vsub.s32 %v700, %v702
        %v704 = vrot.slane %v696, %v703
        %v706 = vunpack.c.l.s4 1934713408
        %v707 = vunpack.c.0.s8 %v706
        %v708 = vlaneseq
        %v709 = vshrl.u32 %v708, 7
        %v710 = vsub.s32 %v707, %v709
        %v711 = vrot.slane %v697, %v710
        %v712 = vcombine.low %v687, %v695
        %v713 = vcombine.high %v687, %v695
        %v715 = vunpack.c.l.s4 1934713408
        %v716 = vunpack.c.0.s8 %v715
        %v717 = vlaneseq
        %v718 = vshrl.u32 %v717, 7
        %v719 = vsub.s32 %v716, %v718
        %v720 = vrot.slane %v712, %v719
        %v722 = vunpack.c.l.s4 1934713408
        %v723 = vunpack.c.0.s8 %v722
        %v724 = vlaneseq
        %v725 = vshrl.u32 %v724, 7
        %v726 = vsub.s32 %v723, %v725
        %v727 = vrot.slane %v713, %v726
        %v728 = vcombine.low %v704, %v720
        %v729 = vcombine.high %v704, %v720
        %v730 = vcombine.low %v711, %v727
        %v731 = vcombine.high %v711, %v727
        %732 = vrot.lane.b32.xlu0 %v577, 96
        %v733 = vpop.permute.xlu0 %732
        %734 = vrot.lane.b32.xlu0 %v588, 96
        %v735 = vpop.permute.xlu0 %734
        %736 = vrot.lane.b32.xlu0 %v591, 96
        %v737 = vpop.permute.xlu0 %736
        %738 = vrot.lane.b32.xlu0 %v594, 96
        %v739 = vpop.permute.xlu0 %738
        %v744 = vcombine.low %v733, %v737
        %v745 = vcombine.high %v733, %v737
        %v747 = vunpack.c.l.s4 1983009808
        %v748 = vunpack.c.0.s8 %v747
        %v749 = vlaneseq
        %v750 = vshrl.u32 %v749, 7
        %v751 = vsub.s32 %v748, %v750
        %v752 = vrot.slane %v744, %v751
        %v754 = vunpack.c.l.s4 1983009808
        %v755 = vunpack.c.0.s8 %v754
        %v756 = vlaneseq
        %v757 = vshrl.u32 %v756, 7
        %v758 = vsub.s32 %v755, %v757
        %v759 = vrot.slane %v745, %v758
        %v760 = vcombine.low %v735, %v739
        %v761 = vcombine.high %v735, %v739
        %v763 = vunpack.c.l.s4 1983009808
        %v764 = vunpack.c.0.s8 %v763
        %v765 = vlaneseq
        %v766 = vshrl.u32 %v765, 7
        %v767 = vsub.s32 %v764, %v766
        %v768 = vrot.slane %v760, %v767
        %v770 = vunpack.c.l.s4 1983009808
        %v771 = vunpack.c.0.s8 %v770
        %v772 = vlaneseq
        %v773 = vshrl.u32 %v772, 7
        %v774 = vsub.s32 %v771, %v773
        %v775 = vrot.slane %v761, %v774
        %v776 = vcombine.low %v752, %v768
        %v777 = vcombine.high %v752, %v768
        %v779 = vunpack.c.l.s4 1934713408
        %v780 = vunpack.c.0.s8 %v779
        %v781 = vlaneseq
        %v782 = vshrl.u32 %v781, 7
        %v783 = vsub.s32 %v780, %v782
        %v784 = vrot.slane %v776, %v783
        %v786 = vunpack.c.l.s4 1934713408
        %v787 = vunpack.c.0.s8 %v786
        %v788 = vlaneseq
        %v789 = vshrl.u32 %v788, 7
        %v790 = vsub.s32 %v787, %v789
        %v791 = vrot.slane %v777, %v790
        %v792 = vcombine.low %v759, %v775
        %v793 = vcombine.high %v759, %v775
        %v795 = vunpack.c.l.s4 1934713408
        %v796 = vunpack.c.0.s8 %v795
        %v797 = vlaneseq
        %v798 = vshrl.u32 %v797, 7
        %v799 = vsub.s32 %v796, %v798
        %v800 = vrot.slane %v792, %v799
        %v802 = vunpack.c.l.s4 1934713408
        %v803 = vunpack.c.0.s8 %v802
        %v804 = vlaneseq
        %v805 = vshrl.u32 %v804, 7
        %v806 = vsub.s32 %v803, %v805
        %v807 = vrot.slane %v793, %v806
        %v808 = vcombine.high %v784, 0.0
        %v809 = vcombine.high %v791, 0.0
        %v810 = vcombine.high %v800, 0.0
        %v811 = vcombine.high %v807, 0.0
        %v812 = vcombine.low %v784, %v791
        %v814 = vunpack.c.l.s4 1983009808
        %v815 = vunpack.c.0.s8 %v814
        %v816 = vlaneseq
        %v817 = vshrl.u32 %v816, 7
        %v818 = vsub.s32 %v815, %v817
        %v819 = vrot.slane %v812, %v818
        %v820 = vcombine.low %v808, %v809
        %v822 = vunpack.c.l.s4 1983009808
        %v823 = vunpack.c.0.s8 %v822
        %v824 = vlaneseq
        %v825 = vshrl.u32 %v824, 7
        %v826 = vsub.s32 %v823, %v825
        %v827 = vrot.slane %v820, %v826
        %v828 = vcombine.low %v800, %v807
        %v830 = vunpack.c.l.s4 1983009808
        %v831 = vunpack.c.0.s8 %v830
        %v832 = vlaneseq
        %v833 = vshrl.u32 %v832, 7
        %v834 = vsub.s32 %v831, %v833
        %v835 = vrot.slane %v828, %v834
        %v836 = vcombine.low %v810, %v811
        %v838 = vunpack.c.l.s4 1983009808
        %v839 = vunpack.c.0.s8 %v838
        %v840 = vlaneseq
        %v841 = vshrl.u32 %v840, 7
        %v842 = vsub.s32 %v839, %v841
        %v843 = vrot.slane %v836, %v842
        %v844 = vcombine.low %v819, %v827
        %v845 = vcombine.high %v819, %v827
        %v847 = vunpack.c.l.s4 1934713408
        %v848 = vunpack.c.0.s8 %v847
        %v849 = vlaneseq
        %v850 = vshrl.u32 %v849, 7
        %v851 = vsub.s32 %v848, %v850
        %v852 = vrot.slane %v844, %v851
        %v854 = vunpack.c.l.s4 1934713408
        %v855 = vunpack.c.0.s8 %v854
        %v856 = vlaneseq
        %v857 = vshrl.u32 %v856, 7
        %v858 = vsub.s32 %v855, %v857
        %v859 = vrot.slane %v845, %v858
        %v860 = vcombine.low %v835, %v843
        %v861 = vcombine.high %v835, %v843
        %v863 = vunpack.c.l.s4 1934713408
        %v864 = vunpack.c.0.s8 %v863
        %v865 = vlaneseq
        %v866 = vshrl.u32 %v865, 7
        %v867 = vsub.s32 %v864, %v866
        %v868 = vrot.slane %v860, %v867
        %v870 = vunpack.c.l.s4 1934713408
        %v871 = vunpack.c.0.s8 %v870
        %v872 = vlaneseq
        %v873 = vshrl.u32 %v872, 7
        %v874 = vsub.s32 %v871, %v873
        %v875 = vrot.slane %v861, %v874
        %v876 = vcombine.low %v852, %v868
        %v877 = vcombine.high %v852, %v868
        %v878 = vcombine.low %v859, %v875
        %v879 = vcombine.high %v859, %v875
        %880 = vrot.lane.b32.xlu0 %v577, 64
        %v881 = vpop.permute.xlu0 %880
        %882 = vrot.lane.b32.xlu0 %v588, 64
        %v883 = vpop.permute.xlu0 %882
        %884 = vrot.lane.b32.xlu0 %v591, 64
        %v885 = vpop.permute.xlu0 %884
        %886 = vrot.lane.b32.xlu0 %v594, 64
        %v887 = vpop.permute.xlu0 %886
        %v892 = vcombine.low %v881, %v885
        %v893 = vcombine.high %v881, %v885
        %v895 = vunpack.c.l.s4 1983009808
        %v896 = vunpack.c.0.s8 %v895
        %v897 = vlaneseq
        %v898 = vshrl.u32 %v897, 7
        %v899 = vsub.s32 %v896, %v898
        %v900 = vrot.slane %v892, %v899
        %v902 = vunpack.c.l.s4 1983009808
        %v903 = vunpack.c.0.s8 %v902
        %v904 = vlaneseq
        %v905 = vshrl.u32 %v904, 7
        %v906 = vsub.s32 %v903, %v905
        %v907 = vrot.slane %v893, %v906
        %v908 = vcombine.low %v883, %v887
        %v909 = vcombine.high %v883, %v887
        %v911 = vunpack.c.l.s4 1983009808
        %v912 = vunpack.c.0.s8 %v911
        %v913 = vlaneseq
        %v914 = vshrl.u32 %v913, 7
        %v915 = vsub.s32 %v912, %v914
        %v916 = vrot.slane %v908, %v915
        %v918 = vunpack.c.l.s4 1983009808
        %v919 = vunpack.c.0.s8 %v918
        %v920 = vlaneseq
        %v921 = vshrl.u32 %v920, 7
        %v922 = vsub.s32 %v919, %v921
        %v923 = vrot.slane %v909, %v922
        %v924 = vcombine.low %v900, %v916
        %v925 = vcombine.high %v900, %v916
        %v927 = vunpack.c.l.s4 1934713408
        %v928 = vunpack.c.0.s8 %v927
        %v929 = vlaneseq
        %v930 = vshrl.u32 %v929, 7
        %v931 = vsub.s32 %v928, %v930
        %v932 = vrot.slane %v924, %v931
        %v934 = vunpack.c.l.s4 1934713408
        %v935 = vunpack.c.0.s8 %v934
        %v936 = vlaneseq
        %v937 = vshrl.u32 %v936, 7
        %v938 = vsub.s32 %v935, %v937
        %v939 = vrot.slane %v925, %v938
        %v940 = vcombine.low %v907, %v923
        %v941 = vcombine.high %v907, %v923
        %v943 = vunpack.c.l.s4 1934713408
        %v944 = vunpack.c.0.s8 %v943
        %v945 = vlaneseq
        %v946 = vshrl.u32 %v945, 7
        %v947 = vsub.s32 %v944, %v946
        %v948 = vrot.slane %v940, %v947
        %v950 = vunpack.c.l.s4 1934713408
        %v951 = vunpack.c.0.s8 %v950
        %v952 = vlaneseq
        %v953 = vshrl.u32 %v952, 7
        %v954 = vsub.s32 %v951, %v953
        %v955 = vrot.slane %v941, %v954
        %v956 = vcombine.high %v932, 0.0
        %v957 = vcombine.high %v939, 0.0
        %v958 = vcombine.high %v948, 0.0
        %v959 = vcombine.high %v955, 0.0
        %v960 = vcombine.low %v932, %v939
        %v962 = vunpack.c.l.s4 1983009808
        %v963 = vunpack.c.0.s8 %v962
        %v964 = vlaneseq
        %v965 = vshrl.u32 %v964, 7
        %v966 = vsub.s32 %v963, %v965
        %v967 = vrot.slane %v960, %v966
        %v968 = vcombine.low %v956, %v957
        %v970 = vunpack.c.l.s4 1983009808
        %v971 = vunpack.c.0.s8 %v970
        %v972 = vlaneseq
        %v973 = vshrl.u32 %v972, 7
        %v974 = vsub.s32 %v971, %v973
        %v975 = vrot.slane %v968, %v974
        %v976 = vcombine.low %v948, %v955
        %v978 = vunpack.c.l.s4 1983009808
        %v979 = vunpack.c.0.s8 %v978
        %v980 = vlaneseq
        %v981 = vshrl.u32 %v980, 7
        %v982 = vsub.s32 %v979, %v981
        %v983 = vrot.slane %v976, %v982
        %v984 = vcombine.low %v958, %v959
        %v986 = vunpack.c.l.s4 1983009808
        %v987 = vunpack.c.0.s8 %v986
        %v988 = vlaneseq
        %v989 = vshrl.u32 %v988, 7
        %v990 = vsub.s32 %v987, %v989
        %v991 = vrot.slane %v984, %v990
        %v992 = vcombine.low %v967, %v975
        %v993 = vcombine.high %v967, %v975
        %v995 = vunpack.c.l.s4 1934713408
        %v996 = vunpack.c.0.s8 %v995
        %v997 = vlaneseq
        %v998 = vshrl.u32 %v997, 7
        %v999 = vsub.s32 %v996, %v998
        %v1000 = vrot.slane %v992, %v999
        %v1002 = vunpack.c.l.s4 1934713408
        %v1003 = vunpack.c.0.s8 %v1002
        %v1004 = vlaneseq
        %v1005 = vshrl.u32 %v1004, 7
        %v1006 = vsub.s32 %v1003, %v1005
        %v1007 = vrot.slane %v993, %v1006
        %v1008 = vcombine.low %v983, %v991
        %v1009 = vcombine.high %v983, %v991
        %v1011 = vunpack.c.l.s4 1934713408
        %v1012 = vunpack.c.0.s8 %v1011
        %v1013 = vlaneseq
        %v1014 = vshrl.u32 %v1013, 7
        %v1015 = vsub.s32 %v1012, %v1014
        %v1016 = vrot.slane %v1008, %v1015
        %v1018 = vunpack.c.l.s4 1934713408
        %v1019 = vunpack.c.0.s8 %v1018
        %v1020 = vlaneseq
        %v1021 = vshrl.u32 %v1020, 7
        %v1022 = vsub.s32 %v1019, %v1021
        %v1023 = vrot.slane %v1009, %v1022
        %v1024 = vcombine.low %v1000, %v1016
        %v1025 = vcombine.high %v1000, %v1016
        %v1026 = vcombine.low %v1007, %v1023
        %v1027 = vcombine.high %v1007, %v1023
        %vm1028 = vcmask 64512
        %v1030 = vsel %vm1028, %v728, 0
        %v1033 = vsel %vm1028, %v876, 0
        %1035 = vmatprep.subr.mxu0 0.0
        %1036 = vmatpush1.xpose.msra.mxu0 0.0
        %1037 = vmatprep.subr.mxu0 0.0
        %1038 = vmatpush1.xpose.msra.mxu0 0.0
        %1039 = vmatprep.subr.mxu0 0.0
        %1040 = vmatpush1.xpose.msra.mxu0 0.0
        %1041 = vmatprep.subr.mxu0 0.0
        %1042 = vmatpush1.xpose.msra.mxu0 0.0
        %1043 = vmatprep.subr.mxu0 0.0
        %1044 = vmatpush1.xpose.msra.mxu0 0.0
        %1045 = vmatprep.subr.mxu0 0.0
        %1046 = vmatpush1.xpose.msra.mxu0 0.0
        %1047 = vmatprep.subr.mxu0 0.0
        %1048 = vmatpush1.xpose.msra.mxu0 0.0
        %1049 = vmatprep.subr.mxu0 0.0
        %1050 = vmatpush1.xpose.msra.mxu0 0.0
        %1051 = vmatprep.subr.mxu0 0.0
        %1052 = vmatpush1.xpose.msra.mxu0 0.0
        %1053 = vmatprep.subr.mxu0 0.0
        %1054 = vmatpush1.xpose.msra.mxu0 0.0
        %1055 = vmatprep.subr.mxu0 0.0
        %1056 = vmatpush1.xpose.msra.mxu0 0.0
        %1057 = vmatprep.subr.mxu0 0.0
        %1058 = vmatpush1.xpose.msra.mxu0 0.0
        %1059 = vmatprep.subr.mxu0 0.0
        %1060 = vmatpush1.xpose.msra.mxu0 0.0
        %1061 = vmatprep.subr.mxu0 0.0
        %1062 = vmatpush1.xpose.msra.mxu0 0.0
        %1063 = vmatprep.subr.mxu0 0.0
        %1064 = vmatpush1.xpose.msra.mxu0 0.0
        %1065 = vmatprep.subr.mxu0 0.0
        %1066 = vmatpush1.xpose.msra.mxu0 %v1033
        %1067 = vmatprep.subr.mxu0 0.0
        %1068 = vmatpush2.xpose.msra.mxu0 0.0
        %1069 = vmatprep.subr.mxu0 0.0
        %1070 = vmatpush2.xpose.msra.mxu0 0.0
        %1071 = vmatprep.subr.mxu0 0.0
        %1072 = vmatpush2.xpose.msra.mxu0 0.0
        %1073 = vmatprep.subr.mxu0 0.0
        %1074 = vmatpush2.xpose.msra.mxu0 0.0
        %1075 = vmatprep.subr.mxu0 0.0
        %1076 = vmatpush2.xpose.msra.mxu0 0.0
        %1077 = vmatprep.subr.mxu0 0.0
        %1078 = vmatpush2.xpose.msra.mxu0 0.0
        %1079 = vmatprep.subr.mxu0 0.0
        %1080 = vmatpush2.xpose.msra.mxu0 0.0
        %1081 = vmatprep.subr.mxu0 0.0
        %1082 = vmatpush2.xpose.msra.mxu0 0.0
        %1083 = vmatprep.subr.mxu0 0.0
        %1084 = vmatpush2.xpose.msra.mxu0 0.0
        %1085 = vmatprep.subr.mxu0 0.0
        %1086 = vmatpush2.xpose.msra.mxu0 0.0
        %1087 = vmatprep.subr.mxu0 0.0
        %1088 = vmatpush2.xpose.msra.mxu0 0.0
        %1089 = vmatprep.subr.mxu0 0.0
        %1090 = vmatpush2.xpose.msra.mxu0 0.0
        %1091 = vmatprep.subr.mxu0 0.0
        %1092 = vmatpush2.xpose.msra.mxu0 0.0
        %1093 = vmatprep.subr.mxu0 0.0
        %1094 = vmatpush2.xpose.msra.mxu0 0.0
        %1095 = vmatprep.subr.mxu0 0.0
        %1096 = vmatpush2.xpose.msra.mxu0 0.0
        %1097 = vmatprep.subr.mxu0 0.0
        %1098 = vmatpush2.xpose.msra.mxu0 0.0
        %1099 = vmatprep.mubr.f32.mxu0 0.0
        %1100 = vmatmul.mubr.f32.gmra.mxu0 %v1030
        %v1101 = vpop.f32.mrf.mxu0
        %v1102 = vadd.f32 0.0, %v1101
        %v1103 = vpop.f32.mrf.mxu0
        %1104 = vdwg.mxu0
        %v1106 = vsel %vm1028, %v729, 0
        %v1109 = vsel %vm1028, %v877, 0
        %1111 = vmatprep.subr.mxu0 0.0
        %1112 = vmatpush1.xpose.msra.mxu0 0.0
        %1113 = vmatprep.subr.mxu0 0.0
        %1114 = vmatpush1.xpose.msra.mxu0 0.0
        %1115 = vmatprep.subr.mxu0 0.0
        %1116 = vmatpush1.xpose.msra.mxu0 0.0
        %1117 = vmatprep.subr.mxu0 0.0
        %1118 = vmatpush1.xpose.msra.mxu0 0.0
        %1119 = vmatprep.subr.mxu0 0.0
        %1120 = vmatpush1.xpose.msra.mxu0 0.0
        %1121 = vmatprep.subr.mxu0 0.0
        %1122 = vmatpush1.xpose.msra.mxu0 0.0
        %1123 = vmatprep.subr.mxu0 0.0
        %1124 = vmatpush1.xpose.msra.mxu0 0.0
        %1125 = vmatprep.subr.mxu0 0.0
        %1126 = vmatpush1.xpose.msra.mxu0 0.0
        %1127 = vmatprep.subr.mxu0 0.0
        %1128 = vmatpush1.xpose.msra.mxu0 0.0
        %1129 = vmatprep.subr.mxu0 0.0
        %1130 = vmatpush1.xpose.msra.mxu0 0.0
        %1131 = vmatprep.subr.mxu0 0.0
        %1132 = vmatpush1.xpose.msra.mxu0 0.0
        %1133 = vmatprep.subr.mxu0 0.0
        %1134 = vmatpush1.xpose.msra.mxu0 0.0
        %1135 = vmatprep.subr.mxu0 0.0
        %1136 = vmatpush1.xpose.msra.mxu0 0.0
        %1137 = vmatprep.subr.mxu0 0.0
        %1138 = vmatpush1.xpose.msra.mxu0 0.0
        %1139 = vmatprep.subr.mxu0 0.0
        %1140 = vmatpush1.xpose.msra.mxu0 0.0
        %1141 = vmatprep.subr.mxu0 0.0
        %1142 = vmatpush1.xpose.msra.mxu0 %v1109
        %1143 = vmatprep.subr.mxu0 0.0
        %1144 = vmatpush2.xpose.msra.mxu0 0.0
        %1145 = vmatprep.subr.mxu0 0.0
        %1146 = vmatpush2.xpose.msra.mxu0 0.0
        %1147 = vmatprep.subr.mxu0 0.0
        %1148 = vmatpush2.xpose.msra.mxu0 0.0
        %1149 = vmatprep.subr.mxu0 0.0
        %1150 = vmatpush2.xpose.msra.mxu0 0.0
        %1151 = vmatprep.subr.mxu0 0.0
        %1152 = vmatpush2.xpose.msra.mxu0 0.0
        %1153 = vmatprep.subr.mxu0 0.0
        %1154 = vmatpush2.xpose.msra.mxu0 0.0
        %1155 = vmatprep.subr.mxu0 0.0
        %1156 = vmatpush2.xpose.msra.mxu0 0.0
        %1157 = vmatprep.subr.mxu0 0.0
        %1158 = vmatpush2.xpose.msra.mxu0 0.0
        %1159 = vmatprep.subr.mxu0 0.0
        %1160 = vmatpush2.xpose.msra.mxu0 0.0
        %1161 = vmatprep.subr.mxu0 0.0
        %1162 = vmatpush2.xpose.msra.mxu0 0.0
        %1163 = vmatprep.subr.mxu0 0.0
        %1164 = vmatpush2.xpose.msra.mxu0 0.0
        %1165 = vmatprep.subr.mxu0 0.0
        %1166 = vmatpush2.xpose.msra.mxu0 0.0
        %1167 = vmatprep.subr.mxu0 0.0
        %1168 = vmatpush2.xpose.msra.mxu0 0.0
        %1169 = vmatprep.subr.mxu0 0.0
        %1170 = vmatpush2.xpose.msra.mxu0 0.0
        %1171 = vmatprep.subr.mxu0 0.0
        %1172 = vmatpush2.xpose.msra.mxu0 0.0
        %1173 = vmatprep.subr.mxu0 0.0
        %1174 = vmatpush2.xpose.msra.mxu0 0.0
        %1175 = vmatprep.mubr.f32.mxu0 0.0
        %1176 = vmatmul.mubr.f32.gmra.mxu0 %v1106
        %v1177 = vpop.f32.mrf.mxu0
        %v1178 = vadd.f32 0.0, %v1177
        %v1179 = vpop.f32.mrf.mxu0
        %1180 = vdwg.mxu0
        %v1182 = vsel %vm1028, %v730, 0
        %v1185 = vsel %vm1028, %v878, 0
        %1187 = vmatprep.subr.mxu0 0.0
        %1188 = vmatpush1.xpose.msra.mxu0 0.0
        %1189 = vmatprep.subr.mxu0 0.0
        %1190 = vmatpush1.xpose.msra.mxu0 0.0
        %1191 = vmatprep.subr.mxu0 0.0
        %1192 = vmatpush1.xpose.msra.mxu0 0.0
        %1193 = vmatprep.subr.mxu0 0.0
        %1194 = vmatpush1.xpose.msra.mxu0 0.0
        %1195 = vmatprep.subr.mxu0 0.0
        %1196 = vmatpush1.xpose.msra.mxu0 0.0
        %1197 = vmatprep.subr.mxu0 0.0
        %1198 = vmatpush1.xpose.msra.mxu0 0.0
        %1199 = vmatprep.subr.mxu0 0.0
        %1200 = vmatpush1.xpose.msra.mxu0 0.0
        %1201 = vmatprep.subr.mxu0 0.0
        %1202 = vmatpush1.xpose.msra.mxu0 0.0
        %1203 = vmatprep.subr.mxu0 0.0
        %1204 = vmatpush1.xpose.msra.mxu0 0.0
        %1205 = vmatprep.subr.mxu0 0.0
        %1206 = vmatpush1.xpose.msra.mxu0 0.0
        %1207 = vmatprep.subr.mxu0 0.0
        %1208 = vmatpush1.xpose.msra.mxu0 0.0
        %1209 = vmatprep.subr.mxu0 0.0
        %1210 = vmatpush1.xpose.msra.mxu0 0.0
        %1211 = vmatprep.subr.mxu0 0.0
        %1212 = vmatpush1.xpose.msra.mxu0 0.0
        %1213 = vmatprep.subr.mxu0 0.0
        %1214 = vmatpush1.xpose.msra.mxu0 0.0
        %1215 = vmatprep.subr.mxu0 0.0
        %1216 = vmatpush1.xpose.msra.mxu0 0.0
        %1217 = vmatprep.subr.mxu0 0.0
        %1218 = vmatpush1.xpose.msra.mxu0 %v1185
        %1219 = vmatprep.subr.mxu0 0.0
        %1220 = vmatpush2.xpose.msra.mxu0 0.0
        %1221 = vmatprep.subr.mxu0 0.0
        %1222 = vmatpush2.xpose.msra.mxu0 0.0
        %1223 = vmatprep.subr.mxu0 0.0
        %1224 = vmatpush2.xpose.msra.mxu0 0.0
        %1225 = vmatprep.subr.mxu0 0.0
        %1226 = vmatpush2.xpose.msra.mxu0 0.0
        %1227 = vmatprep.subr.mxu0 0.0
        %1228 = vmatpush2.xpose.msra.mxu0 0.0
        %1229 = vmatprep.subr.mxu0 0.0
        %1230 = vmatpush2.xpose.msra.mxu0 0.0
        %1231 = vmatprep.subr.mxu0 0.0
        %1232 = vmatpush2.xpose.msra.mxu0 0.0
        %1233 = vmatprep.subr.mxu0 0.0
        %1234 = vmatpush2.xpose.msra.mxu0 0.0
        %1235 = vmatprep.subr.mxu0 0.0
        %1236 = vmatpush2.xpose.msra.mxu0 0.0
        %1237 = vmatprep.subr.mxu0 0.0
        %1238 = vmatpush2.xpose.msra.mxu0 0.0
        %1239 = vmatprep.subr.mxu0 0.0
        %1240 = vmatpush2.xpose.msra.mxu0 0.0
        %1241 = vmatprep.subr.mxu0 0.0
        %1242 = vmatpush2.xpose.msra.mxu0 0.0
        %1243 = vmatprep.subr.mxu0 0.0
        %1244 = vmatpush2.xpose.msra.mxu0 0.0
        %1245 = vmatprep.subr.mxu0 0.0
        %1246 = vmatpush2.xpose.msra.mxu0 0.0
        %1247 = vmatprep.subr.mxu0 0.0
        %1248 = vmatpush2.xpose.msra.mxu0 0.0
        %1249 = vmatprep.subr.mxu0 0.0
        %1250 = vmatpush2.xpose.msra.mxu0 0.0
        %1251 = vmatprep.mubr.f32.mxu0 0.0
        %1252 = vmatmul.mubr.f32.gmra.mxu0 %v1182
        %v1253 = vpop.f32.mrf.mxu0
        %v1254 = vadd.f32 0.0, %v1253
        %v1255 = vpop.f32.mrf.mxu0
        %1256 = vdwg.mxu0
        %v1258 = vsel %vm1028, %v731, 0
        %v1261 = vsel %vm1028, %v879, 0
        %1263 = vmatprep.subr.mxu0 0.0
        %1264 = vmatpush1.xpose.msra.mxu0 0.0
        %1265 = vmatprep.subr.mxu0 0.0
        %1266 = vmatpush1.xpose.msra.mxu0 0.0
        %1267 = vmatprep.subr.mxu0 0.0
        %1268 = vmatpush1.xpose.msra.mxu0 0.0
        %1269 = vmatprep.subr.mxu0 0.0
        %1270 = vmatpush1.xpose.msra.mxu0 0.0
        %1271 = vmatprep.subr.mxu0 0.0
        %1272 = vmatpush1.xpose.msra.mxu0 0.0
        %1273 = vmatprep.subr.mxu0 0.0
        %1274 = vmatpush1.xpose.msra.mxu0 0.0
        %1275 = vmatprep.subr.mxu0 0.0
        %1276 = vmatpush1.xpose.msra.mxu0 0.0
        %1277 = vmatprep.subr.mxu0 0.0
        %1278 = vmatpush1.xpose.msra.mxu0 0.0
        %1279 = vmatprep.subr.mxu0 0.0
        %1280 = vmatpush1.xpose.msra.mxu0 0.0
        %1281 = vmatprep.subr.mxu0 0.0
        %1282 = vmatpush1.xpose.msra.mxu0 0.0
        %1283 = vmatprep.subr.mxu0 0.0
        %1284 = vmatpush1.xpose.msra.mxu0 0.0
        %1285 = vmatprep.subr.mxu0 0.0
        %1286 = vmatpush1.xpose.msra.mxu0 0.0
        %1287 = vmatprep.subr.mxu0 0.0
        %1288 = vmatpush1.xpose.msra.mxu0 0.0
        %1289 = vmatprep.subr.mxu0 0.0
        %1290 = vmatpush1.xpose.msra.mxu0 0.0
        %1291 = vmatprep.subr.mxu0 0.0
        %1292 = vmatpush1.xpose.msra.mxu0 0.0
        %1293 = vmatprep.subr.mxu0 0.0
        %1294 = vmatpush1.xpose.msra.mxu0 %v1261
        %1295 = vmatprep.subr.mxu0 0.0
        %1296 = vmatpush2.xpose.msra.mxu0 0.0
        %1297 = vmatprep.subr.mxu0 0.0
        %1298 = vmatpush2.xpose.msra.mxu0 0.0
        %1299 = vmatprep.subr.mxu0 0.0
        %1300 = vmatpush2.xpose.msra.mxu0 0.0
        %1301 = vmatprep.subr.mxu0 0.0
        %1302 = vmatpush2.xpose.msra.mxu0 0.0
        %1303 = vmatprep.subr.mxu0 0.0
        %1304 = vmatpush2.xpose.msra.mxu0 0.0
        %1305 = vmatprep.subr.mxu0 0.0
        %1306 = vmatpush2.xpose.msra.mxu0 0.0
        %1307 = vmatprep.subr.mxu0 0.0
        %1308 = vmatpush2.xpose.msra.mxu0 0.0
        %1309 = vmatprep.subr.mxu0 0.0
        %1310 = vmatpush2.xpose.msra.mxu0 0.0
        %1311 = vmatprep.subr.mxu0 0.0
        %1312 = vmatpush2.xpose.msra.mxu0 0.0
        %1313 = vmatprep.subr.mxu0 0.0
        %1314 = vmatpush2.xpose.msra.mxu0 0.0
        %1315 = vmatprep.subr.mxu0 0.0
        %1316 = vmatpush2.xpose.msra.mxu0 0.0
        %1317 = vmatprep.subr.mxu0 0.0
        %1318 = vmatpush2.xpose.msra.mxu0 0.0
        %1319 = vmatprep.subr.mxu0 0.0
        %1320 = vmatpush2.xpose.msra.mxu0 0.0
        %1321 = vmatprep.subr.mxu0 0.0
        %1322 = vmatpush2.xpose.msra.mxu0 0.0
        %1323 = vmatprep.subr.mxu0 0.0
        %1324 = vmatpush2.xpose.msra.mxu0 0.0
        %1325 = vmatprep.subr.mxu0 0.0
        %1326 = vmatpush2.xpose.msra.mxu0 0.0
        %1327 = vmatprep.mubr.f32.mxu0 0.0
        %1328 = vmatmul.mubr.f32.gmra.mxu0 %v1258
        %v1329 = vpop.f32.mrf.mxu0
        %v1330 = vadd.f32 0.0, %v1329
        %v1331 = vpop.f32.mrf.mxu0
        %1332 = vdwg.mxu0
        %v1333 = vmul.f32 %v1102, 0.35355338
        %v1334 = vmul.f32 %v1178, 0.35355338
        %v1335 = vmul.f32 %v1254, 0.35355338
        %v1336 = vmul.f32 %v1330, 0.35355338
        %v1337 = vlaneseq
        %v1338 = vshrl.u32 %v1337, 7
        %v1339 = vsub.s32 0, %v1338
        %v1340 = vrot.slane %v585, %v1339
        %v1341 = vadd.f32 %v1333, %v1340
        %v1342 = vadd.f32 %v1334, %v1340
        %v1343 = vadd.f32 %v1335, %v1340
        %v1344 = vadd.f32 %v1336, %v1340
        %v1345 = vsel %vm1028, %v1341, -inf
        %1346 = vmax.xlane.f32.xlu0 %v1345
        %v1347 = vpop.xlane.xlu0 %1346
        %v1348 = vsel %vm1028, %v1342, -inf
        %1349 = vmax.xlane.f32.xlu0 %v1348
        %v1350 = vpop.xlane.xlu0 %1349
        %v1351 = vsel %vm1028, %v1343, -inf
        %1352 = vmax.xlane.f32.xlu0 %v1351
        %v1353 = vpop.xlane.xlu0 %1352
        %v1354 = vsel %vm1028, %v1344, -inf
        %1355 = vmax.xlane.f32.xlu0 %v1354
        %v1356 = vpop.xlane.xlu0 %1355
        %v1357 = vsub.f32 %v1341, %v1347
        %v1358 = vsub.f32 %v1342, %v1350
        %v1359 = vsub.f32 %v1343, %v1353
        %v1360 = vsub.f32 %v1344, %v1356
        %v1361 = vmul.f32 %v1357, 1.442695
        %v1362 = vpow.pop %v1361
        %v1363 = vmul.f32 %v1358, 1.442695
        %v1364 = vpow.pop %v1363
        %v1365 = vmul.f32 %v1359, 1.442695
        %v1366 = vpow.pop %v1365
        %v1367 = vmul.f32 %v1360, 1.442695
        %v1368 = vpow.pop %v1367
        %v1369 = vsel %vm1028, %v1362, 0.0
        %1370 = vadd.xlane.f32.xlu0 %v1369
        %v1371 = vpop.xlane.xlu0 %1370
        %v1372 = vsel %vm1028, %v1364, 0.0
        %1373 = vadd.xlane.f32.xlu0 %v1372
        %v1374 = vpop.xlane.xlu0 %1373
        %v1375 = vsel %vm1028, %v1366, 0.0
        %1376 = vadd.xlane.f32.xlu0 %v1375
        %v1377 = vpop.xlane.xlu0 %1376
        %v1378 = vsel %vm1028, %v1368, 0.0
        %1379 = vadd.xlane.f32.xlu0 %v1378
        %v1380 = vpop.xlane.xlu0 %1379
        %v1381 = vrcp.pop %v1371
        %v1382 = vmul.f32 %v1362, %v1381
        %v1383 = vrcp.pop %v1374
        %v1384 = vmul.f32 %v1364, %v1383
        %v1385 = vrcp.pop %v1377
        %v1386 = vmul.f32 %v1366, %v1385
        %v1387 = vrcp.pop %v1380
        %v1388 = vmul.f32 %v1368, %v1387
        %v1390 = vsel %vm1028, %v1382, 0
        %1392 = vmatprep.subr.mxu0 0.0
        %1393 = vmatpush1.msra.mxu0 0.0
        %1394 = vmatprep.subr.mxu0 0.0
        %1395 = vmatpush1.msra.mxu0 0.0
        %1396 = vmatprep.subr.mxu0 0.0
        %1397 = vmatpush1.msra.mxu0 0.0
        %1398 = vmatprep.subr.mxu0 0.0
        %1399 = vmatpush1.msra.mxu0 0.0
        %1400 = vmatprep.subr.mxu0 0.0
        %1401 = vmatpush1.msra.mxu0 0.0
        %1402 = vmatprep.subr.mxu0 0.0
        %1403 = vmatpush1.msra.mxu0 0.0
        %1404 = vmatprep.subr.mxu0 0.0
        %1405 = vmatpush1.msra.mxu0 0.0
        %1406 = vmatprep.subr.mxu0 0.0
        %1407 = vmatpush1.msra.mxu0 0.0
        %1408 = vmatprep.subr.mxu0 0.0
        %1409 = vmatpush1.msra.mxu0 0.0
        %1410 = vmatprep.subr.mxu0 0.0
        %1411 = vmatpush1.msra.mxu0 0.0
        %1412 = vmatprep.subr.mxu0 0.0
        %1413 = vmatpush1.msra.mxu0 0.0
        %1414 = vmatprep.subr.mxu0 0.0
        %1415 = vmatpush1.msra.mxu0 0.0
        %1416 = vmatprep.subr.mxu0 0.0
        %1417 = vmatpush1.msra.mxu0 0.0
        %1418 = vmatprep.subr.mxu0 0.0
        %1419 = vmatpush1.msra.mxu0 0.0
        %1420 = vmatprep.subr.mxu0 0.0
        %1421 = vmatpush1.msra.mxu0 0.0
        %1422 = vmatprep.subr.mxu0 0.0
        %1423 = vmatpush1.msra.mxu0 %v1024
        %1424 = vmatprep.subr.mxu0 0.0
        %1425 = vmatpush2.msra.mxu0 0.0
        %1426 = vmatprep.subr.mxu0 0.0
        %1427 = vmatpush2.msra.mxu0 0.0
        %1428 = vmatprep.subr.mxu0 0.0
        %1429 = vmatpush2.msra.mxu0 0.0
        %1430 = vmatprep.subr.mxu0 0.0
        %1431 = vmatpush2.msra.mxu0 0.0
        %1432 = vmatprep.subr.mxu0 0.0
        %1433 = vmatpush2.msra.mxu0 0.0
        %1434 = vmatprep.subr.mxu0 0.0
        %1435 = vmatpush2.msra.mxu0 0.0
        %1436 = vmatprep.subr.mxu0 0.0
        %1437 = vmatpush2.msra.mxu0 0.0
        %1438 = vmatprep.subr.mxu0 0.0
        %1439 = vmatpush2.msra.mxu0 0.0
        %1440 = vmatprep.subr.mxu0 0.0
        %1441 = vmatpush2.msra.mxu0 0.0
        %1442 = vmatprep.subr.mxu0 0.0
        %1443 = vmatpush2.msra.mxu0 0.0
        %1444 = vmatprep.subr.mxu0 0.0
        %1445 = vmatpush2.msra.mxu0 0.0
        %1446 = vmatprep.subr.mxu0 0.0
        %1447 = vmatpush2.msra.mxu0 0.0
        %1448 = vmatprep.subr.mxu0 0.0
        %1449 = vmatpush2.msra.mxu0 0.0
        %1450 = vmatprep.subr.mxu0 0.0
        %1451 = vmatpush2.msra.mxu0 0.0
        %1452 = vmatprep.subr.mxu0 0.0
        %1453 = vmatpush2.msra.mxu0 0.0
        %1454 = vmatprep.subr.mxu0 0.0
        %1455 = vmatpush2.msra.mxu0 0.0
        %1456 = vmatprep.mubr.f32.mxu0 0.0
        %1457 = vmatmul.mubr.f32.gmra.mxu0 %v1390
        %v1458 = vpop.f32.mrf.mxu0
        %v1459 = vadd.f32 0.0, %v1458
        %v1460 = vpop.f32.mrf.mxu0
        %1461 = vdwg.mxu0
        %v1463 = vsel %vm1028, %v1384, 0
        %1465 = vmatprep.subr.mxu0 0.0
        %1466 = vmatpush1.msra.mxu0 0.0
        %1467 = vmatprep.subr.mxu0 0.0
        %1468 = vmatpush1.msra.mxu0 0.0
        %1469 = vmatprep.subr.mxu0 0.0
        %1470 = vmatpush1.msra.mxu0 0.0
        %1471 = vmatprep.subr.mxu0 0.0
        %1472 = vmatpush1.msra.mxu0 0.0
        %1473 = vmatprep.subr.mxu0 0.0
        %1474 = vmatpush1.msra.mxu0 0.0
        %1475 = vmatprep.subr.mxu0 0.0
        %1476 = vmatpush1.msra.mxu0 0.0
        %1477 = vmatprep.subr.mxu0 0.0
        %1478 = vmatpush1.msra.mxu0 0.0
        %1479 = vmatprep.subr.mxu0 0.0
        %1480 = vmatpush1.msra.mxu0 0.0
        %1481 = vmatprep.subr.mxu0 0.0
        %1482 = vmatpush1.msra.mxu0 0.0
        %1483 = vmatprep.subr.mxu0 0.0
        %1484 = vmatpush1.msra.mxu0 0.0
        %1485 = vmatprep.subr.mxu0 0.0
        %1486 = vmatpush1.msra.mxu0 0.0
        %1487 = vmatprep.subr.mxu0 0.0
        %1488 = vmatpush1.msra.mxu0 0.0
        %1489 = vmatprep.subr.mxu0 0.0
        %1490 = vmatpush1.msra.mxu0 0.0
        %1491 = vmatprep.subr.mxu0 0.0
        %1492 = vmatpush1.msra.mxu0 0.0
        %1493 = vmatprep.subr.mxu0 0.0
        %1494 = vmatpush1.msra.mxu0 0.0
        %1495 = vmatprep.subr.mxu0 0.0
        %1496 = vmatpush1.msra.mxu0 %v1025
        %1497 = vmatprep.subr.mxu0 0.0
        %1498 = vmatpush2.msra.mxu0 0.0
        %1499 = vmatprep.subr.mxu0 0.0
        %1500 = vmatpush2.msra.mxu0 0.0
        %1501 = vmatprep.subr.mxu0 0.0
        %1502 = vmatpush2.msra.mxu0 0.0
        %1503 = vmatprep.subr.mxu0 0.0
        %1504 = vmatpush2.msra.mxu0 0.0
        %1505 = vmatprep.subr.mxu0 0.0
        %1506 = vmatpush2.msra.mxu0 0.0
        %1507 = vmatprep.subr.mxu0 0.0
        %1508 = vmatpush2.msra.mxu0 0.0
        %1509 = vmatprep.subr.mxu0 0.0
        %1510 = vmatpush2.msra.mxu0 0.0
        %1511 = vmatprep.subr.mxu0 0.0
        %1512 = vmatpush2.msra.mxu0 0.0
        %1513 = vmatprep.subr.mxu0 0.0
        %1514 = vmatpush2.msra.mxu0 0.0
        %1515 = vmatprep.subr.mxu0 0.0
        %1516 = vmatpush2.msra.mxu0 0.0
        %1517 = vmatprep.subr.mxu0 0.0
        %1518 = vmatpush2.msra.mxu0 0.0
        %1519 = vmatprep.subr.mxu0 0.0
        %1520 = vmatpush2.msra.mxu0 0.0
        %1521 = vmatprep.subr.mxu0 0.0
        %1522 = vmatpush2.msra.mxu0 0.0
        %1523 = vmatprep.subr.mxu0 0.0
        %1524 = vmatpush2.msra.mxu0 0.0
        %1525 = vmatprep.subr.mxu0 0.0
        %1526 = vmatpush2.msra.mxu0 0.0
        %1527 = vmatprep.subr.mxu0 0.0
        %1528 = vmatpush2.msra.mxu0 0.0
        %1529 = vmatprep.mubr.f32.mxu0 0.0
        %1530 = vmatmul.mubr.f32.gmra.mxu0 %v1463
        %v1531 = vpop.f32.mrf.mxu0
        %v1532 = vadd.f32 0.0, %v1531
        %v1533 = vpop.f32.mrf.mxu0
        %1534 = vdwg.mxu0
        %v1536 = vsel %vm1028, %v1386, 0
        %1538 = vmatprep.subr.mxu0 0.0
        %1539 = vmatpush1.msra.mxu0 0.0
        %1540 = vmatprep.subr.mxu0 0.0
        %1541 = vmatpush1.msra.mxu0 0.0
        %1542 = vmatprep.subr.mxu0 0.0
        %1543 = vmatpush1.msra.mxu0 0.0
        %1544 = vmatprep.subr.mxu0 0.0
        %1545 = vmatpush1.msra.mxu0 0.0
        %1546 = vmatprep.subr.mxu0 0.0
        %1547 = vmatpush1.msra.mxu0 0.0
        %1548 = vmatprep.subr.mxu0 0.0
        %1549 = vmatpush1.msra.mxu0 0.0
        %1550 = vmatprep.subr.mxu0 0.0
        %1551 = vmatpush1.msra.mxu0 0.0
        %1552 = vmatprep.subr.mxu0 0.0
        %1553 = vmatpush1.msra.mxu0 0.0
        %1554 = vmatprep.subr.mxu0 0.0
        %1555 = vmatpush1.msra.mxu0 0.0
        %1556 = vmatprep.subr.mxu0 0.0
        %1557 = vmatpush1.msra.mxu0 0.0
        %1558 = vmatprep.subr.mxu0 0.0
        %1559 = vmatpush1.msra.mxu0 0.0
        %1560 = vmatprep.subr.mxu0 0.0
        %1561 = vmatpush1.msra.mxu0 0.0
        %1562 = vmatprep.subr.mxu0 0.0
        %1563 = vmatpush1.msra.mxu0 0.0
        %1564 = vmatprep.subr.mxu0 0.0
        %1565 = vmatpush1.msra.mxu0 0.0
        %1566 = vmatprep.subr.mxu0 0.0
        %1567 = vmatpush1.msra.mxu0 0.0
        %1568 = vmatprep.subr.mxu0 0.0
        %1569 = vmatpush1.msra.mxu0 %v1026
        %1570 = vmatprep.subr.mxu0 0.0
        %1571 = vmatpush2.msra.mxu0 0.0
        %1572 = vmatprep.subr.mxu0 0.0
        %1573 = vmatpush2.msra.mxu0 0.0
        %1574 = vmatprep.subr.mxu0 0.0
        %1575 = vmatpush2.msra.mxu0 0.0
        %1576 = vmatprep.subr.mxu0 0.0
        %1577 = vmatpush2.msra.mxu0 0.0
        %1578 = vmatprep.subr.mxu0 0.0
        %1579 = vmatpush2.msra.mxu0 0.0
        %1580 = vmatprep.subr.mxu0 0.0
        %1581 = vmatpush2.msra.mxu0 0.0
        %1582 = vmatprep.subr.mxu0 0.0
        %1583 = vmatpush2.msra.mxu0 0.0
        %1584 = vmatprep.subr.mxu0 0.0
        %1585 = vmatpush2.msra.mxu0 0.0
        %1586 = vmatprep.subr.mxu0 0.0
        %1587 = vmatpush2.msra.mxu0 0.0
        %1588 = vmatprep.subr.mxu0 0.0
        %1589 = vmatpush2.msra.mxu0 0.0
        %1590 = vmatprep.subr.mxu0 0.0
        %1591 = vmatpush2.msra.mxu0 0.0
        %1592 = vmatprep.subr.mxu0 0.0
        %1593 = vmatpush2.msra.mxu0 0.0
        %1594 = vmatprep.subr.mxu0 0.0
        %1595 = vmatpush2.msra.mxu0 0.0
        %1596 = vmatprep.subr.mxu0 0.0
        %1597 = vmatpush2.msra.mxu0 0.0
        %1598 = vmatprep.subr.mxu0 0.0
        %1599 = vmatpush2.msra.mxu0 0.0
        %1600 = vmatprep.subr.mxu0 0.0
        %1601 = vmatpush2.msra.mxu0 0.0
        %1602 = vmatprep.mubr.f32.mxu0 0.0
        %1603 = vmatmul.mubr.f32.gmra.mxu0 %v1536
        %v1604 = vpop.f32.mrf.mxu0
        %v1605 = vadd.f32 0.0, %v1604
        %v1606 = vpop.f32.mrf.mxu0
        %1607 = vdwg.mxu0
        %v1609 = vsel %vm1028, %v1388, 0
        %1611 = vmatprep.subr.mxu0 0.0
        %1612 = vmatpush1.msra.mxu0 0.0
        %1613 = vmatprep.subr.mxu0 0.0
        %1614 = vmatpush1.msra.mxu0 0.0
        %1615 = vmatprep.subr.mxu0 0.0
        %1616 = vmatpush1.msra.mxu0 0.0
        %1617 = vmatprep.subr.mxu0 0.0
        %1618 = vmatpush1.msra.mxu0 0.0
        %1619 = vmatprep.subr.mxu0 0.0
        %1620 = vmatpush1.msra.mxu0 0.0
        %1621 = vmatprep.subr.mxu0 0.0
        %1622 = vmatpush1.msra.mxu0 0.0
        %1623 = vmatprep.subr.mxu0 0.0
        %1624 = vmatpush1.msra.mxu0 0.0
        %1625 = vmatprep.subr.mxu0 0.0
        %1626 = vmatpush1.msra.mxu0 0.0
        %1627 = vmatprep.subr.mxu0 0.0
        %1628 = vmatpush1.msra.mxu0 0.0
        %1629 = vmatprep.subr.mxu0 0.0
        %1630 = vmatpush1.msra.mxu0 0.0
        %1631 = vmatprep.subr.mxu0 0.0
        %1632 = vmatpush1.msra.mxu0 0.0
        %1633 = vmatprep.subr.mxu0 0.0
        %1634 = vmatpush1.msra.mxu0 0.0
        %1635 = vmatprep.subr.mxu0 0.0
        %1636 = vmatpush1.msra.mxu0 0.0
        %1637 = vmatprep.subr.mxu0 0.0
        %1638 = vmatpush1.msra.mxu0 0.0
        %1639 = vmatprep.subr.mxu0 0.0
        %1640 = vmatpush1.msra.mxu0 0.0
        %1641 = vmatprep.subr.mxu0 0.0
        %1642 = vmatpush1.msra.mxu0 %v1027
        %1643 = vmatprep.subr.mxu0 0.0
        %1644 = vmatpush2.msra.mxu0 0.0
        %1645 = vmatprep.subr.mxu0 0.0
        %1646 = vmatpush2.msra.mxu0 0.0
        %1647 = vmatprep.subr.mxu0 0.0
        %1648 = vmatpush2.msra.mxu0 0.0
        %1649 = vmatprep.subr.mxu0 0.0
        %1650 = vmatpush2.msra.mxu0 0.0
        %1651 = vmatprep.subr.mxu0 0.0
        %1652 = vmatpush2.msra.mxu0 0.0
        %1653 = vmatprep.subr.mxu0 0.0
        %1654 = vmatpush2.msra.mxu0 0.0
        %1655 = vmatprep.subr.mxu0 0.0
        %1656 = vmatpush2.msra.mxu0 0.0
        %1657 = vmatprep.subr.mxu0 0.0
        %1658 = vmatpush2.msra.mxu0 0.0
        %1659 = vmatprep.subr.mxu0 0.0
        %1660 = vmatpush2.msra.mxu0 0.0
        %1661 = vmatprep.subr.mxu0 0.0
        %1662 = vmatpush2.msra.mxu0 0.0
        %1663 = vmatprep.subr.mxu0 0.0
        %1664 = vmatpush2.msra.mxu0 0.0
        %1665 = vmatprep.subr.mxu0 0.0
        %1666 = vmatpush2.msra.mxu0 0.0
        %1667 = vmatprep.subr.mxu0 0.0
        %1668 = vmatpush2.msra.mxu0 0.0
        %1669 = vmatprep.subr.mxu0 0.0
        %1670 = vmatpush2.msra.mxu0 0.0
        %1671 = vmatprep.subr.mxu0 0.0
        %1672 = vmatpush2.msra.mxu0 0.0
        %1673 = vmatprep.subr.mxu0 0.0
        %1674 = vmatpush2.msra.mxu0 0.0
        %1675 = vmatprep.mubr.f32.mxu0 0.0
        %1676 = vmatmul.mubr.f32.gmra.mxu0 %v1609
        %v1677 = vpop.f32.mrf.mxu0
        %v1678 = vadd.f32 0.0, %v1677
        %v1679 = vpop.f32.mrf.mxu0
        %1680 = vdwg.mxu0
        %v1681 = vcombine.low %v1459, %v1605
        %v1682 = vcombine.high %v1459, %v1605
        %v1684 = vunpack.c.l.s4 1983009808
        %v1685 = vunpack.c.0.s8 %v1684
        %v1686 = vlaneseq
        %v1687 = vshrl.u32 %v1686, 7
        %v1688 = vsub.s32 %v1685, %v1687
        %v1689 = vrot.slane %v1681, %v1688
        %v1691 = vunpack.c.l.s4 1983009808
        %v1692 = vunpack.c.0.s8 %v1691
        %v1693 = vlaneseq
        %v1694 = vshrl.u32 %v1693, 7
        %v1695 = vsub.s32 %v1692, %v1694
        %v1696 = vrot.slane %v1682, %v1695
        %v1697 = vcombine.low %v1532, %v1678
        %v1698 = vcombine.high %v1532, %v1678
        %v1700 = vunpack.c.l.s4 1983009808
        %v1701 = vunpack.c.0.s8 %v1700
        %v1702 = vlaneseq
        %v1703 = vshrl.u32 %v1702, 7
        %v1704 = vsub.s32 %v1701, %v1703
        %v1705 = vrot.slane %v1697, %v1704
        %v1707 = vunpack.c.l.s4 1983009808
        %v1708 = vunpack.c.0.s8 %v1707
        %v1709 = vlaneseq
        %v1710 = vshrl.u32 %v1709, 7
        %v1711 = vsub.s32 %v1708, %v1710
        %v1712 = vrot.slane %v1698, %v1711
        %v1713 = vcombine.low %v1689, %v1705
        %v1714 = vcombine.high %v1689, %v1705
        %v1716 = vunpack.c.l.s4 1934713408
        %v1717 = vunpack.c.0.s8 %v1716
        %v1718 = vlaneseq
        %v1719 = vshrl.u32 %v1718, 7
        %v1720 = vsub.s32 %v1717, %v1719
        %v1721 = vrot.slane %v1713, %v1720
        %v1723 = vunpack.c.l.s4 1934713408
        %v1724 = vunpack.c.0.s8 %v1723
        %v1725 = vlaneseq
        %v1726 = vshrl.u32 %v1725, 7
        %v1727 = vsub.s32 %v1724, %v1726
        %v1728 = vrot.slane %v1714, %v1727
        %v1729 = vcombine.low %v1696, %v1712
        %v1730 = vcombine.high %v1696, %v1712
        %v1732 = vunpack.c.l.s4 1934713408
        %v1733 = vunpack.c.0.s8 %v1732
        %v1734 = vlaneseq
        %v1735 = vshrl.u32 %v1734, 7
        %v1736 = vsub.s32 %v1733, %v1735
        %v1737 = vrot.slane %v1729, %v1736
        %v1739 = vunpack.c.l.s4 1934713408
        %v1740 = vunpack.c.0.s8 %v1739
        %v1741 = vlaneseq
        %v1742 = vshrl.u32 %v1741, 7
        %v1743 = vsub.s32 %v1740, %v1742
        %v1744 = vrot.slane %v1730, %v1743
        %v1745 = vcombine.high %v1721, 0.0
        %v1746 = vcombine.high %v1728, 0.0
        %v1747 = vcombine.high %v1737, 0.0
        %v1748 = vcombine.high %v1744, 0.0
        %v1749 = vcombine.low %v1721, %v1728
        %v1751 = vunpack.c.l.s4 1983009808
        %v1752 = vunpack.c.0.s8 %v1751
        %v1753 = vlaneseq
        %v1754 = vshrl.u32 %v1753, 7
        %v1755 = vsub.s32 %v1752, %v1754
        %v1756 = vrot.slane %v1749, %v1755
        %v1757 = vcombine.low %v1745, %v1746
        %v1759 = vunpack.c.l.s4 1983009808
        %v1760 = vunpack.c.0.s8 %v1759
        %v1761 = vlaneseq
        %v1762 = vshrl.u32 %v1761, 7
        %v1763 = vsub.s32 %v1760, %v1762
        %v1764 = vrot.slane %v1757, %v1763
        %v1765 = vcombine.low %v1737, %v1744
        %v1767 = vunpack.c.l.s4 1983009808
        %v1768 = vunpack.c.0.s8 %v1767
        %v1769 = vlaneseq
        %v1770 = vshrl.u32 %v1769, 7
        %v1771 = vsub.s32 %v1768, %v1770
        %v1772 = vrot.slane %v1765, %v1771
        %v1773 = vcombine.low %v1747, %v1748
        %v1775 = vunpack.c.l.s4 1983009808
        %v1776 = vunpack.c.0.s8 %v1775
        %v1777 = vlaneseq
        %v1778 = vshrl.u32 %v1777, 7
        %v1779 = vsub.s32 %v1776, %v1778
        %v1780 = vrot.slane %v1773, %v1779
        %v1781 = vcombine.low %v1756, %v1764
        %v1782 = vcombine.high %v1756, %v1764
        %v1784 = vunpack.c.l.s4 1934713408
        %v1785 = vunpack.c.0.s8 %v1784
        %v1786 = vlaneseq
        %v1787 = vshrl.u32 %v1786, 7
        %v1788 = vsub.s32 %v1785, %v1787
        %v1789 = vrot.slane %v1781, %v1788
        %v1791 = vunpack.c.l.s4 1934713408
        %v1792 = vunpack.c.0.s8 %v1791
        %v1793 = vlaneseq
        %v1794 = vshrl.u32 %v1793, 7
        %v1795 = vsub.s32 %v1792, %v1794
        %v1796 = vrot.slane %v1782, %v1795
        %v1797 = vcombine.low %v1772, %v1780
        %v1798 = vcombine.high %v1772, %v1780
        %v1800 = vunpack.c.l.s4 1934713408
        %v1801 = vunpack.c.0.s8 %v1800
        %v1802 = vlaneseq
        %v1803 = vshrl.u32 %v1802, 7
        %v1804 = vsub.s32 %v1801, %v1803
        %v1805 = vrot.slane %v1797, %v1804
        %v1807 = vunpack.c.l.s4 1934713408
        %v1808 = vunpack.c.0.s8 %v1807
        %v1809 = vlaneseq
        %v1810 = vshrl.u32 %v1809, 7
        %v1811 = vsub.s32 %v1808, %v1810
        %v1812 = vrot.slane %v1798, %v1811
        %v1813 = vcombine.low %v1789, %v1805
        %v1814 = vcombine.high %v1789, %v1805
        %v1815 = vcombine.low %v1796, %v1812
        %v1816 = vcombine.high %v1796, %v1812
        %1818 = vrot.lane.b32.xlu0 %v1814, 8
        %v1819 = vpop.permute.xlu0 %1818
        %1822 = vrot.lane.b32.xlu0 %v1815, 16
        %v1823 = vpop.permute.xlu0 %1822
        %1826 = vrot.lane.b32.xlu0 %v1816, 24
        %v1827 = vpop.permute.xlu0 %1826
        %v1829 = vsel %vm1028, %v1813, %v1819
        %vm1830 = vcmask 130048
        %v1831 = vsel %vm1830, %v1829, %v1823
        %vm1832 = vcmask 195584
        %v1833 = vsel %vm1832, %v1831, %v1827
        %1835 = vrot.lane.b32.xlu0 %v582, 120
        %v1836 = vpop.permute.xlu0 %1835
        %1838 = vrot.lane.b32.xlu0 %v582, 112
        %v1839 = vpop.permute.xlu0 %1838
        %1841 = vrot.lane.b32.xlu0 %v582, 104
        %v1842 = vpop.permute.xlu0 %1841
        %v1844 = vcombine.low %v582, %v1839
        %v1845 = vcombine.high %v582, %v1839
        %v1847 = vunpack.c.l.s4 1983009808
        %v1848 = vunpack.c.0.s8 %v1847
        %v1849 = vlaneseq
        %v1850 = vshrl.u32 %v1849, 7
        %v1851 = vsub.s32 %v1848, %v1850
        %v1852 = vrot.slane %v1844, %v1851
        %v1854 = vunpack.c.l.s4 1983009808
        %v1855 = vunpack.c.0.s8 %v1854
        %v1856 = vlaneseq
        %v1857 = vshrl.u32 %v1856, 7
        %v1858 = vsub.s32 %v1855, %v1857
        %v1859 = vrot.slane %v1845, %v1858
        %v1860 = vcombine.low %v1836, %v1842
        %v1861 = vcombine.high %v1836, %v1842
        %v1863 = vunpack.c.l.s4 1983009808
        %v1864 = vunpack.c.0.s8 %v1863
        %v1865 = vlaneseq
        %v1866 = vshrl.u32 %v1865, 7
        %v1867 = vsub.s32 %v1864, %v1866
        %v1868 = vrot.slane %v1860, %v1867
        %v1870 = vunpack.c.l.s4 1983009808
        %v1871 = vunpack.c.0.s8 %v1870
        %v1872 = vlaneseq
        %v1873 = vshrl.u32 %v1872, 7
        %v1874 = vsub.s32 %v1871, %v1873
        %v1875 = vrot.slane %v1861, %v1874
        %v1876 = vcombine.low %v1852, %v1868
        %v1877 = vcombine.high %v1852, %v1868
        %v1879 = vunpack.c.l.s4 1934713408
        %v1880 = vunpack.c.0.s8 %v1879
        %v1881 = vlaneseq
        %v1882 = vshrl.u32 %v1881, 7
        %v1883 = vsub.s32 %v1880, %v1882
        %v1884 = vrot.slane %v1876, %v1883
        %v1886 = vunpack.c.l.s4 1934713408
        %v1887 = vunpack.c.0.s8 %v1886
        %v1888 = vlaneseq
        %v1889 = vshrl.u32 %v1888, 7
        %v1890 = vsub.s32 %v1887, %v1889
        %v1891 = vrot.slane %v1877, %v1890
        %v1892 = vcombine.low %v1859, %v1875
        %v1893 = vcombine.high %v1859, %v1875
        %v1895 = vunpack.c.l.s4 1934713408
        %v1896 = vunpack.c.0.s8 %v1895
        %v1897 = vlaneseq
        %v1898 = vshrl.u32 %v1897, 7
        %v1899 = vsub.s32 %v1896, %v1898
        %v1900 = vrot.slane %v1892, %v1899
        %v1902 = vunpack.c.l.s4 1934713408
        %v1903 = vunpack.c.0.s8 %v1902
        %v1904 = vlaneseq
        %v1905 = vshrl.u32 %v1904, 7
        %v1906 = vsub.s32 %v1903, %v1905
        %v1907 = vrot.slane %v1893, %v1906
        %v1908 = vcombine.high %v1884, 0.0
        %v1909 = vcombine.high %v1891, 0.0
        %v1910 = vcombine.high %v1900, 0.0
        %v1911 = vcombine.high %v1907, 0.0
        %v1912 = vcombine.low %v1884, %v1891
        %v1914 = vunpack.c.l.s4 1983009808
        %v1915 = vunpack.c.0.s8 %v1914
        %v1916 = vlaneseq
        %v1917 = vshrl.u32 %v1916, 7
        %v1918 = vsub.s32 %v1915, %v1917
        %v1919 = vrot.slane %v1912, %v1918
        %v1920 = vcombine.low %v1908, %v1909
        %v1922 = vunpack.c.l.s4 1983009808
        %v1923 = vunpack.c.0.s8 %v1922
        %v1924 = vlaneseq
        %v1925 = vshrl.u32 %v1924, 7
        %v1926 = vsub.s32 %v1923, %v1925
        %v1927 = vrot.slane %v1920, %v1926
        %v1928 = vcombine.low %v1900, %v1907
        %v1930 = vunpack.c.l.s4 1983009808
        %v1931 = vunpack.c.0.s8 %v1930
        %v1932 = vlaneseq
        %v1933 = vshrl.u32 %v1932, 7
        %v1934 = vsub.s32 %v1931, %v1933
        %v1935 = vrot.slane %v1928, %v1934
        %v1936 = vcombine.low %v1910, %v1911
        %v1938 = vunpack.c.l.s4 1983009808
        %v1939 = vunpack.c.0.s8 %v1938
        %v1940 = vlaneseq
        %v1941 = vshrl.u32 %v1940, 7
        %v1942 = vsub.s32 %v1939, %v1941
        %v1943 = vrot.slane %v1936, %v1942
        %v1944 = vcombine.low %v1919, %v1927
        %v1945 = vcombine.high %v1919, %v1927
        %v1947 = vunpack.c.l.s4 1934713408
        %v1948 = vunpack.c.0.s8 %v1947
        %v1949 = vlaneseq
        %v1950 = vshrl.u32 %v1949, 7
        %v1951 = vsub.s32 %v1948, %v1950
        %v1952 = vrot.slane %v1944, %v1951
        %v1954 = vunpack.c.l.s4 1934713408
        %v1955 = vunpack.c.0.s8 %v1954
        %v1956 = vlaneseq
        %v1957 = vshrl.u32 %v1956, 7
        %v1958 = vsub.s32 %v1955, %v1957
        %v1959 = vrot.slane %v1945, %v1958
        %v1960 = vcombine.low %v1935, %v1943
        %v1961 = vcombine.high %v1935, %v1943
        %v1963 = vunpack.c.l.s4 1934713408
        %v1964 = vunpack.c.0.s8 %v1963
        %v1965 = vlaneseq
        %v1966 = vshrl.u32 %v1965, 7
        %v1967 = vsub.s32 %v1964, %v1966
        %v1968 = vrot.slane %v1960, %v1967
        %v1970 = vunpack.c.l.s4 1934713408
        %v1971 = vunpack.c.0.s8 %v1970
        %v1972 = vlaneseq
        %v1973 = vshrl.u32 %v1972, 7
        %v1974 = vsub.s32 %v1971, %v1973
        %v1975 = vrot.slane %v1961, %v1974
        %v1976 = vcombine.low %v1952, %v1968
        %v1977 = vcombine.high %v1952, %v1968
        %v1978 = vcombine.low %v1959, %v1975
        %v1979 = vcombine.high %v1959, %v1975
        %1980 = vrot.lane.b32.xlu0 %v582, 96
        %v1981 = vpop.permute.xlu0 %1980
        %1982 = vrot.lane.b32.xlu0 %v1836, 96
        %v1983 = vpop.permute.xlu0 %1982
        %1984 = vrot.lane.b32.xlu0 %v1839, 96
        %v1985 = vpop.permute.xlu0 %1984
        %1986 = vrot.lane.b32.xlu0 %v1842, 96
        %v1987 = vpop.permute.xlu0 %1986
        %v1992 = vcombine.low %v1981, %v1985
        %v1993 = vcombine.high %v1981, %v1985
        %v1995 = vunpack.c.l.s4 1983009808
        %v1996 = vunpack.c.0.s8 %v1995
        %v1997 = vlaneseq
        %v1998 = vshrl.u32 %v1997, 7
        %v1999 = vsub.s32 %v1996, %v1998
        %v2000 = vrot.slane %v1992, %v1999
        %v2002 = vunpack.c.l.s4 1983009808
        %v2003 = vunpack.c.0.s8 %v2002
        %v2004 = vlaneseq
        %v2005 = vshrl.u32 %v2004, 7
        %v2006 = vsub.s32 %v2003, %v2005
        %v2007 = vrot.slane %v1993, %v2006
        %v2008 = vcombine.low %v1983, %v1987
        %v2009 = vcombine.high %v1983, %v1987
        %v2011 = vunpack.c.l.s4 1983009808
        %v2012 = vunpack.c.0.s8 %v2011
        %v2013 = vlaneseq
        %v2014 = vshrl.u32 %v2013, 7
        %v2015 = vsub.s32 %v2012, %v2014
        %v2016 = vrot.slane %v2008, %v2015
        %v2018 = vunpack.c.l.s4 1983009808
        %v2019 = vunpack.c.0.s8 %v2018
        %v2020 = vlaneseq
        %v2021 = vshrl.u32 %v2020, 7
        %v2022 = vsub.s32 %v2019, %v2021
        %v2023 = vrot.slane %v2009, %v2022
        %v2024 = vcombine.low %v2000, %v2016
        %v2025 = vcombine.high %v2000, %v2016
        %v2027 = vunpack.c.l.s4 1934713408
        %v2028 = vunpack.c.0.s8 %v2027
        %v2029 = vlaneseq
        %v2030 = vshrl.u32 %v2029, 7
        %v2031 = vsub.s32 %v2028, %v2030
        %v2032 = vrot.slane %v2024, %v2031
        %v2034 = vunpack.c.l.s4 1934713408
        %v2035 = vunpack.c.0.s8 %v2034
        %v2036 = vlaneseq
        %v2037 = vshrl.u32 %v2036, 7
        %v2038 = vsub.s32 %v2035, %v2037
        %v2039 = vrot.slane %v2025, %v2038
        %v2040 = vcombine.low %v2007, %v2023
        %v2041 = vcombine.high %v2007, %v2023
        %v2043 = vunpack.c.l.s4 1934713408
        %v2044 = vunpack.c.0.s8 %v2043
        %v2045 = vlaneseq
        %v2046 = vshrl.u32 %v2045, 7
        %v2047 = vsub.s32 %v2044, %v2046
        %v2048 = vrot.slane %v2040, %v2047
        %v2050 = vunpack.c.l.s4 1934713408
        %v2051 = vunpack.c.0.s8 %v2050
        %v2052 = vlaneseq
        %v2053 = vshrl.u32 %v2052, 7
        %v2054 = vsub.s32 %v2051, %v2053
        %v2055 = vrot.slane %v2041, %v2054
        %v2056 = vcombine.high %v2032, 0.0
        %v2057 = vcombine.high %v2039, 0.0
        %v2058 = vcombine.high %v2048, 0.0
        %v2059 = vcombine.high %v2055, 0.0
        %v2060 = vcombine.low %v2032, %v2039
        %v2062 = vunpack.c.l.s4 1983009808
        %v2063 = vunpack.c.0.s8 %v2062
        %v2064 = vlaneseq
        %v2065 = vshrl.u32 %v2064, 7
        %v2066 = vsub.s32 %v2063, %v2065
        %v2067 = vrot.slane %v2060, %v2066
        %v2068 = vcombine.low %v2056, %v2057
        %v2070 = vunpack.c.l.s4 1983009808
        %v2071 = vunpack.c.0.s8 %v2070
        %v2072 = vlaneseq
        %v2073 = vshrl.u32 %v2072, 7
        %v2074 = vsub.s32 %v2071, %v2073
        %v2075 = vrot.slane %v2068, %v2074
        %v2076 = vcombine.low %v2048, %v2055
        %v2078 = vunpack.c.l.s4 1983009808
        %v2079 = vunpack.c.0.s8 %v2078
        %v2080 = vlaneseq
        %v2081 = vshrl.u32 %v2080, 7
        %v2082 = vsub.s32 %v2079, %v2081
        %v2083 = vrot.slane %v2076, %v2082
        %v2084 = vcombine.low %v2058, %v2059
        %v2086 = vunpack.c.l.s4 1983009808
        %v2087 = vunpack.c.0.s8 %v2086
        %v2088 = vlaneseq
        %v2089 = vshrl.u32 %v2088, 7
        %v2090 = vsub.s32 %v2087, %v2089
        %v2091 = vrot.slane %v2084, %v2090
        %v2092 = vcombine.low %v2067, %v2075
        %v2093 = vcombine.high %v2067, %v2075
        %v2095 = vunpack.c.l.s4 1934713408
        %v2096 = vunpack.c.0.s8 %v2095
        %v2097 = vlaneseq
        %v2098 = vshrl.u32 %v2097, 7
        %v2099 = vsub.s32 %v2096, %v2098
        %v2100 = vrot.slane %v2092, %v2099
        %v2102 = vunpack.c.l.s4 1934713408
        %v2103 = vunpack.c.0.s8 %v2102
        %v2104 = vlaneseq
        %v2105 = vshrl.u32 %v2104, 7
        %v2106 = vsub.s32 %v2103, %v2105
        %v2107 = vrot.slane %v2093, %v2106
        %v2108 = vcombine.low %v2083, %v2091
        %v2109 = vcombine.high %v2083, %v2091
        %v2111 = vunpack.c.l.s4 1934713408
        %v2112 = vunpack.c.0.s8 %v2111
        %v2113 = vlaneseq
        %v2114 = vshrl.u32 %v2113, 7
        %v2115 = vsub.s32 %v2112, %v2114
        %v2116 = vrot.slane %v2108, %v2115
        %v2118 = vunpack.c.l.s4 1934713408
        %v2119 = vunpack.c.0.s8 %v2118
        %v2120 = vlaneseq
        %v2121 = vshrl.u32 %v2120, 7
        %v2122 = vsub.s32 %v2119, %v2121
        %v2123 = vrot.slane %v2109, %v2122
        %v2124 = vcombine.low %v2100, %v2116
        %v2125 = vcombine.high %v2100, %v2116
        %v2126 = vcombine.low %v2107, %v2123
        %v2127 = vcombine.high %v2107, %v2123
        %2128 = vrot.lane.b32.xlu0 %v582, 64
        %v2129 = vpop.permute.xlu0 %2128
        %2130 = vrot.lane.b32.xlu0 %v1836, 64
        %v2131 = vpop.permute.xlu0 %2130
        %2132 = vrot.lane.b32.xlu0 %v1839, 64
        %v2133 = vpop.permute.xlu0 %2132
        %2134 = vrot.lane.b32.xlu0 %v1842, 64
        %v2135 = vpop.permute.xlu0 %2134
        %v2140 = vcombine.low %v2129, %v2133
        %v2141 = vcombine.high %v2129, %v2133
        %v2143 = vunpack.c.l.s4 1983009808
        %v2144 = vunpack.c.0.s8 %v2143
        %v2145 = vlaneseq
        %v2146 = vshrl.u32 %v2145, 7
        %v2147 = vsub.s32 %v2144, %v2146
        %v2148 = vrot.slane %v2140, %v2147
        %v2150 = vunpack.c.l.s4 1983009808
        %v2151 = vunpack.c.0.s8 %v2150
        %v2152 = vlaneseq
        %v2153 = vshrl.u32 %v2152, 7
        %v2154 = vsub.s32 %v2151, %v2153
        %v2155 = vrot.slane %v2141, %v2154
        %v2156 = vcombine.low %v2131, %v2135
        %v2157 = vcombine.high %v2131, %v2135
        %v2159 = vunpack.c.l.s4 1983009808
        %v2160 = vunpack.c.0.s8 %v2159
        %v2161 = vlaneseq
        %v2162 = vshrl.u32 %v2161, 7
        %v2163 = vsub.s32 %v2160, %v2162
        %v2164 = vrot.slane %v2156, %v2163
        %v2166 = vunpack.c.l.s4 1983009808
        %v2167 = vunpack.c.0.s8 %v2166
        %v2168 = vlaneseq
        %v2169 = vshrl.u32 %v2168, 7
        %v2170 = vsub.s32 %v2167, %v2169
        %v2171 = vrot.slane %v2157, %v2170
        %v2172 = vcombine.low %v2148, %v2164
        %v2173 = vcombine.high %v2148, %v2164
        %v2175 = vunpack.c.l.s4 1934713408
        %v2176 = vunpack.c.0.s8 %v2175
        %v2177 = vlaneseq
        %v2178 = vshrl.u32 %v2177, 7
        %v2179 = vsub.s32 %v2176, %v2178
        %v2180 = vrot.slane %v2172, %v2179
        %v2182 = vunpack.c.l.s4 1934713408
        %v2183 = vunpack.c.0.s8 %v2182
        %v2184 = vlaneseq
        %v2185 = vshrl.u32 %v2184, 7
        %v2186 = vsub.s32 %v2183, %v2185
        %v2187 = vrot.slane %v2173, %v2186
        %v2188 = vcombine.low %v2155, %v2171
        %v2189 = vcombine.high %v2155, %v2171
        %v2191 = vunpack.c.l.s4 1934713408
        %v2192 = vunpack.c.0.s8 %v2191
        %v2193 = vlaneseq
        %v2194 = vshrl.u32 %v2193, 7
        %v2195 = vsub.s32 %v2192, %v2194
        %v2196 = vrot.slane %v2188, %v2195
        %v2198 = vunpack.c.l.s4 1934713408
        %v2199 = vunpack.c.0.s8 %v2198
        %v2200 = vlaneseq
        %v2201 = vshrl.u32 %v2200, 7
        %v2202 = vsub.s32 %v2199, %v2201
        %v2203 = vrot.slane %v2189, %v2202
        %v2204 = vcombine.high %v2180, 0.0
        %v2205 = vcombine.high %v2187, 0.0
        %v2206 = vcombine.high %v2196, 0.0
        %v2207 = vcombine.high %v2203, 0.0
        %v2208 = vcombine.low %v2180, %v2187
        %v2210 = vunpack.c.l.s4 1983009808
        %v2211 = vunpack.c.0.s8 %v2210
        %v2212 = vlaneseq
        %v2213 = vshrl.u32 %v2212, 7
        %v2214 = vsub.s32 %v2211, %v2213
        %v2215 = vrot.slane %v2208, %v2214
        %v2216 = vcombine.low %v2204, %v2205
        %v2218 = vunpack.c.l.s4 1983009808
        %v2219 = vunpack.c.0.s8 %v2218
        %v2220 = vlaneseq
        %v2221 = vshrl.u32 %v2220, 7
        %v2222 = vsub.s32 %v2219, %v2221
        %v2223 = vrot.slane %v2216, %v2222
        %v2224 = vcombine.low %v2196, %v2203
        %v2226 = vunpack.c.l.s4 1983009808
        %v2227 = vunpack.c.0.s8 %v2226
        %v2228 = vlaneseq
        %v2229 = vshrl.u32 %v2228, 7
        %v2230 = vsub.s32 %v2227, %v2229
        %v2231 = vrot.slane %v2224, %v2230
        %v2232 = vcombine.low %v2206, %v2207
        %v2234 = vunpack.c.l.s4 1983009808
        %v2235 = vunpack.c.0.s8 %v2234
        %v2236 = vlaneseq
        %v2237 = vshrl.u32 %v2236, 7
        %v2238 = vsub.s32 %v2235, %v2237
        %v2239 = vrot.slane %v2232, %v2238
        %v2240 = vcombine.low %v2215, %v2223
        %v2241 = vcombine.high %v2215, %v2223
        %v2243 = vunpack.c.l.s4 1934713408
        %v2244 = vunpack.c.0.s8 %v2243
        %v2245 = vlaneseq
        %v2246 = vshrl.u32 %v2245, 7
        %v2247 = vsub.s32 %v2244, %v2246
        %v2248 = vrot.slane %v2240, %v2247
        %v2250 = vunpack.c.l.s4 1934713408
        %v2251 = vunpack.c.0.s8 %v2250
        %v2252 = vlaneseq
        %v2253 = vshrl.u32 %v2252, 7
        %v2254 = vsub.s32 %v2251, %v2253
        %v2255 = vrot.slane %v2241, %v2254
        %v2256 = vcombine.low %v2231, %v2239
        %v2257 = vcombine.high %v2231, %v2239
        %v2259 = vunpack.c.l.s4 1934713408
        %v2260 = vunpack.c.0.s8 %v2259
        %v2261 = vlaneseq
        %v2262 = vshrl.u32 %v2261, 7
        %v2263 = vsub.s32 %v2260, %v2262
        %v2264 = vrot.slane %v2256, %v2263
        %v2266 = vunpack.c.l.s4 1934713408
        %v2267 = vunpack.c.0.s8 %v2266
        %v2268 = vlaneseq
        %v2269 = vshrl.u32 %v2268, 7
        %v2270 = vsub.s32 %v2267, %v2269
        %v2271 = vrot.slane %v2257, %v2270
        %v2272 = vcombine.low %v2248, %v2264
        %v2273 = vcombine.high %v2248, %v2264
        %v2274 = vcombine.low %v2255, %v2271
        %v2275 = vcombine.high %v2255, %v2271
        %v2277 = vsel %vm1028, %v1976, 0
        %v2280 = vsel %vm1028, %v2124, 0
        %2282 = vmatprep.subr.mxu0 0.0
        %2283 = vmatpush1.xpose.msra.mxu0 0.0
        %2284 = vmatprep.subr.mxu0 0.0
        %2285 = vmatpush1.xpose.msra.mxu0 0.0
        %2286 = vmatprep.subr.mxu0 0.0
        %2287 = vmatpush1.xpose.msra.mxu0 0.0
        %2288 = vmatprep.subr.mxu0 0.0
        %2289 = vmatpush1.xpose.msra.mxu0 0.0
        %2290 = vmatprep.subr.mxu0 0.0
        %2291 = vmatpush1.xpose.msra.mxu0 0.0
        %2292 = vmatprep.subr.mxu0 0.0
        %2293 = vmatpush1.xpose.msra.mxu0 0.0
        %2294 = vmatprep.subr.mxu0 0.0
        %2295 = vmatpush1.xpose.msra.mxu0 0.0
        %2296 = vmatprep.subr.mxu0 0.0
        %2297 = vmatpush1.xpose.msra.mxu0 0.0
        %2298 = vmatprep.subr.mxu0 0.0
        %2299 = vmatpush1.xpose.msra.mxu0 0.0
        %2300 = vmatprep.subr.mxu0 0.0
        %2301 = vmatpush1.xpose.msra.mxu0 0.0
        %2302 = vmatprep.subr.mxu0 0.0
        %2303 = vmatpush1.xpose.msra.mxu0 0.0
        %2304 = vmatprep.subr.mxu0 0.0
        %2305 = vmatpush1.xpose.msra.mxu0 0.0
        %2306 = vmatprep.subr.mxu0 0.0
        %2307 = vmatpush1.xpose.msra.mxu0 0.0
        %2308 = vmatprep.subr.mxu0 0.0
        %2309 = vmatpush1.xpose.msra.mxu0 0.0
        %2310 = vmatprep.subr.mxu0 0.0
        %2311 = vmatpush1.xpose.msra.mxu0 0.0
        %2312 = vmatprep.subr.mxu0 0.0
        %2313 = vmatpush1.xpose.msra.mxu0 %v2280
        %2314 = vmatprep.subr.mxu0 0.0
        %2315 = vmatpush2.xpose.msra.mxu0 0.0
        %2316 = vmatprep.subr.mxu0 0.0
        %2317 = vmatpush2.xpose.msra.mxu0 0.0
        %2318 = vmatprep.subr.mxu0 0.0
        %2319 = vmatpush2.xpose.msra.mxu0 0.0
        %2320 = vmatprep.subr.mxu0 0.0
        %2321 = vmatpush2.xpose.msra.mxu0 0.0
        %2322 = vmatprep.subr.mxu0 0.0
        %2323 = vmatpush2.xpose.msra.mxu0 0.0
        %2324 = vmatprep.subr.mxu0 0.0
        %2325 = vmatpush2.xpose.msra.mxu0 0.0
        %2326 = vmatprep.subr.mxu0 0.0
        %2327 = vmatpush2.xpose.msra.mxu0 0.0
        %2328 = vmatprep.subr.mxu0 0.0
        %2329 = vmatpush2.xpose.msra.mxu0 0.0
        %2330 = vmatprep.subr.mxu0 0.0
        %2331 = vmatpush2.xpose.msra.mxu0 0.0
        %2332 = vmatprep.subr.mxu0 0.0
        %2333 = vmatpush2.xpose.msra.mxu0 0.0
        %2334 = vmatprep.subr.mxu0 0.0
        %2335 = vmatpush2.xpose.msra.mxu0 0.0
        %2336 = vmatprep.subr.mxu0 0.0
        %2337 = vmatpush2.xpose.msra.mxu0 0.0
        %2338 = vmatprep.subr.mxu0 0.0
        %2339 = vmatpush2.xpose.msra.mxu0 0.0
        %2340 = vmatprep.subr.mxu0 0.0
        %2341 = vmatpush2.xpose.msra.mxu0 0.0
        %2342 = vmatprep.subr.mxu0 0.0
        %2343 = vmatpush2.xpose.msra.mxu0 0.0
        %2344 = vmatprep.subr.mxu0 0.0
        %2345 = vmatpush2.xpose.msra.mxu0 0.0
        %2346 = vmatprep.mubr.f32.mxu0 0.0
        %2347 = vmatmul.mubr.f32.gmra.mxu0 %v2277
        %v2348 = vpop.f32.mrf.mxu0
        %v2349 = vadd.f32 0.0, %v2348
        %v2350 = vpop.f32.mrf.mxu0
        %2351 = vdwg.mxu0
        %v2353 = vsel %vm1028, %v1977, 0
        %v2356 = vsel %vm1028, %v2125, 0
        %2358 = vmatprep.subr.mxu0 0.0
        %2359 = vmatpush1.xpose.msra.mxu0 0.0
        %2360 = vmatprep.subr.mxu0 0.0
        %2361 = vmatpush1.xpose.msra.mxu0 0.0
        %2362 = vmatprep.subr.mxu0 0.0
        %2363 = vmatpush1.xpose.msra.mxu0 0.0
        %2364 = vmatprep.subr.mxu0 0.0
        %2365 = vmatpush1.xpose.msra.mxu0 0.0
        %2366 = vmatprep.subr.mxu0 0.0
        %2367 = vmatpush1.xpose.msra.mxu0 0.0
        %2368 = vmatprep.subr.mxu0 0.0
        %2369 = vmatpush1.xpose.msra.mxu0 0.0
        %2370 = vmatprep.subr.mxu0 0.0
        %2371 = vmatpush1.xpose.msra.mxu0 0.0
        %2372 = vmatprep.subr.mxu0 0.0
        %2373 = vmatpush1.xpose.msra.mxu0 0.0
        %2374 = vmatprep.subr.mxu0 0.0
        %2375 = vmatpush1.xpose.msra.mxu0 0.0
        %2376 = vmatprep.subr.mxu0 0.0
        %2377 = vmatpush1.xpose.msra.mxu0 0.0
        %2378 = vmatprep.subr.mxu0 0.0
        %2379 = vmatpush1.xpose.msra.mxu0 0.0
        %2380 = vmatprep.subr.mxu0 0.0
        %2381 = vmatpush1.xpose.msra.mxu0 0.0
        %2382 = vmatprep.subr.mxu0 0.0
        %2383 = vmatpush1.xpose.msra.mxu0 0.0
        %2384 = vmatprep.subr.mxu0 0.0
        %2385 = vmatpush1.xpose.msra.mxu0 0.0
        %2386 = vmatprep.subr.mxu0 0.0
        %2387 = vmatpush1.xpose.msra.mxu0 0.0
        %2388 = vmatprep.subr.mxu0 0.0
        %2389 = vmatpush1.xpose.msra.mxu0 %v2356
        %2390 = vmatprep.subr.mxu0 0.0
        %2391 = vmatpush2.xpose.msra.mxu0 0.0
        %2392 = vmatprep.subr.mxu0 0.0
        %2393 = vmatpush2.xpose.msra.mxu0 0.0
        %2394 = vmatprep.subr.mxu0 0.0
        %2395 = vmatpush2.xpose.msra.mxu0 0.0
        %2396 = vmatprep.subr.mxu0 0.0
        %2397 = vmatpush2.xpose.msra.mxu0 0.0
        %2398 = vmatprep.subr.mxu0 0.0
        %2399 = vmatpush2.xpose.msra.mxu0 0.0
        %2400 = vmatprep.subr.mxu0 0.0
        %2401 = vmatpush2.xpose.msra.mxu0 0.0
        %2402 = vmatprep.subr.mxu0 0.0
        %2403 = vmatpush2.xpose.msra.mxu0 0.0
        %2404 = vmatprep.subr.mxu0 0.0
        %2405 = vmatpush2.xpose.msra.mxu0 0.0
        %2406 = vmatprep.subr.mxu0 0.0
        %2407 = vmatpush2.xpose.msra.mxu0 0.0
        %2408 = vmatprep.subr.mxu0 0.0
        %2409 = vmatpush2.xpose.msra.mxu0 0.0
        %2410 = vmatprep.subr.mxu0 0.0
        %2411 = vmatpush2.xpose.msra.mxu0 0.0
        %2412 = vmatprep.subr.mxu0 0.0
        %2413 = vmatpush2.xpose.msra.mxu0 0.0
        %2414 = vmatprep.subr.mxu0 0.0
        %2415 = vmatpush2.xpose.msra.mxu0 0.0
        %2416 = vmatprep.subr.mxu0 0.0
        %2417 = vmatpush2.xpose.msra.mxu0 0.0
        %2418 = vmatprep.subr.mxu0 0.0
        %2419 = vmatpush2.xpose.msra.mxu0 0.0
        %2420 = vmatprep.subr.mxu0 0.0
        %2421 = vmatpush2.xpose.msra.mxu0 0.0
        %2422 = vmatprep.mubr.f32.mxu0 0.0
        %2423 = vmatmul.mubr.f32.gmra.mxu0 %v2353
        %v2424 = vpop.f32.mrf.mxu0
        %v2425 = vadd.f32 0.0, %v2424
        %v2426 = vpop.f32.mrf.mxu0
        %2427 = vdwg.mxu0
        %v2429 = vsel %vm1028, %v1978, 0
        %v2432 = vsel %vm1028, %v2126, 0
        %2434 = vmatprep.subr.mxu0 0.0
        %2435 = vmatpush1.xpose.msra.mxu0 0.0
        %2436 = vmatprep.subr.mxu0 0.0
        %2437 = vmatpush1.xpose.msra.mxu0 0.0
        %2438 = vmatprep.subr.mxu0 0.0
        %2439 = vmatpush1.xpose.msra.mxu0 0.0
        %2440 = vmatprep.subr.mxu0 0.0
        %2441 = vmatpush1.xpose.msra.mxu0 0.0
        %2442 = vmatprep.subr.mxu0 0.0
        %2443 = vmatpush1.xpose.msra.mxu0 0.0
        %2444 = vmatprep.subr.mxu0 0.0
        %2445 = vmatpush1.xpose.msra.mxu0 0.0
        %2446 = vmatprep.subr.mxu0 0.0
        %2447 = vmatpush1.xpose.msra.mxu0 0.0
        %2448 = vmatprep.subr.mxu0 0.0
        %2449 = vmatpush1.xpose.msra.mxu0 0.0
        %2450 = vmatprep.subr.mxu0 0.0
        %2451 = vmatpush1.xpose.msra.mxu0 0.0
        %2452 = vmatprep.subr.mxu0 0.0
        %2453 = vmatpush1.xpose.msra.mxu0 0.0
        %2454 = vmatprep.subr.mxu0 0.0
        %2455 = vmatpush1.xpose.msra.mxu0 0.0
        %2456 = vmatprep.subr.mxu0 0.0
        %2457 = vmatpush1.xpose.msra.mxu0 0.0
        %2458 = vmatprep.subr.mxu0 0.0
        %2459 = vmatpush1.xpose.msra.mxu0 0.0
        %2460 = vmatprep.subr.mxu0 0.0
        %2461 = vmatpush1.xpose.msra.mxu0 0.0
        %2462 = vmatprep.subr.mxu0 0.0
        %2463 = vmatpush1.xpose.msra.mxu0 0.0
        %2464 = vmatprep.subr.mxu0 0.0
        %2465 = vmatpush1.xpose.msra.mxu0 %v2432
        %2466 = vmatprep.subr.mxu0 0.0
        %2467 = vmatpush2.xpose.msra.mxu0 0.0
        %2468 = vmatprep.subr.mxu0 0.0
        %2469 = vmatpush2.xpose.msra.mxu0 0.0
        %2470 = vmatprep.subr.mxu0 0.0
        %2471 = vmatpush2.xpose.msra.mxu0 0.0
        %2472 = vmatprep.subr.mxu0 0.0
        %2473 = vmatpush2.xpose.msra.mxu0 0.0
        %2474 = vmatprep.subr.mxu0 0.0
        %2475 = vmatpush2.xpose.msra.mxu0 0.0
        %2476 = vmatprep.subr.mxu0 0.0
        %2477 = vmatpush2.xpose.msra.mxu0 0.0
        %2478 = vmatprep.subr.mxu0 0.0
        %2479 = vmatpush2.xpose.msra.mxu0 0.0
        %2480 = vmatprep.subr.mxu0 0.0
        %2481 = vmatpush2.xpose.msra.mxu0 0.0
        %2482 = vmatprep.subr.mxu0 0.0
        %2483 = vmatpush2.xpose.msra.mxu0 0.0
        %2484 = vmatprep.subr.mxu0 0.0
        %2485 = vmatpush2.xpose.msra.mxu0 0.0
        %2486 = vmatprep.subr.mxu0 0.0
        %2487 = vmatpush2.xpose.msra.mxu0 0.0
        %2488 = vmatprep.subr.mxu0 0.0
        %2489 = vmatpush2.xpose.msra.mxu0 0.0
        %2490 = vmatprep.subr.mxu0 0.0
        %2491 = vmatpush2.xpose.msra.mxu0 0.0
        %2492 = vmatprep.subr.mxu0 0.0
        %2493 = vmatpush2.xpose.msra.mxu0 0.0
        %2494 = vmatprep.subr.mxu0 0.0
        %2495 = vmatpush2.xpose.msra.mxu0 0.0
        %2496 = vmatprep.subr.mxu0 0.0
        %2497 = vmatpush2.xpose.msra.mxu0 0.0
        %2498 = vmatprep.mubr.f32.mxu0 0.0
        %2499 = vmatmul.mubr.f32.gmra.mxu0 %v2429
        %v2500 = vpop.f32.mrf.mxu0
        %v2501 = vadd.f32 0.0, %v2500
        %v2502 = vpop.f32.mrf.mxu0
        %2503 = vdwg.mxu0
        %v2505 = vsel %vm1028, %v1979, 0
        %v2508 = vsel %vm1028, %v2127, 0
        %2510 = vmatprep.subr.mxu0 0.0
        %2511 = vmatpush1.xpose.msra.mxu0 0.0
        %2512 = vmatprep.subr.mxu0 0.0
        %2513 = vmatpush1.xpose.msra.mxu0 0.0
        %2514 = vmatprep.subr.mxu0 0.0
        %2515 = vmatpush1.xpose.msra.mxu0 0.0
        %2516 = vmatprep.subr.mxu0 0.0
        %2517 = vmatpush1.xpose.msra.mxu0 0.0
        %2518 = vmatprep.subr.mxu0 0.0
        %2519 = vmatpush1.xpose.msra.mxu0 0.0
        %2520 = vmatprep.subr.mxu0 0.0
        %2521 = vmatpush1.xpose.msra.mxu0 0.0
        %2522 = vmatprep.subr.mxu0 0.0
        %2523 = vmatpush1.xpose.msra.mxu0 0.0
        %2524 = vmatprep.subr.mxu0 0.0
        %2525 = vmatpush1.xpose.msra.mxu0 0.0
        %2526 = vmatprep.subr.mxu0 0.0
        %2527 = vmatpush1.xpose.msra.mxu0 0.0
        %2528 = vmatprep.subr.mxu0 0.0
        %2529 = vmatpush1.xpose.msra.mxu0 0.0
        %2530 = vmatprep.subr.mxu0 0.0
        %2531 = vmatpush1.xpose.msra.mxu0 0.0
        %2532 = vmatprep.subr.mxu0 0.0
        %2533 = vmatpush1.xpose.msra.mxu0 0.0
        %2534 = vmatprep.subr.mxu0 0.0
        %2535 = vmatpush1.xpose.msra.mxu0 0.0
        %2536 = vmatprep.subr.mxu0 0.0
        %2537 = vmatpush1.xpose.msra.mxu0 0.0
        %2538 = vmatprep.subr.mxu0 0.0
        %2539 = vmatpush1.xpose.msra.mxu0 0.0
        %2540 = vmatprep.subr.mxu0 0.0
        %2541 = vmatpush1.xpose.msra.mxu0 %v2508
        %2542 = vmatprep.subr.mxu0 0.0
        %2543 = vmatpush2.xpose.msra.mxu0 0.0
        %2544 = vmatprep.subr.mxu0 0.0
        %2545 = vmatpush2.xpose.msra.mxu0 0.0
        %2546 = vmatprep.subr.mxu0 0.0
        %2547 = vmatpush2.xpose.msra.mxu0 0.0
        %2548 = vmatprep.subr.mxu0 0.0
        %2549 = vmatpush2.xpose.msra.mxu0 0.0
        %2550 = vmatprep.subr.mxu0 0.0
        %2551 = vmatpush2.xpose.msra.mxu0 0.0
        %2552 = vmatprep.subr.mxu0 0.0
        %2553 = vmatpush2.xpose.msra.mxu0 0.0
        %2554 = vmatprep.subr.mxu0 0.0
        %2555 = vmatpush2.xpose.msra.mxu0 0.0
        %2556 = vmatprep.subr.mxu0 0.0
        %2557 = vmatpush2.xpose.msra.mxu0 0.0
        %2558 = vmatprep.subr.mxu0 0.0
        %2559 = vmatpush2.xpose.msra.mxu0 0.0
        %2560 = vmatprep.subr.mxu0 0.0
        %2561 = vmatpush2.xpose.msra.mxu0 0.0
        %2562 = vmatprep.subr.mxu0 0.0
        %2563 = vmatpush2.xpose.msra.mxu0 0.0
        %2564 = vmatprep.subr.mxu0 0.0
        %2565 = vmatpush2.xpose.msra.mxu0 0.0
        %2566 = vmatprep.subr.mxu0 0.0
        %2567 = vmatpush2.xpose.msra.mxu0 0.0
        %2568 = vmatprep.subr.mxu0 0.0
        %2569 = vmatpush2.xpose.msra.mxu0 0.0
        %2570 = vmatprep.subr.mxu0 0.0
        %2571 = vmatpush2.xpose.msra.mxu0 0.0
        %2572 = vmatprep.subr.mxu0 0.0
        %2573 = vmatpush2.xpose.msra.mxu0 0.0
        %2574 = vmatprep.mubr.f32.mxu0 0.0
        %2575 = vmatmul.mubr.f32.gmra.mxu0 %v2505
        %v2576 = vpop.f32.mrf.mxu0
        %v2577 = vadd.f32 0.0, %v2576
        %v2578 = vpop.f32.mrf.mxu0
        %2579 = vdwg.mxu0
        %v2580 = vmul.f32 %v2349, 0.35355338
        %v2581 = vmul.f32 %v2425, 0.35355338
        %v2582 = vmul.f32 %v2501, 0.35355338
        %v2583 = vmul.f32 %v2577, 0.35355338
        %v2584 = vlaneseq
        %v2585 = vshrl.u32 %v2584, 7
        %v2586 = vsub.s32 1, %v2585
        %v2587 = vrot.slane %v585, %v2586
        %v2588 = vadd.f32 %v2580, %v2587
        %v2589 = vadd.f32 %v2581, %v2587
        %v2590 = vadd.f32 %v2582, %v2587
        %v2591 = vadd.f32 %v2583, %v2587
        %v2592 = vsel %vm1028, %v2588, -inf
        %2593 = vmax.xlane.f32.xlu0 %v2592
        %v2594 = vpop.xlane.xlu0 %2593
        %v2595 = vsel %vm1028, %v2589, -inf
        %2596 = vmax.xlane.f32.xlu0 %v2595
        %v2597 = vpop.xlane.xlu0 %2596
        %v2598 = vsel %vm1028, %v2590, -inf
        %2599 = vmax.xlane.f32.xlu0 %v2598
        %v2600 = vpop.xlane.xlu0 %2599
        %v2601 = vsel %vm1028, %v2591, -inf
        %2602 = vmax.xlane.f32.xlu0 %v2601
        %v2603 = vpop.xlane.xlu0 %2602
        %v2604 = vsub.f32 %v2588, %v2594
        %v2605 = vsub.f32 %v2589, %v2597
        %v2606 = vsub.f32 %v2590, %v2600
        %v2607 = vsub.f32 %v2591, %v2603
        %v2608 = vmul.f32 %v2604, 1.442695
        %v2609 = vpow.pop %v2608
        %v2610 = vmul.f32 %v2605, 1.442695
        %v2611 = vpow.pop %v2610
        %v2612 = vmul.f32 %v2606, 1.442695
        %v2613 = vpow.pop %v2612
        %v2614 = vmul.f32 %v2607, 1.442695
        %v2615 = vpow.pop %v2614
        %v2616 = vsel %vm1028, %v2609, 0.0
        %2617 = vadd.xlane.f32.xlu0 %v2616
        %v2618 = vpop.xlane.xlu0 %2617
        %v2619 = vsel %vm1028, %v2611, 0.0
        %2620 = vadd.xlane.f32.xlu0 %v2619
        %v2621 = vpop.xlane.xlu0 %2620
        %v2622 = vsel %vm1028, %v2613, 0.0
        %2623 = vadd.xlane.f32.xlu0 %v2622
        %v2624 = vpop.xlane.xlu0 %2623
        %v2625 = vsel %vm1028, %v2615, 0.0
        %2626 = vadd.xlane.f32.xlu0 %v2625
        %v2627 = vpop.xlane.xlu0 %2626
        %v2628 = vrcp.pop %v2618
        %v2629 = vmul.f32 %v2609, %v2628
        %v2630 = vrcp.pop %v2621
        %v2631 = vmul.f32 %v2611, %v2630
        %v2632 = vrcp.pop %v2624
        %v2633 = vmul.f32 %v2613, %v2632
        %v2634 = vrcp.pop %v2627
        %v2635 = vmul.f32 %v2615, %v2634
        %v2637 = vsel %vm1028, %v2629, 0
        %2639 = vmatprep.subr.mxu0 0.0
        %2640 = vmatpush1.msra.mxu0 0.0
        %2641 = vmatprep.subr.mxu0 0.0
        %2642 = vmatpush1.msra.mxu0 0.0
        %2643 = vmatprep.subr.mxu0 0.0
        %2644 = vmatpush1.msra.mxu0 0.0
        %2645 = vmatprep.subr.mxu0 0.0
        %2646 = vmatpush1.msra.mxu0 0.0
        %2647 = vmatprep.subr.mxu0 0.0
        %2648 = vmatpush1.msra.mxu0 0.0
        %2649 = vmatprep.subr.mxu0 0.0
        %2650 = vmatpush1.msra.mxu0 0.0
        %2651 = vmatprep.subr.mxu0 0.0
        %2652 = vmatpush1.msra.mxu0 0.0
        %2653 = vmatprep.subr.mxu0 0.0
        %2654 = vmatpush1.msra.mxu0 0.0
        %2655 = vmatprep.subr.mxu0 0.0
        %2656 = vmatpush1.msra.mxu0 0.0
        %2657 = vmatprep.subr.mxu0 0.0
        %2658 = vmatpush1.msra.mxu0 0.0
        %2659 = vmatprep.subr.mxu0 0.0
        %2660 = vmatpush1.msra.mxu0 0.0
        %2661 = vmatprep.subr.mxu0 0.0
        %2662 = vmatpush1.msra.mxu0 0.0
        %2663 = vmatprep.subr.mxu0 0.0
        %2664 = vmatpush1.msra.mxu0 0.0
        %2665 = vmatprep.subr.mxu0 0.0
        %2666 = vmatpush1.msra.mxu0 0.0
        %2667 = vmatprep.subr.mxu0 0.0
        %2668 = vmatpush1.msra.mxu0 0.0
        %2669 = vmatprep.subr.mxu0 0.0
        %2670 = vmatpush1.msra.mxu0 %v2272
        %2671 = vmatprep.subr.mxu0 0.0
        %2672 = vmatpush2.msra.mxu0 0.0
        %2673 = vmatprep.subr.mxu0 0.0
        %2674 = vmatpush2.msra.mxu0 0.0
        %2675 = vmatprep.subr.mxu0 0.0
        %2676 = vmatpush2.msra.mxu0 0.0
        %2677 = vmatprep.subr.mxu0 0.0
        %2678 = vmatpush2.msra.mxu0 0.0
        %2679 = vmatprep.subr.mxu0 0.0
        %2680 = vmatpush2.msra.mxu0 0.0
        %2681 = vmatprep.subr.mxu0 0.0
        %2682 = vmatpush2.msra.mxu0 0.0
        %2683 = vmatprep.subr.mxu0 0.0
        %2684 = vmatpush2.msra.mxu0 0.0
        %2685 = vmatprep.subr.mxu0 0.0
        %2686 = vmatpush2.msra.mxu0 0.0
        %2687 = vmatprep.subr.mxu0 0.0
        %2688 = vmatpush2.msra.mxu0 0.0
        %2689 = vmatprep.subr.mxu0 0.0
        %2690 = vmatpush2.msra.mxu0 0.0
        %2691 = vmatprep.subr.mxu0 0.0
        %2692 = vmatpush2.msra.mxu0 0.0
        %2693 = vmatprep.subr.mxu0 0.0
        %2694 = vmatpush2.msra.mxu0 0.0
        %2695 = vmatprep.subr.mxu0 0.0
        %2696 = vmatpush2.msra.mxu0 0.0
        %2697 = vmatprep.subr.mxu0 0.0
        %2698 = vmatpush2.msra.mxu0 0.0
        %2699 = vmatprep.subr.mxu0 0.0
        %2700 = vmatpush2.msra.mxu0 0.0
        %2701 = vmatprep.subr.mxu0 0.0
        %2702 = vmatpush2.msra.mxu0 0.0
        %2703 = vmatprep.mubr.f32.mxu0 0.0
        %2704 = vmatmul.mubr.f32.gmra.mxu0 %v2637
        %v2705 = vpop.f32.mrf.mxu0
        %v2706 = vadd.f32 0.0, %v2705
        %v2707 = vpop.f32.mrf.mxu0
        %2708 = vdwg.mxu0
        %v2710 = vsel %vm1028, %v2631, 0
        %2712 = vmatprep.subr.mxu0 0.0
        %2713 = vmatpush1.msra.mxu0 0.0
        %2714 = vmatprep.subr.mxu0 0.0
        %2715 = vmatpush1.msra.mxu0 0.0
        %2716 = vmatprep.subr.mxu0 0.0
        %2717 = vmatpush1.msra.mxu0 0.0
        %2718 = vmatprep.subr.mxu0 0.0
        %2719 = vmatpush1.msra.mxu0 0.0
        %2720 = vmatprep.subr.mxu0 0.0
        %2721 = vmatpush1.msra.mxu0 0.0
        %2722 = vmatprep.subr.mxu0 0.0
        %2723 = vmatpush1.msra.mxu0 0.0
        %2724 = vmatprep.subr.mxu0 0.0
        %2725 = vmatpush1.msra.mxu0 0.0
        %2726 = vmatprep.subr.mxu0 0.0
        %2727 = vmatpush1.msra.mxu0 0.0
        %2728 = vmatprep.subr.mxu0 0.0
        %2729 = vmatpush1.msra.mxu0 0.0
        %2730 = vmatprep.subr.mxu0 0.0
        %2731 = vmatpush1.msra.mxu0 0.0
        %2732 = vmatprep.subr.mxu0 0.0
        %2733 = vmatpush1.msra.mxu0 0.0
        %2734 = vmatprep.subr.mxu0 0.0
        %2735 = vmatpush1.msra.mxu0 0.0
        %2736 = vmatprep.subr.mxu0 0.0
        %2737 = vmatpush1.msra.mxu0 0.0
        %2738 = vmatprep.subr.mxu0 0.0
        %2739 = vmatpush1.msra.mxu0 0.0
        %2740 = vmatprep.subr.mxu0 0.0
        %2741 = vmatpush1.msra.mxu0 0.0
        %2742 = vmatprep.subr.mxu0 0.0
        %2743 = vmatpush1.msra.mxu0 %v2273
        %2744 = vmatprep.subr.mxu0 0.0
        %2745 = vmatpush2.msra.mxu0 0.0
        %2746 = vmatprep.subr.mxu0 0.0
        %2747 = vmatpush2.msra.mxu0 0.0
        %2748 = vmatprep.subr.mxu0 0.0
        %2749 = vmatpush2.msra.mxu0 0.0
        %2750 = vmatprep.subr.mxu0 0.0
        %2751 = vmatpush2.msra.mxu0 0.0
        %2752 = vmatprep.subr.mxu0 0.0
        %2753 = vmatpush2.msra.mxu0 0.0
        %2754 = vmatprep.subr.mxu0 0.0
        %2755 = vmatpush2.msra.mxu0 0.0
        %2756 = vmatprep.subr.mxu0 0.0
        %2757 = vmatpush2.msra.mxu0 0.0
        %2758 = vmatprep.subr.mxu0 0.0
        %2759 = vmatpush2.msra.mxu0 0.0
        %2760 = vmatprep.subr.mxu0 0.0
        %2761 = vmatpush2.msra.mxu0 0.0
        %2762 = vmatprep.subr.mxu0 0.0
        %2763 = vmatpush2.msra.mxu0 0.0
        %2764 = vmatprep.subr.mxu0 0.0
        %2765 = vmatpush2.msra.mxu0 0.0
        %2766 = vmatprep.subr.mxu0 0.0
        %2767 = vmatpush2.msra.mxu0 0.0
        %2768 = vmatprep.subr.mxu0 0.0
        %2769 = vmatpush2.msra.mxu0 0.0
        %2770 = vmatprep.subr.mxu0 0.0
        %2771 = vmatpush2.msra.mxu0 0.0
        %2772 = vmatprep.subr.mxu0 0.0
        %2773 = vmatpush2.msra.mxu0 0.0
        %2774 = vmatprep.subr.mxu0 0.0
        %2775 = vmatpush2.msra.mxu0 0.0
        %2776 = vmatprep.mubr.f32.mxu0 0.0
        %2777 = vmatmul.mubr.f32.gmra.mxu0 %v2710
        %v2778 = vpop.f32.mrf.mxu0
        %v2779 = vadd.f32 0.0, %v2778
        %v2780 = vpop.f32.mrf.mxu0
        %2781 = vdwg.mxu0
        %v2783 = vsel %vm1028, %v2633, 0
        %2785 = vmatprep.subr.mxu0 0.0
        %2786 = vmatpush1.msra.mxu0 0.0
        %2787 = vmatprep.subr.mxu0 0.0
        %2788 = vmatpush1.msra.mxu0 0.0
        %2789 = vmatprep.subr.mxu0 0.0
        %2790 = vmatpush1.msra.mxu0 0.0
        %2791 = vmatprep.subr.mxu0 0.0
        %2792 = vmatpush1.msra.mxu0 0.0
        %2793 = vmatprep.subr.mxu0 0.0
        %2794 = vmatpush1.msra.mxu0 0.0
        %2795 = vmatprep.subr.mxu0 0.0
        %2796 = vmatpush1.msra.mxu0 0.0
        %2797 = vmatprep.subr.mxu0 0.0
        %2798 = vmatpush1.msra.mxu0 0.0
        %2799 = vmatprep.subr.mxu0 0.0
        %2800 = vmatpush1.msra.mxu0 0.0
        %2801 = vmatprep.subr.mxu0 0.0
        %2802 = vmatpush1.msra.mxu0 0.0
        %2803 = vmatprep.subr.mxu0 0.0
        %2804 = vmatpush1.msra.mxu0 0.0
        %2805 = vmatprep.subr.mxu0 0.0
        %2806 = vmatpush1.msra.mxu0 0.0
        %2807 = vmatprep.subr.mxu0 0.0
        %2808 = vmatpush1.msra.mxu0 0.0
        %2809 = vmatprep.subr.mxu0 0.0
        %2810 = vmatpush1.msra.mxu0 0.0
        %2811 = vmatprep.subr.mxu0 0.0
        %2812 = vmatpush1.msra.mxu0 0.0
        %2813 = vmatprep.subr.mxu0 0.0
        %2814 = vmatpush1.msra.mxu0 0.0
        %2815 = vmatprep.subr.mxu0 0.0
        %2816 = vmatpush1.msra.mxu0 %v2274
        %2817 = vmatprep.subr.mxu0 0.0
        %2818 = vmatpush2.msra.mxu0 0.0
        %2819 = vmatprep.subr.mxu0 0.0
        %2820 = vmatpush2.msra.mxu0 0.0
        %2821 = vmatprep.subr.mxu0 0.0
        %2822 = vmatpush2.msra.mxu0 0.0
        %2823 = vmatprep.subr.mxu0 0.0
        %2824 = vmatpush2.msra.mxu0 0.0
        %2825 = vmatprep.subr.mxu0 0.0
        %2826 = vmatpush2.msra.mxu0 0.0
        %2827 = vmatprep.subr.mxu0 0.0
        %2828 = vmatpush2.msra.mxu0 0.0
        %2829 = vmatprep.subr.mxu0 0.0
        %2830 = vmatpush2.msra.mxu0 0.0
        %2831 = vmatprep.subr.mxu0 0.0
        %2832 = vmatpush2.msra.mxu0 0.0
        %2833 = vmatprep.subr.mxu0 0.0
        %2834 = vmatpush2.msra.mxu0 0.0
        %2835 = vmatprep.subr.mxu0 0.0
        %2836 = vmatpush2.msra.mxu0 0.0
        %2837 = vmatprep.subr.mxu0 0.0
        %2838 = vmatpush2.msra.mxu0 0.0
        %2839 = vmatprep.subr.mxu0 0.0
        %2840 = vmatpush2.msra.mxu0 0.0
        %2841 = vmatprep.subr.mxu0 0.0
        %2842 = vmatpush2.msra.mxu0 0.0
        %2843 = vmatprep.subr.mxu0 0.0
        %2844 = vmatpush2.msra.mxu0 0.0
        %2845 = vmatprep.subr.mxu0 0.0
        %2846 = vmatpush2.msra.mxu0 0.0
        %2847 = vmatprep.subr.mxu0 0.0
        %2848 = vmatpush2.msra.mxu0 0.0
        %2849 = vmatprep.mubr.f32.mxu0 0.0
        %2850 = vmatmul.mubr.f32.gmra.mxu0 %v2783
        %v2851 = vpop.f32.mrf.mxu0
        %v2852 = vadd.f32 0.0, %v2851
        %v2853 = vpop.f32.mrf.mxu0
        %2854 = vdwg.mxu0
        %v2856 = vsel %vm1028, %v2635, 0
        %2858 = vmatprep.subr.mxu0 0.0
        %2859 = vmatpush1.msra.mxu0 0.0
        %2860 = vmatprep.subr.mxu0 0.0
        %2861 = vmatpush1.msra.mxu0 0.0
        %2862 = vmatprep.subr.mxu0 0.0
        %2863 = vmatpush1.msra.mxu0 0.0
        %2864 = vmatprep.subr.mxu0 0.0
        %2865 = vmatpush1.msra.mxu0 0.0
        %2866 = vmatprep.subr.mxu0 0.0
        %2867 = vmatpush1.msra.mxu0 0.0
        %2868 = vmatprep.subr.mxu0 0.0
        %2869 = vmatpush1.msra.mxu0 0.0
        %2870 = vmatprep.subr.mxu0 0.0
        %2871 = vmatpush1.msra.mxu0 0.0
        %2872 = vmatprep.subr.mxu0 0.0
        %2873 = vmatpush1.msra.mxu0 0.0
        %2874 = vmatprep.subr.mxu0 0.0
        %2875 = vmatpush1.msra.mxu0 0.0
        %2876 = vmatprep.subr.mxu0 0.0
        %2877 = vmatpush1.msra.mxu0 0.0
        %2878 = vmatprep.subr.mxu0 0.0
        %2879 = vmatpush1.msra.mxu0 0.0
        %2880 = vmatprep.subr.mxu0 0.0
        %2881 = vmatpush1.msra.mxu0 0.0
        %2882 = vmatprep.subr.mxu0 0.0
        %2883 = vmatpush1.msra.mxu0 0.0
        %2884 = vmatprep.subr.mxu0 0.0
        %2885 = vmatpush1.msra.mxu0 0.0
        %2886 = vmatprep.subr.mxu0 0.0
        %2887 = vmatpush1.msra.mxu0 0.0
        %2888 = vmatprep.subr.mxu0 0.0
        %2889 = vmatpush1.msra.mxu0 %v2275
        %2890 = vmatprep.subr.mxu0 0.0
        %2891 = vmatpush2.msra.mxu0 0.0
        %2892 = vmatprep.subr.mxu0 0.0
        %2893 = vmatpush2.msra.mxu0 0.0
        %2894 = vmatprep.subr.mxu0 0.0
        %2895 = vmatpush2.msra.mxu0 0.0
        %2896 = vmatprep.subr.mxu0 0.0
        %2897 = vmatpush2.msra.mxu0 0.0
        %2898 = vmatprep.subr.mxu0 0.0
        %2899 = vmatpush2.msra.mxu0 0.0
        %2900 = vmatprep.subr.mxu0 0.0
        %2901 = vmatpush2.msra.mxu0 0.0
        %2902 = vmatprep.subr.mxu0 0.0
        %2903 = vmatpush2.msra.mxu0 0.0
        %2904 = vmatprep.subr.mxu0 0.0
        %2905 = vmatpush2.msra.mxu0 0.0
        %2906 = vmatprep.subr.mxu0 0.0
        %2907 = vmatpush2.msra.mxu0 0.0
        %2908 = vmatprep.subr.mxu0 0.0
        %2909 = vmatpush2.msra.mxu0 0.0
        %2910 = vmatprep.subr.mxu0 0.0
        %2911 = vmatpush2.msra.mxu0 0.0
        %2912 = vmatprep.subr.mxu0 0.0
        %2913 = vmatpush2.msra.mxu0 0.0
        %2914 = vmatprep.subr.mxu0 0.0
        %2915 = vmatpush2.msra.mxu0 0.0
        %2916 = vmatprep.subr.mxu0 0.0
        %2917 = vmatpush2.msra.mxu0 0.0
        %2918 = vmatprep.subr.mxu0 0.0
        %2919 = vmatpush2.msra.mxu0 0.0
        %2920 = vmatprep.subr.mxu0 0.0
        %2921 = vmatpush2.msra.mxu0 0.0
        %2922 = vmatprep.mubr.f32.mxu0 0.0
        %2923 = vmatmul.mubr.f32.gmra.mxu0 %v2856
        %v2924 = vpop.f32.mrf.mxu0
        %v2925 = vadd.f32 0.0, %v2924
        %v2926 = vpop.f32.mrf.mxu0
        %2927 = vdwg.mxu0
        %v2928 = vcombine.low %v2706, %v2852
        %v2929 = vcombine.high %v2706, %v2852
        %v2931 = vunpack.c.l.s4 1983009808
        %v2932 = vunpack.c.0.s8 %v2931
        %v2933 = vlaneseq
        %v2934 = vshrl.u32 %v2933, 7
        %v2935 = vsub.s32 %v2932, %v2934
        %v2936 = vrot.slane %v2928, %v2935
        %v2938 = vunpack.c.l.s4 1983009808
        %v2939 = vunpack.c.0.s8 %v2938
        %v2940 = vlaneseq
        %v2941 = vshrl.u32 %v2940, 7
        %v2942 = vsub.s32 %v2939, %v2941
        %v2943 = vrot.slane %v2929, %v2942
        %v2944 = vcombine.low %v2779, %v2925
        %v2945 = vcombine.high %v2779, %v2925
        %v2947 = vunpack.c.l.s4 1983009808
        %v2948 = vunpack.c.0.s8 %v2947
        %v2949 = vlaneseq
        %v2950 = vshrl.u32 %v2949, 7
        %v2951 = vsub.s32 %v2948, %v2950
        %v2952 = vrot.slane %v2944, %v2951
        %v2954 = vunpack.c.l.s4 1983009808
        %v2955 = vunpack.c.0.s8 %v2954
        %v2956 = vlaneseq
        %v2957 = vshrl.u32 %v2956, 7
        %v2958 = vsub.s32 %v2955, %v2957
        %v2959 = vrot.slane %v2945, %v2958
        %v2960 = vcombine.low %v2936, %v2952
        %v2961 = vcombine.high %v2936, %v2952
        %v2963 = vunpack.c.l.s4 1934713408
        %v2964 = vunpack.c.0.s8 %v2963
        %v2965 = vlaneseq
        %v2966 = vshrl.u32 %v2965, 7
        %v2967 = vsub.s32 %v2964, %v2966
        %v2968 = vrot.slane %v2960, %v2967
        %v2970 = vunpack.c.l.s4 1934713408
        %v2971 = vunpack.c.0.s8 %v2970
        %v2972 = vlaneseq
        %v2973 = vshrl.u32 %v2972, 7
        %v2974 = vsub.s32 %v2971, %v2973
        %v2975 = vrot.slane %v2961, %v2974
        %v2976 = vcombine.low %v2943, %v2959
        %v2977 = vcombine.high %v2943, %v2959
        %v2979 = vunpack.c.l.s4 1934713408
        %v2980 = vunpack.c.0.s8 %v2979
        %v2981 = vlaneseq
        %v2982 = vshrl.u32 %v2981, 7
        %v2983 = vsub.s32 %v2980, %v2982
        %v2984 = vrot.slane %v2976, %v2983
        %v2986 = vunpack.c.l.s4 1934713408
        %v2987 = vunpack.c.0.s8 %v2986
        %v2988 = vlaneseq
        %v2989 = vshrl.u32 %v2988, 7
        %v2990 = vsub.s32 %v2987, %v2989
        %v2991 = vrot.slane %v2977, %v2990
        %v2992 = vcombine.high %v2968, 0.0
        %v2993 = vcombine.high %v2975, 0.0
        %v2994 = vcombine.high %v2984, 0.0
        %v2995 = vcombine.high %v2991, 0.0
        %v2996 = vcombine.low %v2968, %v2975
        %v2998 = vunpack.c.l.s4 1983009808
        %v2999 = vunpack.c.0.s8 %v2998
        %v3000 = vlaneseq
        %v3001 = vshrl.u32 %v3000, 7
        %v3002 = vsub.s32 %v2999, %v3001
        %v3003 = vrot.slane %v2996, %v3002
        %v3004 = vcombine.low %v2992, %v2993
        %v3006 = vunpack.c.l.s4 1983009808
        %v3007 = vunpack.c.0.s8 %v3006
        %v3008 = vlaneseq
        %v3009 = vshrl.u32 %v3008, 7
        %v3010 = vsub.s32 %v3007, %v3009
        %v3011 = vrot.slane %v3004, %v3010
        %v3012 = vcombine.low %v2984, %v2991
        %v3014 = vunpack.c.l.s4 1983009808
        %v3015 = vunpack.c.0.s8 %v3014
        %v3016 = vlaneseq
        %v3017 = vshrl.u32 %v3016, 7
        %v3018 = vsub.s32 %v3015, %v3017
        %v3019 = vrot.slane %v3012, %v3018
        %v3020 = vcombine.low %v2994, %v2995
        %v3022 = vunpack.c.l.s4 1983009808
        %v3023 = vunpack.c.0.s8 %v3022
        %v3024 = vlaneseq
        %v3025 = vshrl.u32 %v3024, 7
        %v3026 = vsub.s32 %v3023, %v3025
        %v3027 = vrot.slane %v3020, %v3026
        %v3028 = vcombine.low %v3003, %v3011
        %v3029 = vcombine.high %v3003, %v3011
        %v3031 = vunpack.c.l.s4 1934713408
        %v3032 = vunpack.c.0.s8 %v3031
        %v3033 = vlaneseq
        %v3034 = vshrl.u32 %v3033, 7
        %v3035 = vsub.s32 %v3032, %v3034
        %v3036 = vrot.slane %v3028, %v3035
        %v3038 = vunpack.c.l.s4 1934713408
        %v3039 = vunpack.c.0.s8 %v3038
        %v3040 = vlaneseq
        %v3041 = vshrl.u32 %v3040, 7
        %v3042 = vsub.s32 %v3039, %v3041
        %v3043 = vrot.slane %v3029, %v3042
        %v3044 = vcombine.low %v3019, %v3027
        %v3045 = vcombine.high %v3019, %v3027
        %v3047 = vunpack.c.l.s4 1934713408
        %v3048 = vunpack.c.0.s8 %v3047
        %v3049 = vlaneseq
        %v3050 = vshrl.u32 %v3049, 7
        %v3051 = vsub.s32 %v3048, %v3050
        %v3052 = vrot.slane %v3044, %v3051
        %v3054 = vunpack.c.l.s4 1934713408
        %v3055 = vunpack.c.0.s8 %v3054
        %v3056 = vlaneseq
        %v3057 = vshrl.u32 %v3056, 7
        %v3058 = vsub.s32 %v3055, %v3057
        %v3059 = vrot.slane %v3045, %v3058
        %v3060 = vcombine.low %v3036, %v3052
        %v3061 = vcombine.high %v3036, %v3052
        %v3062 = vcombine.low %v3043, %v3059
        %v3063 = vcombine.high %v3043, %v3059
        %3065 = vrot.lane.b32.xlu0 %v3061, 8
        %v3066 = vpop.permute.xlu0 %3065
        %3069 = vrot.lane.b32.xlu0 %v3062, 16
        %v3070 = vpop.permute.xlu0 %3069
        %3073 = vrot.lane.b32.xlu0 %v3063, 24
        %v3074 = vpop.permute.xlu0 %3073
        %v3076 = vsel %vm1028, %v3060, %v3066
        %v3077 = vsel %vm1830, %v3076, %v3070
        %v3078 = vsel %vm1832, %v3077, %v3074
        %v3079 = vld [vmem:[%s479] sm:$0x3f]
        %v3080 = vld [vmem:[%s459] sm:$0xff]
        %v3081 = vld [vmem:[%s459 + $0x8] sm:$0xff]
        %v3082 = vld [vmem:[%s459 + $0x10] sm:$0xff]
        %v3083 = vld [vmem:[%s459 + $0x18] sm:$0xff]
        %v3084 = vlaneseq
        %v3085 = vshrl.u32 %v3084, 7
        %v3086 = vsub.s32 0, %v3085
        %v3087 = vrot.slane %v3079, %v3086
        %v3089 = vsel %vm503, %v1833, 0
        %v3092 = vsel %vm503, %v3078, 0
        %3094 = vmatprep.subr.mxu0 0.0
        %3095 = vmatpush1.msra.mxu0 0.0
        %3096 = vmatprep.subr.mxu0 0.0
        %3097 = vmatpush1.msra.mxu0 0.0
        %3098 = vmatprep.subr.mxu0 0.0
        %3099 = vmatpush1.msra.mxu0 0.0
        %3100 = vmatprep.subr.mxu0 0.0
        %3101 = vmatpush1.msra.mxu0 0.0
        %3102 = vmatprep.subr.mxu0 0.0
        %3103 = vmatpush1.msra.mxu0 0.0
        %3104 = vmatprep.subr.mxu0 0.0
        %3105 = vmatpush1.msra.mxu0 0.0
        %3106 = vmatprep.subr.mxu0 0.0
        %3107 = vmatpush1.msra.mxu0 0.0
        %3108 = vmatprep.subr.mxu0 0.0
        %3109 = vmatpush1.msra.mxu0 0.0
        %3110 = vmatprep.subr.mxu0 0.0
        %3111 = vmatpush1.msra.mxu0 0.0
        %3112 = vmatprep.subr.mxu0 0.0
        %3113 = vmatpush1.msra.mxu0 0.0
        %3114 = vmatprep.subr.mxu0 0.0
        %3115 = vmatpush1.msra.mxu0 0.0
        %3116 = vmatprep.subr.mxu0 0.0
        %3117 = vmatpush1.msra.mxu0 0.0
        %3118 = vmatprep.subr.mxu0 0.0
        %3119 = vmatpush1.msra.mxu0 %v3083
        %3120 = vmatprep.subr.mxu0 0.0
        %3121 = vmatpush1.msra.mxu0 %v3082
        %3122 = vmatprep.subr.mxu0 0.0
        %3123 = vmatpush1.msra.mxu0 %v3081
        %3124 = vmatprep.subr.mxu0 0.0
        %3125 = vmatpush1.msra.mxu0 %v3080
        %3126 = vmatprep.subr.mxu0 0.0
        %3127 = vmatpush2.msra.mxu0 0.0
        %3128 = vmatprep.subr.mxu0 0.0
        %3129 = vmatpush2.msra.mxu0 0.0
        %3130 = vmatprep.subr.mxu0 0.0
        %3131 = vmatpush2.msra.mxu0 0.0
        %3132 = vmatprep.subr.mxu0 0.0
        %3133 = vmatpush2.msra.mxu0 0.0
        %3134 = vmatprep.subr.mxu0 0.0
        %3135 = vmatpush2.msra.mxu0 0.0
        %3136 = vmatprep.subr.mxu0 0.0
        %3137 = vmatpush2.msra.mxu0 0.0
        %3138 = vmatprep.subr.mxu0 0.0
        %3139 = vmatpush2.msra.mxu0 0.0
        %3140 = vmatprep.subr.mxu0 0.0
        %3141 = vmatpush2.msra.mxu0 0.0
        %3142 = vmatprep.subr.mxu0 0.0
        %3143 = vmatpush2.msra.mxu0 0.0
        %3144 = vmatprep.subr.mxu0 0.0
        %3145 = vmatpush2.msra.mxu0 0.0
        %3146 = vmatprep.subr.mxu0 0.0
        %3147 = vmatpush2.msra.mxu0 0.0
        %3148 = vmatprep.subr.mxu0 0.0
        %3149 = vmatpush2.msra.mxu0 0.0
        %3150 = vmatprep.subr.mxu0 0.0
        %3151 = vmatpush2.msra.mxu0 0.0
        %3152 = vmatprep.subr.mxu0 0.0
        %3153 = vmatpush2.msra.mxu0 0.0
        %3154 = vmatprep.subr.mxu0 0.0
        %3155 = vmatpush2.msra.mxu0 0.0
        %3156 = vmatprep.subr.mxu0 0.0
        %3157 = vmatpush2.msra.mxu0 0.0
        %3158 = vmatprep.mubr.f32.mxu0 0.0
        %3159 = vmatmul.mubr.f32.gmra.mxu0 %v3089
        %v3160 = vpop.f32.mrf.mxu0
        %v3161 = vadd.f32 %v3087, %v3160
        %v3162 = vpop.f32.mrf.mxu0
        %3163 = vmatprep.mubr.f32.mxu0 0.0
        %3164 = vmatmul.mubr.f32.gmra.mxu0 %v3092
        %v3165 = vpop.f32.mrf.mxu0
        %v3166 = vadd.f32 %v3087, %v3165
        %v3167 = vpop.f32.mrf.mxu0
        %3168 = vdwg.mxu0
        %v3169 = vadd.f32 %v490, %v3161
        %v3170 = vadd.f32 %v491, %v3166
        %v3171 = vsel %vm503, %v3169, 0.0
        %3172 = vadd.xlane.f32.xlu0 %v3171
        %v3173 = vpop.xlane.xlu0 %3172
        %v3174 = vsel %vm503, %v3170, 0.0
        %3175 = vadd.xlane.f32.xlu0 %v3174
        %v3176 = vpop.xlane.xlu0 %3175
        %v3177 = vrcp.pop 32.0
        %v3178 = vmul.f32 %v3173, %v3177
        %v3179 = vmul.f32 %v3176, %v3177
        %v3180 = vmul.f32 %v3169, %v3169
        %v3181 = vmul.f32 %v3170, %v3170
        %v3182 = vsel %vm503, %v3180, 0.0
        %3183 = vadd.xlane.f32.xlu0 %v3182
        %v3184 = vpop.xlane.xlu0 %3183
        %v3185 = vsel %vm503, %v3181, 0.0
        %3186 = vadd.xlane.f32.xlu0 %v3185
        %v3187 = vpop.xlane.xlu0 %3186
        %v3188 = vmul.f32 %v3184, %v3177
        %v3189 = vmul.f32 %v3187, %v3177
        %v3190 = vmul.f32 %v3178, %v3178
        %v3191 = vmul.f32 %v3179, %v3179
        %v3192 = vsub.f32 %v3188, %v3190
        %v3193 = vsub.f32 %v3189, %v3191
        %v3194 = vsub.f32 %v3169, %v3178
        %v3195 = vsub.f32 %v3170, %v3179
        %v3196 = vadd.f32 %v3192, 1e-05
        %v3197 = vadd.f32 %v3193, 1e-05
        %v3198 = vrsqrt.pop %v3196
        %v3199 = vrsqrt.pop %v3197
        %v3200 = vmul.f32 %v3194, %v3198
        %v3201 = vmul.f32 %v3195, %v3199
        %v3202 = vlaneseq
        %v3203 = vshrl.u32 %v3202, 7
        %v3204 = vsub.s32 1, %v3203
        %v3205 = vrot.slane %v3079, %v3204
        %v3206 = vmul.f32 %v3200, %v3205
        %v3207 = vmul.f32 %v3201, %v3205
        %v3208 = vlaneseq
        %v3209 = vshrl.u32 %v3208, 7
        %v3210 = vsub.s32 2, %v3209
        %v3211 = vrot.slane %v3079, %v3210
        %v3212 = vadd.f32 %v3206, %v3211
        %v3213 = vadd.f32 %v3207, %v3211
        %v3214 = vld [vmem:[%s464] sm:$0xff]
        %v3215 = vld [vmem:[%s464 + $0x8] sm:$0xff]
        %v3216 = vld [vmem:[%s464 + $0x10] sm:$0xff]
        %v3217 = vld [vmem:[%s464 + $0x18] sm:$0xff]
        %v3218 = vld [vmem:[%s475] sm:$0x1]
        %v3220 = vlaneseq
        %v3221 = vshrl.u32 %v3220, 7
        %v3222 = vsub.s32 0, %v3221
        %v3223 = vrot.slane %v3218, %v3222
        %v3226 = vsel %vm503, %v3212, 0
        %v3229 = vsel %vm503, %v3213, 0
        %3231 = vmatprep.subr.mxu0 0.0
        %3232 = vmatpush1.msra.mxu0 0.0
        %3233 = vmatprep.subr.mxu0 0.0
        %3234 = vmatpush1.msra.mxu0 0.0
        %3235 = vmatprep.subr.mxu0 0.0
        %3236 = vmatpush1.msra.mxu0 0.0
        %3237 = vmatprep.subr.mxu0 0.0
        %3238 = vmatpush1.msra.mxu0 0.0
        %3239 = vmatprep.subr.mxu0 0.0
        %3240 = vmatpush1.msra.mxu0 0.0
        %3241 = vmatprep.subr.mxu0 0.0
        %3242 = vmatpush1.msra.mxu0 0.0
        %3243 = vmatprep.subr.mxu0 0.0
        %3244 = vmatpush1.msra.mxu0 0.0
        %3245 = vmatprep.subr.mxu0 0.0
        %3246 = vmatpush1.msra.mxu0 0.0
        %3247 = vmatprep.subr.mxu0 0.0
        %3248 = vmatpush1.msra.mxu0 0.0
        %3249 = vmatprep.subr.mxu0 0.0
        %3250 = vmatpush1.msra.mxu0 0.0
        %3251 = vmatprep.subr.mxu0 0.0
        %3252 = vmatpush1.msra.mxu0 0.0
        %3253 = vmatprep.subr.mxu0 0.0
        %3254 = vmatpush1.msra.mxu0 0.0
        %3255 = vmatprep.subr.mxu0 0.0
        %3256 = vmatpush1.msra.mxu0 %v3217
        %3257 = vmatprep.subr.mxu0 0.0
        %3258 = vmatpush1.msra.mxu0 %v3216
        %3259 = vmatprep.subr.mxu0 0.0
        %3260 = vmatpush1.msra.mxu0 %v3215
        %3261 = vmatprep.subr.mxu0 0.0
        %3262 = vmatpush1.msra.mxu0 %v3214
        %3263 = vmatprep.subr.mxu0 0.0
        %3264 = vmatpush2.msra.mxu0 0.0
        %3265 = vmatprep.subr.mxu0 0.0
        %3266 = vmatpush2.msra.mxu0 0.0
        %3267 = vmatprep.subr.mxu0 0.0
        %3268 = vmatpush2.msra.mxu0 0.0
        %3269 = vmatprep.subr.mxu0 0.0
        %3270 = vmatpush2.msra.mxu0 0.0
        %3271 = vmatprep.subr.mxu0 0.0
        %3272 = vmatpush2.msra.mxu0 0.0
        %3273 = vmatprep.subr.mxu0 0.0
        %3274 = vmatpush2.msra.mxu0 0.0
        %3275 = vmatprep.subr.mxu0 0.0
        %3276 = vmatpush2.msra.mxu0 0.0
        %3277 = vmatprep.subr.mxu0 0.0
        %3278 = vmatpush2.msra.mxu0 0.0
        %3279 = vmatprep.subr.mxu0 0.0
        %3280 = vmatpush2.msra.mxu0 0.0
        %3281 = vmatprep.subr.mxu0 0.0
        %3282 = vmatpush2.msra.mxu0 0.0
        %3283 = vmatprep.subr.mxu0 0.0
        %3284 = vmatpush2.msra.mxu0 0.0
        %3285 = vmatprep.subr.mxu0 0.0
        %3286 = vmatpush2.msra.mxu0 0.0
        %3287 = vmatprep.subr.mxu0 0.0
        %3288 = vmatpush2.msra.mxu0 0.0
        %3289 = vmatprep.subr.mxu0 0.0
        %3290 = vmatpush2.msra.mxu0 0.0
        %3291 = vmatprep.subr.mxu0 0.0
        %3292 = vmatpush2.msra.mxu0 0.0
        %3293 = vmatprep.subr.mxu0 0.0
        %3294 = vmatpush2.msra.mxu0 0.0
        %3295 = vmatprep.mubr.f32.mxu0 0.0
        %3296 = vmatmul.mubr.f32.gmra.mxu0 %v3226
        %v3297 = vpop.f32.mrf.mxu0
        %v3298 = vadd.f32 %v3223, %v3297
        %v3299 = vpop.f32.mrf.mxu0
        %3300 = vmatprep.mubr.f32.mxu0 0.0
        %3301 = vmatmul.mubr.f32.gmra.mxu0 %v3229
        %v3302 = vpop.f32.mrf.mxu0
        %v3303 = vadd.f32 %v3223, %v3302
        %v3304 = vpop.f32.mrf.mxu0
        %3305 = vdwg.mxu0
        %v3306 = vmax.f32 %v3298, 0.0
        %v3307 = vmax.f32 %v3303, 0.0
        %v3308 = vld [vmem:[%s469] sm:$0xff]
        %v3309 = vld [vmem:[%s469 + $0x8] sm:$0xff]
        %v3310 = vld [vmem:[%s469 + $0x10] sm:$0xff]
        %v3311 = vld [vmem:[%s469 + $0x18] sm:$0xff]
        %v3312 = vld [vmem:[%s469 + $0x20] sm:$0xff]
        %v3313 = vld [vmem:[%s469 + $0x28] sm:$0xff]
        %v3314 = vld [vmem:[%s469 + $0x30] sm:$0xff]
        %v3315 = vld [vmem:[%s469 + $0x38] sm:$0xff]
        %v3316 = vlaneseq
        %v3317 = vshrl.u32 %v3316, 7
        %v3318 = vsub.s32 3, %v3317
        %v3319 = vrot.slane %v3079, %v3318
        %vm3320 = vcmask 523264
        %v3322 = vsel %vm3320, %v3306, 0
        %v3325 = vsel %vm3320, %v3307, 0
        %3327 = vmatprep.subr.mxu0 0.0
        %3328 = vmatpush1.msra.mxu0 0.0
        %3329 = vmatprep.subr.mxu0 0.0
        %3330 = vmatpush1.msra.mxu0 0.0
        %3331 = vmatprep.subr.mxu0 0.0
        %3332 = vmatpush1.msra.mxu0 0.0
        %3333 = vmatprep.subr.mxu0 0.0
        %3334 = vmatpush1.msra.mxu0 0.0
        %3335 = vmatprep.subr.mxu0 0.0
        %3336 = vmatpush1.msra.mxu0 0.0
        %3337 = vmatprep.subr.mxu0 0.0
        %3338 = vmatpush1.msra.mxu0 0.0
        %3339 = vmatprep.subr.mxu0 0.0
        %3340 = vmatpush1.msra.mxu0 0.0
        %3341 = vmatprep.subr.mxu0 0.0
        %3342 = vmatpush1.msra.mxu0 0.0
        %3343 = vmatprep.subr.mxu0 0.0
        %3344 = vmatpush1.msra.mxu0 %v3315
        %3345 = vmatprep.subr.mxu0 0.0
        %3346 = vmatpush1.msra.mxu0 %v3314
        %3347 = vmatprep.subr.mxu0 0.0
        %3348 = vmatpush1.msra.mxu0 %v3313
        %3349 = vmatprep.subr.mxu0 0.0
        %3350 = vmatpush1.msra.mxu0 %v3312
        %3351 = vmatprep.subr.mxu0 0.0
        %3352 = vmatpush1.msra.mxu0 %v3311
        %3353 = vmatprep.subr.mxu0 0.0
        %3354 = vmatpush1.msra.mxu0 %v3310
        %3355 = vmatprep.subr.mxu0 0.0
        %3356 = vmatpush1.msra.mxu0 %v3309
        %3357 = vmatprep.subr.mxu0 0.0
        %3358 = vmatpush1.msra.mxu0 %v3308
        %3359 = vmatprep.subr.mxu0 0.0
        %3360 = vmatpush2.msra.mxu0 0.0
        %3361 = vmatprep.subr.mxu0 0.0
        %3362 = vmatpush2.msra.mxu0 0.0
        %3363 = vmatprep.subr.mxu0 0.0
        %3364 = vmatpush2.msra.mxu0 0.0
        %3365 = vmatprep.subr.mxu0 0.0
        %3366 = vmatpush2.msra.mxu0 0.0
        %3367 = vmatprep.subr.mxu0 0.0
        %3368 = vmatpush2.msra.mxu0 0.0
        %3369 = vmatprep.subr.mxu0 0.0
        %3370 = vmatpush2.msra.mxu0 0.0
        %3371 = vmatprep.subr.mxu0 0.0
        %3372 = vmatpush2.msra.mxu0 0.0
        %3373 = vmatprep.subr.mxu0 0.0
        %3374 = vmatpush2.msra.mxu0 0.0
        %3375 = vmatprep.subr.mxu0 0.0
        %3376 = vmatpush2.msra.mxu0 0.0
        %3377 = vmatprep.subr.mxu0 0.0
        %3378 = vmatpush2.msra.mxu0 0.0
        %3379 = vmatprep.subr.mxu0 0.0
        %3380 = vmatpush2.msra.mxu0 0.0
        %3381 = vmatprep.subr.mxu0 0.0
        %3382 = vmatpush2.msra.mxu0 0.0
        %3383 = vmatprep.subr.mxu0 0.0
        %3384 = vmatpush2.msra.mxu0 0.0
        %3385 = vmatprep.subr.mxu0 0.0
        %3386 = vmatpush2.msra.mxu0 0.0
        %3387 = vmatprep.subr.mxu0 0.0
        %3388 = vmatpush2.msra.mxu0 0.0
        %3389 = vmatprep.subr.mxu0 0.0
        %3390 = vmatpush2.msra.mxu0 0.0
        %3391 = vmatprep.mubr.f32.mxu0 0.0
        %3392 = vmatmul.mubr.f32.gmra.mxu0 %v3322
        %v3393 = vpop.f32.mrf.mxu0
        %v3394 = vadd.f32 %v3319, %v3393
        %v3395 = vpop.f32.mrf.mxu0
        %3396 = vmatprep.mubr.f32.mxu0 0.0
        %3397 = vmatmul.mubr.f32.gmra.mxu0 %v3325
        %v3398 = vpop.f32.mrf.mxu0
        %v3399 = vadd.f32 %v3319, %v3398
        %v3400 = vpop.f32.mrf.mxu0
        %3401 = vdwg.mxu0
        %v3402 = vadd.f32 %v3212, %v3394
        %v3403 = vadd.f32 %v3213, %v3399
        %v3404 = vsel %vm503, %v3402, 0.0
        %3405 = vadd.xlane.f32.xlu0 %v3404
        %v3406 = vpop.xlane.xlu0 %3405
        %v3407 = vsel %vm503, %v3403, 0.0
        %3408 = vadd.xlane.f32.xlu0 %v3407
        %v3409 = vpop.xlane.xlu0 %3408
        %v3410 = vmul.f32 %v3406, %v3177
        %v3411 = vmul.f32 %v3409, %v3177
        %v3412 = vmul.f32 %v3402, %v3402
        %v3413 = vmul.f32 %v3403, %v3403
        %v3414 = vsel %vm503, %v3412, 0.0
        %3415 = vadd.xlane.f32.xlu0 %v3414
        %v3416 = vpop.xlane.xlu0 %3415
        %v3417 = vsel %vm503, %v3413, 0.0
        %3418 = vadd.xlane.f32.xlu0 %v3417
        %v3419 = vpop.xlane.xlu0 %3418
        %v3420 = vmul.f32 %v3416, %v3177
        %v3421 = vmul.f32 %v3419, %v3177
        %v3422 = vmul.f32 %v3410, %v3410
        %v3423 = vmul.f32 %v3411, %v3411
        %v3424 = vsub.f32 %v3420, %v3422
        %v3425 = vsub.f32 %v3421, %v3423
        %v3426 = vsub.f32 %v3402, %v3410
        %v3427 = vsub.f32 %v3403, %v3411
        %v3428 = vadd.f32 %v3424, 1e-05
        %v3429 = vadd.f32 %v3425, 1e-05
        %v3430 = vrsqrt.pop %v3428
        %v3431 = vrsqrt.pop %v3429
        %v3432 = vmul.f32 %v3426, %v3430
        %v3433 = vmul.f32 %v3427, %v3431
        %v3434 = vlaneseq
        %v3435 = vshrl.u32 %v3434, 7
        %v3436 = vsub.s32 4, %v3435
        %v3437 = vrot.slane %v3079, %v3436
        %v3438 = vmul.f32 %v3432, %v3437
        %v3439 = vmul.f32 %v3433, %v3437
        %v3440 = vlaneseq
        %v3441 = vshrl.u32 %v3440, 7
        %v3442 = vsub.s32 5, %v3441
        %v3443 = vrot.slane %v3079, %v3442
        %v3444 = vadd.f32 %v3438, %v3443
        %v3445 = vadd.f32 %v3439, %v3443
        %3446 = vst.msk [vmem:[#allocation2] sm:$0xff] %vm503, %v3444
        %3447 = vst.msk [vmem:[#allocation2 + $0x8] sm:$0xff] %vm503, %v3445
        // Predicated region
        $region61: #{tpu_custom_call.1} parent=55 // pred_check
          %p3448 = pneg %p285
        $region62: #{tpu_custom_call.1} parent=55 // pred_check_branch
          %3450 = sbr.rel (%p3448) target = $region64
        $region63: #{tpu_custom_call.1} parent=55 // pred_region
          %s3451 = smul.u32 2, %s25
          %s3453 = ssub.s32 256, 256
          %3454 = vsyncadd [#allocation3], %s3453
          %s3455 = smul.addr %s3451, 128
          %s3456 = scalar_lea.hbm %s9, %s3455
          %s3457 = sshll.u32 [#allocation2], 4
          %s3458 = int_to_ptr.vmem [resolvable:$true] %s3457
          %3463 = dma.vmem_to_hbm [thread:$0]  %s3458, 256, %s3456, [#allocation3], 128, 128, 8
        $region64: #{tpu_custom_call.1} parent=55 // pred_fallthru
          _
        // Predicated region
        $region65: #{tpu_custom_call.1} parent=55 // pred_check
          %p3464 = pneg %p285
        $region66: #{tpu_custom_call.1} parent=55 // pred_check_branch
          %3466 = sbr.rel (%p3464) target = $region68
        $region67: #{tpu_custom_call.1} parent=55 // pred_region
          %3467 = dma.done [#allocation3], 256
        $region68: #{tpu_custom_call.1} parent=55 // pred_fallthru
          _
      $region56: #{tpu_custom_call.1} parent=5 // pred_fallthru
        _
      %p3468 = scmp.le.s32.totalorder 2, %s16
      // Predicated region
      $region69: #{tpu_custom_call.1} parent=5 // pred_check
        %p3469 = pneg %p3468
      $region70: #{tpu_custom_call.1} parent=5 // pred_check_branch
        %3471 = sbr.rel (%p3469) target = $region72
      $region71: #{tpu_custom_call.1} parent=5 // pred_region
        %s3472 = ssub.s32 %s16, 2
      $region72: #{tpu_custom_call.1} parent=5 // pred_fallthru
        _
    $region6: #{tpu_custom_call.1} parent=1 // loop_footer
      %s20 = sadd.s32 1, %s16
    $region7: #{tpu_custom_call.1} parent=1 // loop_footer_branch
      %15 = sbr.rel target = $region3
    $region8: #{tpu_custom_call.1} parent=1 // loop_exit
      _
    %3473 = vsyncpa [#allocation3], 1
    %s3474 = scalar_lea.sflag [#allocation3], 1
    %3475 = vsyncpa %s3474, 1

</llo_original>
